<compile_context>
chip_gen: v6e
topology: v6e:2x2x1
jax: 0.10.0
libtpu: 0.0.40
codegen_flags: <defaults>
</compile_context>

<pallas_src>
import functools

import numpy as np
import jax
import jax.numpy as jnp
from jax import lax
from jax.experimental import pallas as pl
from jax.experimental.pallas import tpu as pltpu

CLAMP_C = 1000000.0  # self.C in the PyTorch module


# ----------------------------------------------------------------------------
# Fused Pallas kernel: one (image, branch) per grid step.
#   1x1 conv (+BN,ReLU)  ->  3x3 conv (+BN,ReLU)  ->  clamp(0, C)  -> [1 - x]
# ----------------------------------------------------------------------------
def _dar_kernel(x_ref, w1_ref, b1_ref, w3_ref, b3_ref, mask_ref, o_ref,
                y1e_ref, *, n_pix, wp, margin, clamp_max):
    # x_ref:    (1, 1, P, Cin)      bf16  padded image, pixels flattened (P=Hp*Wp)
    # w1_ref:   (1, Cin, cmid)      bf16  BN-folded 1x1 weight
    # b1_ref:   (1, 1, cmid)        f32
    # w3_ref:   (1, 9, cmid, cmid)  bf16  BN-folded 3x3 weight, (dy,dx)-major
    # b3_ref:   (1, 1, cmid)        f32
    # mask_ref: (P, 1)              f32   1.0 on interior pixels, 0.0 on the halo
    # o_ref:    (1, 1, P, cmid)     f32
    # y1e_ref:  (P + 2*margin, cmid) f32  VMEM scratch (flat 1x1 output + zero margin)
    cmid = o_ref.shape[-1]

    # Fresh zero margins every step (interior rows are overwritten below).
    y1e_ref[...] = jnp.zeros(y1e_ref.shape, jnp.float32)

    # ---- 1x1 conv + folded BN + ReLU (bf16 MXU, f32 accumulate) ------------
    x = x_ref[0, 0]                                                   # (P, Cin)
    y1 = jnp.dot(x, w1_ref[0], preferred_element_type=jnp.float32)    # (P, cmid)
    y1 = jnp.maximum(y1 + b1_ref[0], 0.0) * mask_ref[...]             # halo -> 0
    y1e_ref[margin:margin + n_pix, :] = y1                            # stays in VMEM

    # ---- 3x3 conv + folded BN: nine shifted in-VMEM taps, f32 accumulator --
    # Tap (dy, dx) of the SAME-padded image is just the flat scratch shifted by
    # (dy-1)*Wp + (dx-1); the zero margins + zeroed halo rows give exact
    # zero-padding semantics for every interior output pixel.
    acc = jnp.zeros((n_pix, cmid), jnp.float32)
    t = 0
    for dy in range(3):
        for dx in range(3):
            off = margin + (dy - 1) * wp + (dx - 1)
            tap = y1e_ref[off:off + n_pix, :]                         # (P, cmid) f32
            acc = acc + jnp.dot(tap, w3_ref[0, t].astype(jnp.float32),
                                preferred_element_type=jnp.float32)
            t += 1

    y3 = jnp.clip(acc + b3_ref[0], 0.0, clamp_max)   # ReLU + clamp(min=0, max=C)

    # grid axis 1: 0 = fore (y3), 1 = back (1 - y3)
    is_back = (pl.program_id(1) == 1).astype(jnp.float32)
    o_ref[0, 0] = is_back + (1.0 - 2.0 * is_back) * y3


# ----------------------------------------------------------------------------
# Wrapper: layout plumbing (NCHW -> padded, flattened NHWC), BN folding done
# at init time, single fused pallas_call, crop + concat + transpose back.
# ----------------------------------------------------------------------------
def dar_simple(fore_nchw, back_nchw, params):
    n, ch, h, w = fore_nchw.shape
    cmid = ch // 2
    hp, wp = h + 2, w + 2
    n_pix = hp * wp
    margin = ((wp + 1) + 7) // 8 * 8        # covers tap offsets in [-(wp+1), wp+1]

    def prep(x_nchw):
        x = jnp.transpose(x_nchw, (0, 2, 3, 1))               # NCHW -> NHWC
        x = jnp.pad(x, ((0, 0), (1, 1), (1, 1), (0, 0)))      # 1-pixel zero halo
        return x.reshape(n, n_pix, ch).astype(jnp.bfloat16)   # flat pixels, bf16

    x_stk = jnp.stack([prep(fore_nchw), prep(back_nchw)], axis=0)     # (2,N,P,Cin)

    def stk(name):
        return jnp.stack([params["fore"][name], params["back"][name]], axis=0)

    w1 = stk("w1").astype(jnp.bfloat16)                               # (2,Cin,cmid)
    b1 = stk("b1").reshape(2, 1, cmid).astype(jnp.float32)
    w3 = stk("w3").reshape(2, 9, cmid, cmid).astype(jnp.bfloat16)     # (dy,dx)-major
    b3 = stk("b3").reshape(2, 1, cmid).astype(jnp.float32)

    # Interior mask on the padded pixel grid (1 inside the original HxW image).
    row = jnp.arange(hp)[:, None]
    col = jnp.arange(wp)[None, :]
    interior = (row >= 1) & (row <= h) & (col >= 1) & (col <= w)
    mask = interior.reshape(n_pix, 1).astype(jnp.float32)

    kernel = functools.partial(_dar_kernel, n_pix=n_pix, wp=wp,
                               margin=margin, clamp_max=CLAMP_C)

    # VMEM per step: one padded image (bf16) + f32 scratch + f32 output block
    # = a few KiB at these shapes; well under every generation's scoped limit.
    # TODO(synk): for very large images, block over H with a manual halo DMA.
    out = pl.pallas_call(
        kernel,
        out_shape=jax.ShapeDtypeStruct((2, n, n_pix, cmid), jnp.float32),
        grid=(n, 2),                                   # (batch, {fore, back})
        in_specs=[
            pl.BlockSpec((1, 1, n_pix, ch), lambda i, b: (b, i, 0, 0)),
            pl.BlockSpec((1, ch, cmid), lambda i, b: (b, 0, 0)),
            pl.BlockSpec((1, 1, cmid), lambda i, b: (b, 0, 0)),
            pl.BlockSpec((1, 9, cmid, cmid), lambda i, b: (b, 0, 0, 0)),
            pl.BlockSpec((1, 1, cmid), lambda i, b: (b, 0, 0)),
            pl.BlockSpec((n_pix, 1), lambda i, b: (0, 0)),
        ],
        out_specs=pl.BlockSpec((1, 1, n_pix, cmid), lambda i, b: (b, i, 0, 0)),
        scratch_shapes=[pltpu.VMEM((n_pix + 2 * margin, cmid), jnp.float32)],
        compiler_params=pltpu.CompilerParams(
            dimension_semantics=("parallel", "parallel")),
    )(x_stk, w1, b1, w3, b3, mask)

    out = out.reshape(2, n, hp, wp, cmid)[:, :, 1:1 + h, 1:1 + w, :]
    out = jnp.concatenate([out[0], out[1]], axis=-1)   # cat([fore, 1-back], C)
    return jnp.transpose(out, (0, 3, 1, 2))            # NHWC -> NCHW


# ----------------------------------------------------------------------------
# Deterministic parameter construction (BN folded into conv weight/bias)
# ----------------------------------------------------------------------------
def _fold_bn(w, gamma, beta, mean, var, eps=1e-5):
    scale = gamma / jnp.sqrt(var + eps)
    return w * scale, beta - mean * scale


def init_params(key, ch):
    cmid = ch // 2

    def branch_params(k):
        ks = jax.random.split(k, 10)
        w1 = 0.3 * jax.random.normal(ks[0], (ch, cmid), jnp.float32)
        w3 = 0.3 * jax.random.normal(ks[1], (3, 3, cmid, cmid), jnp.float32)
        g1 = 1.0 + 0.1 * jax.random.normal(ks[2], (cmid,), jnp.float32)
        be1 = 0.1 * jax.random.normal(ks[3], (cmid,), jnp.float32)
        m1 = 0.1 * jax.random.normal(ks[4], (cmid,), jnp.float32)
        v1 = 0.5 + jnp.abs(jax.random.normal(ks[5], (cmid,), jnp.float32))
        g3 = 1.0 + 0.1 * jax.random.normal(ks[6], (cmid,), jnp.float32)
        be3 = 0.1 * jax.random.normal(ks[7], (cmid,), jnp.float32)
        m3 = 0.1 * jax.random.normal(ks[8], (cmid,), jnp.float32)
        v3 = 0.5 + jnp.abs(jax.random.normal(ks[9], (cmid,), jnp.float32))
        w1f, b1f = _fold_bn(w1, g1, be1, m1, v1)
        w3f, b3f = _fold_bn(w3, g3, be3, m3, v3)
        return {"w1": w1f, "b1": b1f, "w3": w3f, "b3": b3f}

    kf, kb = jax.random.split(key)
    return {"fore": branch_params(kf), "back": branch_params(kb)}


# ----------------------------------------------------------------------------
# Pure-JAX reference (uses the same bf16-rounded activations/weights so the
# comparison isolates the kernel's arithmetic).
# ----------------------------------------------------------------------------
def _round_bf16(a):
    return a.astype(jnp.bfloat16).astype(jnp.float32)


def _ref_branch(x_nhwc, p, invert):
    y = jnp.einsum("nhwc,cd->nhwd", _round_bf16(x_nhwc), _round_bf16(p["w1"]),
                   precision=lax.Precision.HIGHEST) + p["b1"]
    y = jnp.maximum(y, 0.0)
    y = lax.conv_general_dilated(
        y, _round_bf16(p["w3"]), (1, 1), "SAME",
        dimension_numbers=("NHWC", "HWIO", "NHWC"),
        precision=lax.Precision.HIGHEST) + p["b3"]
    y = jnp.clip(y, 0.0, CLAMP_C)
    return 1.0 - y if invert else y


if __name__ == "__main__":
    key = jax.random.PRNGKey(0)
    k_f, k_b, k_p = jax.random.split(key, 3)

    N, CH, H, W = 2, 4, 16, 16          # matches module: ch=4 -> mid channels 2
    fore = jax.random.normal(k_f, (N, CH, H, W), jnp.float32)
    back = jax.random.normal(k_b, (N, CH, H, W), jnp.float32)
    params = init_params(k_p, CH)

    out = jax.block_until_ready(jax.jit(dar_simple)(fore, back, params))
    assert out.shape == (N, CH, H, W)   # 2 * (CH//2) channels out

    # sanity check vs. pure-JAX reference
    fn = jnp.transpose(fore, (0, 2, 3, 1))
    bn = jnp.transpose(back, (0, 2, 3, 1))
    ref = jnp.concatenate([_ref_branch(fn, params["fore"], False),
                           _ref_branch(bn, params["back"], True)], axis=-1)
    ref = jnp.transpose(ref, (0, 3, 1, 2))
    np.testing.assert_allclose(np.asarray(out), np.asarray(ref),
                               rtol=1e-2, atol=1e-2)
    print("KERNEL_OK")
</pallas_src>

<mosaic_0001>
module attributes {stable_mosaic.version = 11 : i64} {
  func.func @_dar_kernel(%arg0: i32, %arg1: i32, %arg2: memref<1x1x324x4xbf16, #tpu.memory_space<vmem>>, %arg3: memref<1x4x2xbf16, #tpu.memory_space<vmem>>, %arg4: memref<1x1x2xf32, #tpu.memory_space<vmem>>, %arg5: memref<1x9x2x2xbf16, #tpu.memory_space<vmem>>, %arg6: memref<1x1x2xf32, #tpu.memory_space<vmem>>, %arg7: memref<324x1xf32, #tpu.memory_space<vmem>>, %arg8: memref<1x1x324x2xf32, #tpu.memory_space<vmem>>, %arg9: memref<372x2xf32, #tpu.memory_space<vmem>>) attributes {dimension_semantics = [#tpu.dimension_semantics<parallel>, #tpu.dimension_semantics<parallel>], iteration_bounds = array<i64: 2, 2>, scalar_prefetch = 0 : i64, scratch_operands = 1 : i64, tpu.core_type = #tpu.core_type<tc>, window_params = [{transform_indices = @transform_0, window_bounds = array<i64: 1, 1, 324, 4>}, {transform_indices = @transform_1, window_bounds = array<i64: 1, 4, 2>}, {transform_indices = @transform_2, window_bounds = array<i64: 1, 1, 2>}, {transform_indices = @transform_3, window_bounds = array<i64: 1, 9, 2, 2>}, {transform_indices = @transform_4, window_bounds = array<i64: 1, 1, 2>}, {pipeline_mode = #tpu.pipeline_mode<synchronous>, transform_indices = @transform_5, window_bounds = array<i64: 324, 1>}, {transform_indices = @transform_6, window_bounds = array<i64: 1, 1, 324, 2>}]} {
    %cst = arith.constant 0.000000e+00 : f32
    %0 = vector.broadcast %cst : f32 to vector<372x2xf32>
    %c0 = arith.constant 0 : index
    %c0_0 = arith.constant 0 : index
    %1 = vector.load %arg9[%c0, %c0_0] : memref<372x2xf32, #tpu.memory_space<vmem>>, vector<372x2xf32>
    tpu.vector_store %arg9[%c0, %c0_0], %0 {strides = array<i32>} : memref<372x2xf32, #tpu.memory_space<vmem>>, vector<372x2xf32>,
    %c0_1 = arith.constant 0 : index
    %c0_2 = arith.constant 0 : index
    %c0_3 = arith.constant 0 : index
    %c0_4 = arith.constant 0 : index
    %2 = vector.load %arg2[%c0_1, %c0_2, %c0_3, %c0_4] : memref<1x1x324x4xbf16, #tpu.memory_space<vmem>>, vector<1x1x324x4xbf16>
    %3 = vector.shape_cast %2 : vector<1x1x324x4xbf16> to vector<324x4xbf16>
    %c0_5 = arith.constant 0 : index
    %c0_6 = arith.constant 0 : index
    %c0_7 = arith.constant 0 : index
    %4 = vector.load %arg3[%c0_5, %c0_6, %c0_7] : memref<1x4x2xbf16, #tpu.memory_space<vmem>>, vector<1x4x2xbf16>
    %5 = vector.shape_cast %4 : vector<1x4x2xbf16> to vector<4x2xbf16>
    %cst_8 = arith.constant dense<0.000000e+00> : vector<324x2xf32>
    %6 = tpu.matmul %3, %5, %cst_8 {dimension_numbers = #tpu.dot_dimension_numbers<[1], [0], [0], [1], [0, 0, 1, 1], [], []>} : vector<324x4xbf16>, vector<4x2xbf16>, vector<324x2xf32> -> vector<324x2xf32>
    %c0_9 = arith.constant 0 : index
    %c0_10 = arith.constant 0 : index
    %c0_11 = arith.constant 0 : index
    %7 = vector.load %arg4[%c0_9, %c0_10, %c0_11] : memref<1x1x2xf32, #tpu.memory_space<vmem>>, vector<1x1x2xf32>
    %8 = vector.shape_cast %7 : vector<1x1x2xf32> to vector<1x2xf32>
    %9 = vector.broadcast %8 : vector<1x2xf32> to vector<324x2xf32>
    %10 = arith.addf %6, %9 : vector<324x2xf32>
    %cst_12 = arith.constant 0.000000e+00 : f32
    %11 = vector.broadcast %cst_12 : f32 to vector<324x2xf32>
    %12 = arith.maximumf %10, %11 : vector<324x2xf32>
    %c0_13 = arith.constant 0 : index
    %c0_14 = arith.constant 0 : index
    %13 = vector.load %arg7[%c0_13, %c0_14] : memref<324x1xf32, #tpu.memory_space<vmem>>, vector<324x1xf32>
    %14 = vector.broadcast %13 : vector<324x1xf32> to vector<324x2xf32>
    %15 = arith.mulf %12, %14 : vector<324x2xf32>
    %c24 = arith.constant 24 : index
    %c0_15 = arith.constant 0 : index
    %16 = vector.load %arg9[%c24, %c0_15] : memref<372x2xf32, #tpu.memory_space<vmem>>, vector<324x2xf32>
    tpu.vector_store %arg9[%c24, %c0_15], %15 {strides = array<i32>} : memref<372x2xf32, #tpu.memory_space<vmem>>, vector<324x2xf32>,
    %cst_16 = arith.constant 0.000000e+00 : f32
    %17 = vector.broadcast %cst_16 : f32 to vector<324x2xf32>
    %c5 = arith.constant 5 : index
    %c0_17 = arith.constant 0 : index
    %18 = vector.load %arg9[%c5, %c0_17] : memref<372x2xf32, #tpu.memory_space<vmem>>, vector<324x2xf32>
    %c0_18 = arith.constant 0 : index
    %c0_19 = arith.constant 0 : index
    %c0_20 = arith.constant 0 : index
    %c0_21 = arith.constant 0 : index
    %19 = vector.load %arg5[%c0_18, %c0_19, %c0_20, %c0_21] : memref<1x9x2x2xbf16, #tpu.memory_space<vmem>>, vector<1x1x2x2xbf16>
    %20 = vector.shape_cast %19 : vector<1x1x2x2xbf16> to vector<2x2xbf16>
    %21 = arith.extf %20 : vector<2x2xbf16> to vector<2x2xf32>
    %cst_22 = arith.constant dense<0.000000e+00> : vector<324x2xf32>
    %22 = tpu.matmul %18, %21, %cst_22 {dimension_numbers = #tpu.dot_dimension_numbers<[1], [0], [0], [1], [0, 0, 1, 1], [], []>} : vector<324x2xf32>, vector<2x2xf32>, vector<324x2xf32> -> vector<324x2xf32>
    %23 = arith.addf %17, %22 : vector<324x2xf32>
    %c6 = arith.constant 6 : index
    %c0_23 = arith.constant 0 : index
    %24 = vector.load %arg9[%c6, %c0_23] : memref<372x2xf32, #tpu.memory_space<vmem>>, vector<324x2xf32>
    %c0_24 = arith.constant 0 : index
    %c1 = arith.constant 1 : index
    %c0_25 = arith.constant 0 : index
    %c0_26 = arith.constant 0 : index
    %25 = vector.load %arg5[%c0_24, %c1, %c0_25, %c0_26] : memref<1x9x2x2xbf16, #tpu.memory_space<vmem>>, vector<1x1x2x2xbf16>
    %26 = vector.shape_cast %25 : vector<1x1x2x2xbf16> to vector<2x2xbf16>
    %27 = arith.extf %26 : vector<2x2xbf16> to vector<2x2xf32>
    %cst_27 = arith.constant dense<0.000000e+00> : vector<324x2xf32>
    %28 = tpu.matmul %24, %27, %cst_27 {dimension_numbers = #tpu.dot_dimension_numbers<[1], [0], [0], [1], [0, 0, 1, 1], [], []>} : vector<324x2xf32>, vector<2x2xf32>, vector<324x2xf32> -> vector<324x2xf32>
    %29 = arith.addf %23, %28 : vector<324x2xf32>
    %c7 = arith.constant 7 : index
    %c0_28 = arith.constant 0 : index
    %30 = vector.load %arg9[%c7, %c0_28] : memref<372x2xf32, #tpu.memory_space<vmem>>, vector<324x2xf32>
    %c0_29 = arith.constant 0 : index
    %c2 = arith.constant 2 : index
    %c0_30 = arith.constant 0 : index
    %c0_31 = arith.constant 0 : index
    %31 = vector.load %arg5[%c0_29, %c2, %c0_30, %c0_31] : memref<1x9x2x2xbf16, #tpu.memory_space<vmem>>, vector<1x1x2x2xbf16>
    %32 = vector.shape_cast %31 : vector<1x1x2x2xbf16> to vector<2x2xbf16>
    %33 = arith.extf %32 : vector<2x2xbf16> to vector<2x2xf32>
    %cst_32 = arith.constant dense<0.000000e+00> : vector<324x2xf32>
    %34 = tpu.matmul %30, %33, %cst_32 {dimension_numbers = #tpu.dot_dimension_numbers<[1], [0], [0], [1], [0, 0, 1, 1], [], []>} : vector<324x2xf32>, vector<2x2xf32>, vector<324x2xf32> -> vector<324x2xf32>
    %35 = arith.addf %29, %34 : vector<324x2xf32>
    %c23 = arith.constant 23 : index
    %c0_33 = arith.constant 0 : index
    %36 = vector.load %arg9[%c23, %c0_33] : memref<372x2xf32, #tpu.memory_space<vmem>>, vector<324x2xf32>
    %c0_34 = arith.constant 0 : index
    %c3 = arith.constant 3 : index
    %c0_35 = arith.constant 0 : index
    %c0_36 = arith.constant 0 : index
    %37 = vector.load %arg5[%c0_34, %c3, %c0_35, %c0_36] : memref<1x9x2x2xbf16, #tpu.memory_space<vmem>>, vector<1x1x2x2xbf16>
    %38 = vector.shape_cast %37 : vector<1x1x2x2xbf16> to vector<2x2xbf16>
    %39 = arith.extf %38 : vector<2x2xbf16> to vector<2x2xf32>
    %cst_37 = arith.constant dense<0.000000e+00> : vector<324x2xf32>
    %40 = tpu.matmul %36, %39, %cst_37 {dimension_numbers = #tpu.dot_dimension_numbers<[1], [0], [0], [1], [0, 0, 1, 1], [], []>} : vector<324x2xf32>, vector<2x2xf32>, vector<324x2xf32> -> vector<324x2xf32>
    %41 = arith.addf %35, %40 : vector<324x2xf32>
    %c24_38 = arith.constant 24 : index
    %c0_39 = arith.constant 0 : index
    %42 = vector.load %arg9[%c24_38, %c0_39] : memref<372x2xf32, #tpu.memory_space<vmem>>, vector<324x2xf32>
    %c0_40 = arith.constant 0 : index
    %c4 = arith.constant 4 : index
    %c0_41 = arith.constant 0 : index
    %c0_42 = arith.constant 0 : index
    %43 = vector.load %arg5[%c0_40, %c4, %c0_41, %c0_42] : memref<1x9x2x2xbf16, #tpu.memory_space<vmem>>, vector<1x1x2x2xbf16>
    %44 = vector.shape_cast %43 : vector<1x1x2x2xbf16> to vector<2x2xbf16>
    %45 = arith.extf %44 : vector<2x2xbf16> to vector<2x2xf32>
    %cst_43 = arith.constant dense<0.000000e+00> : vector<324x2xf32>
    %46 = tpu.matmul %42, %45, %cst_43 {dimension_numbers = #tpu.dot_dimension_numbers<[1], [0], [0], [1], [0, 0, 1, 1], [], []>} : vector<324x2xf32>, vector<2x2xf32>, vector<324x2xf32> -> vector<324x2xf32>
    %47 = arith.addf %41, %46 : vector<324x2xf32>
    %c25 = arith.constant 25 : index
    %c0_44 = arith.constant 0 : index
    %48 = vector.load %arg9[%c25, %c0_44] : memref<372x2xf32, #tpu.memory_space<vmem>>, vector<324x2xf32>
    %c0_45 = arith.constant 0 : index
    %c5_46 = arith.constant 5 : index
    %c0_47 = arith.constant 0 : index
    %c0_48 = arith.constant 0 : index
    %49 = vector.load %arg5[%c0_45, %c5_46, %c0_47, %c0_48] : memref<1x9x2x2xbf16, #tpu.memory_space<vmem>>, vector<1x1x2x2xbf16>
    %50 = vector.shape_cast %49 : vector<1x1x2x2xbf16> to vector<2x2xbf16>
    %51 = arith.extf %50 : vector<2x2xbf16> to vector<2x2xf32>
    %cst_49 = arith.constant dense<0.000000e+00> : vector<324x2xf32>
    %52 = tpu.matmul %48, %51, %cst_49 {dimension_numbers = #tpu.dot_dimension_numbers<[1], [0], [0], [1], [0, 0, 1, 1], [], []>} : vector<324x2xf32>, vector<2x2xf32>, vector<324x2xf32> -> vector<324x2xf32>
    %53 = arith.addf %47, %52 : vector<324x2xf32>
    %c41 = arith.constant 41 : index
    %c0_50 = arith.constant 0 : index
    %54 = vector.load %arg9[%c41, %c0_50] : memref<372x2xf32, #tpu.memory_space<vmem>>, vector<324x2xf32>
    %c0_51 = arith.constant 0 : index
    %c6_52 = arith.constant 6 : index
    %c0_53 = arith.constant 0 : index
    %c0_54 = arith.constant 0 : index
    %55 = vector.load %arg5[%c0_51, %c6_52, %c0_53, %c0_54] : memref<1x9x2x2xbf16, #tpu.memory_space<vmem>>, vector<1x1x2x2xbf16>
    %56 = vector.shape_cast %55 : vector<1x1x2x2xbf16> to vector<2x2xbf16>
    %57 = arith.extf %56 : vector<2x2xbf16> to vector<2x2xf32>
    %cst_55 = arith.constant dense<0.000000e+00> : vector<324x2xf32>
    %58 = tpu.matmul %54, %57, %cst_55 {dimension_numbers = #tpu.dot_dimension_numbers<[1], [0], [0], [1], [0, 0, 1, 1], [], []>} : vector<324x2xf32>, vector<2x2xf32>, vector<324x2xf32> -> vector<324x2xf32>
    %59 = arith.addf %53, %58 : vector<324x2xf32>
    %c42 = arith.constant 42 : index
    %c0_56 = arith.constant 0 : index
    %60 = vector.load %arg9[%c42, %c0_56] : memref<372x2xf32, #tpu.memory_space<vmem>>, vector<324x2xf32>
    %c0_57 = arith.constant 0 : index
    %c7_58 = arith.constant 7 : index
    %c0_59 = arith.constant 0 : index
    %c0_60 = arith.constant 0 : index
    %61 = vector.load %arg5[%c0_57, %c7_58, %c0_59, %c0_60] : memref<1x9x2x2xbf16, #tpu.memory_space<vmem>>, vector<1x1x2x2xbf16>
    %62 = vector.shape_cast %61 : vector<1x1x2x2xbf16> to vector<2x2xbf16>
    %63 = arith.extf %62 : vector<2x2xbf16> to vector<2x2xf32>
    %cst_61 = arith.constant dense<0.000000e+00> : vector<324x2xf32>
    %64 = tpu.matmul %60, %63, %cst_61 {dimension_numbers = #tpu.dot_dimension_numbers<[1], [0], [0], [1], [0, 0, 1, 1], [], []>} : vector<324x2xf32>, vector<2x2xf32>, vector<324x2xf32> -> vector<324x2xf32>
    %65 = arith.addf %59, %64 : vector<324x2xf32>
    %c43 = arith.constant 43 : index
    %c0_62 = arith.constant 0 : index
    %66 = vector.load %arg9[%c43, %c0_62] : memref<372x2xf32, #tpu.memory_space<vmem>>, vector<324x2xf32>
    %c0_63 = arith.constant 0 : index
    %c8 = arith.constant 8 : index
    %c0_64 = arith.constant 0 : index
    %c0_65 = arith.constant 0 : index
    %67 = vector.load %arg5[%c0_63, %c8, %c0_64, %c0_65] : memref<1x9x2x2xbf16, #tpu.memory_space<vmem>>, vector<1x1x2x2xbf16>
    %68 = vector.shape_cast %67 : vector<1x1x2x2xbf16> to vector<2x2xbf16>
    %69 = arith.extf %68 : vector<2x2xbf16> to vector<2x2xf32>
    %cst_66 = arith.constant dense<0.000000e+00> : vector<324x2xf32>
    %70 = tpu.matmul %66, %69, %cst_66 {dimension_numbers = #tpu.dot_dimension_numbers<[1], [0], [0], [1], [0, 0, 1, 1], [], []>} : vector<324x2xf32>, vector<2x2xf32>, vector<324x2xf32> -> vector<324x2xf32>
    %71 = arith.addf %65, %70 : vector<324x2xf32>
    %c0_67 = arith.constant 0 : index
    %c0_68 = arith.constant 0 : index
    %c0_69 = arith.constant 0 : index
    %72 = vector.load %arg6[%c0_67, %c0_68, %c0_69] : memref<1x1x2xf32, #tpu.memory_space<vmem>>, vector<1x1x2xf32>
    %73 = vector.shape_cast %72 : vector<1x1x2xf32> to vector<1x2xf32>
    %74 = vector.broadcast %73 : vector<1x2xf32> to vector<324x2xf32>
    %75 = arith.addf %71, %74 : vector<324x2xf32>
    %cst_70 = arith.constant 0.000000e+00 : f32
    %cst_71 = arith.constant 1.000000e+06 : f32
    %76 = vector.broadcast %cst_70 : f32 to vector<324x2xf32>
    %77 = arith.maximumf %76, %75 : vector<324x2xf32>
    %78 = vector.broadcast %cst_71 : f32 to vector<324x2xf32>
    %79 = arith.minimumf %78, %77 : vector<324x2xf32>
    %c1_i32 = arith.constant 1 : i32
    %80 = arith.cmpi eq, %arg1, %c1_i32 : i32
    %81 = arith.extui %80 : i1 to i32
    %82 = arith.sitofp %81 : i32 to f32
    %cst_72 = arith.constant 2.000000e+00 : f32
    %83 = arith.mulf %cst_72, %82 : f32
    %cst_73 = arith.constant 1.000000e+00 : f32
    %84 = arith.subf %cst_73, %83 : f32
    %85 = vector.broadcast %84 : f32 to vector<324x2xf32>
    %86 = arith.mulf %85, %79 : vector<324x2xf32>
    %87 = vector.broadcast %82 : f32 to vector<324x2xf32>
    %88 = arith.addf %87, %86 : vector<324x2xf32>
    %c0_74 = arith.constant 0 : index
    %c0_75 = arith.constant 0 : index
    %c0_76 = arith.constant 0 : index
    %c0_77 = arith.constant 0 : index
    %89 = vector.load %arg8[%c0_74, %c0_75, %c0_76, %c0_77] : memref<1x1x324x2xf32, #tpu.memory_space<vmem>>, vector<1x1x324x2xf32>
    %90 = vector.shape_cast %89 : vector<1x1x324x2xf32> to vector<324x2xf32>
    %91 = vector.shape_cast %88 : vector<324x2xf32> to vector<1x1x324x2xf32>
    tpu.vector_store %arg8[%c0_74, %c0_75, %c0_76, %c0_77], %91 {strides = array<i32>} : memref<1x1x324x2xf32, #tpu.memory_space<vmem>>, vector<1x1x324x2xf32>,
    return
  }
  func.func @transform_0(%arg0: i32, %arg1: i32) -> (i32, i32, i32, i32) {
    %c0_i32 = arith.constant 0 : i32
    %c0_i32_0 = arith.constant 0 : i32
    %c0_i32_1 = arith.constant 0 : i32
    return %arg1, %arg0, %c0_i32, %c0_i32_0 : i32, i32, i32, i32
  }
  func.func @transform_1(%arg0: i32, %arg1: i32) -> (i32, i32, i32) {
    %c0_i32 = arith.constant 0 : i32
    %c0_i32_0 = arith.constant 0 : i32
    %c0_i32_1 = arith.constant 0 : i32
    return %arg1, %c0_i32, %c0_i32_0 : i32, i32, i32
  }
  func.func @transform_2(%arg0: i32, %arg1: i32) -> (i32, i32, i32) {
    %c0_i32 = arith.constant 0 : i32
    %c0_i32_0 = arith.constant 0 : i32
    %c0_i32_1 = arith.constant 0 : i32
    return %arg1, %c0_i32, %c0_i32_0 : i32, i32, i32
  }
  func.func @transform_3(%arg0: i32, %arg1: i32) -> (i32, i32, i32, i32) {
    %c0_i32 = arith.constant 0 : i32
    %c0_i32_0 = arith.constant 0 : i32
    %c0_i32_1 = arith.constant 0 : i32
    %c0_i32_2 = arith.constant 0 : i32
    return %arg1, %c0_i32, %c0_i32_0, %c0_i32_1 : i32, i32, i32, i32
  }
  func.func @transform_4(%arg0: i32, %arg1: i32) -> (i32, i32, i32) {
    %c0_i32 = arith.constant 0 : i32
    %c0_i32_0 = arith.constant 0 : i32
    %c0_i32_1 = arith.constant 0 : i32
    return %arg1, %c0_i32, %c0_i32_0 : i32, i32, i32
  }
  func.func @transform_5(%arg0: i32, %arg1: i32) -> (i32, i32) {
    %c0_i32 = arith.constant 0 : i32
    %c0_i32_0 = arith.constant 0 : i32
    %c0_i32_1 = arith.constant 0 : i32
    return %c0_i32, %c0_i32_0 : i32, i32
  }
  func.func @transform_6(%arg0: i32, %arg1: i32) -> (i32, i32, i32, i32) {
    %c0_i32 = arith.constant 0 : i32
    %c0_i32_0 = arith.constant 0 : i32
    %c0_i32_1 = arith.constant 0 : i32
    return %arg1, %arg0, %c0_i32, %c0_i32_0 : i32, i32, i32, i32
  }
}

</mosaic_0001>

<llo_original>
// kernel: dar_simple.1
$region0: #{dar_simple.1}
  #allocation0 [shape = 'u32[]', space=smem, size = 0x4, offset = 0x4, fixed_abs, tag = 'smem constant byte address 0x4 - core index']
  #allocation1 [shape = 'u32[144,128]{1,0:T(1,128)}', space=vmem, size = 0x12000, scoped, tag = 'internal scratch']
  #allocation2 [shape = 'f32[372,2]{1,0:T(8,128)}', space=vmem, size = 0x2f000, scoped, tag = 'scratch operand']
  %s0 = inlined_call_operand.vmem [shape: bf16[2,2,324,4], index: 0, kind: input, shape index: {}]
  %s1 = inlined_call_operand.vmem [shape: bf16[2,4,2], index: 1, kind: input, shape index: {}]
  %s2 = inlined_call_operand.vmem [shape: f32[2,1,2], index: 2, kind: input, shape index: {}]
  %s3 = inlined_call_operand.vmem [shape: bf16[2,9,2,2], index: 3, kind: input, shape index: {}]
  %s4 = inlined_call_operand.vmem [shape: f32[2,1,2], index: 4, kind: input, shape index: {}]
  %s5 = inlined_call_operand.vmem [shape: f32[324,1], index: 5, kind: input, shape index: {}]
  %s6 = inlined_call_operand.vmem [shape: f32[2,2,324,2], index: 6, kind: output, shape index: {}]
  %s7 = sld [smem:[#allocation0]]
  $region57: #{dar_simple.1} parent=0
    _
  %s9 = ssub.s32 1, %s7
  %s10 = scalar_select 0, %s9, %s7
  loop: start=0, step=1, limit=6
  $region2: #{dar_simple.1} parent=0 // loop_pre_header
    _
  $region3: #{dar_simple.1} parent=0 // loop_header
    %s12 = sphi 0, %s16
    %p13 = scmp.ge.s32.totalorder %s12, 6
    %s19 = sphi 0, %s31
    %s20 = sphi 0, %s27
    %s21 = sphi 0, %s19
    %s22 = sphi 0, %s20
    %s23 = sphi 0, %s21
    %s24 = sphi 0, %s22
    %s36 = sphi 0, %s38
    %s39 = sphi 0, %s36
    %s40 = sphi 0, %s39
    %s56 = sphi 0, %s40
    %s62 = sphi 0, %s64
    %s65 = sphi 0, %s62
    %s66 = sphi 0, %s65
    %s82 = sphi 0, %s66
    %s88 = sphi 0, %s90
    %s91 = sphi 0, %s88
    %s92 = sphi 0, %s91
    %s108 = sphi 0, %s92
    %s114 = sphi 0, %s116
    %s117 = sphi 0, %s114
    %s118 = sphi 0, %s117
    %s134 = sphi 0, %s118
    %s140 = sphi 0, %s142
    %s143 = sphi 0, %s140
    %s144 = sphi 0, %s143
    %s160 = sphi 0, %s144
    %s164 = sphi 0, %s164
    %s166 = sphi 0, %s164
    %s167 = sphi 0, %s166
    %s181 = sphi 0, %s167
    %s189 = sphi 0, %s191
    %s192 = sphi 0, %s189
    %s193 = sphi 0, %s192
    %s209 = sphi 0, %s193
  $region4: #{dar_simple.1} parent=0 // loop_header_branch
    %15 = sbr.rel (%p13) target = $region8
  $region5: #{dar_simple.1} parent=0 // loop_body
    %s17 = ssub.s32 %s12, 1
    %s18 = ssub.s32 %s12, 2
    %s25 = sadd.s32 1, %s20
    %p26 = scmp.ge.s32.totalorder %s25, 2
    %s27 = scalar_select %p26, 0, %s25
    %s28 = sadd.s32 1, %s19
    %s29 = scalar_select %p26, %s28, %s19
    %p30 = scmp.ge.s32.totalorder %s29, 2
    %s31 = scalar_select %p30, 0, %s29
    %s32 = ssub.s32 %s20, %s27
    %s33 = ssub.s32 %s19, %s31
    %s34 = sor.u32 %s32, %s33
    %p35 = scmp.eq.s32.totalorder %s34, 0
    %s37 = sadd.s32 %s36, 1
    %s38 = scalar_select %p35, %s36, %s37
    %p41 = pneg %p35
    %p42 = scmp.eq.s32.totalorder %s12, 3
    %p43 = por %p41, %p42
    %p44 = scmp.ne.s32.totalorder %s36, %s39
    %p45 = scmp.eq.s32.totalorder %s12, 0
    %p46 = por %p44, %p45
    %p47 = scmp.ne.s32.totalorder %s36, %s39
    %p48 = scmp.eq.s32.totalorder %s17, 3
    %p49 = por %p47, %p48
    %p50 = scmp.ne.s32.totalorder %s39, %s40
    %p51 = scmp.eq.s32.totalorder %s17, 0
    %p52 = por %p50, %p51
    %p53 = scmp.ne.s32.totalorder %s39, %s40
    %p54 = scmp.eq.s32.totalorder %s18, 3
    %p55 = por %p53, %p54
    %p57 = scmp.ne.s32.totalorder %s40, %s56
    %p58 = scmp.eq.s32.totalorder %s18, 0
    %p59 = por %p57, %p58
    %s60 = ssub.s32 %s20, %s27
    %p61 = scmp.eq.s32.totalorder %s60, 0
    %s63 = sadd.s32 %s62, 1
    %s64 = scalar_select %p61, %s62, %s63
    %p67 = pneg %p61
    %p68 = scmp.eq.s32.totalorder %s12, 3
    %p69 = por %p67, %p68
    %p70 = scmp.ne.s32.totalorder %s62, %s65
    %p71 = scmp.eq.s32.totalorder %s12, 0
    %p72 = por %p70, %p71
    %p73 = scmp.ne.s32.totalorder %s62, %s65
    %p74 = scmp.eq.s32.totalorder %s17, 3
    %p75 = por %p73, %p74
    %p76 = scmp.ne.s32.totalorder %s65, %s66
    %p77 = scmp.eq.s32.totalorder %s17, 0
    %p78 = por %p76, %p77
    %p79 = scmp.ne.s32.totalorder %s65, %s66
    %p80 = scmp.eq.s32.totalorder %s18, 3
    %p81 = por %p79, %p80
    %p83 = scmp.ne.s32.totalorder %s66, %s82
    %p84 = scmp.eq.s32.totalorder %s18, 0
    %p85 = por %p83, %p84
    %s86 = ssub.s32 %s20, %s27
    %p87 = scmp.eq.s32.totalorder %s86, 0
    %s89 = sadd.s32 %s88, 1
    %s90 = scalar_select %p87, %s88, %s89
    %p93 = pneg %p87
    %p94 = scmp.eq.s32.totalorder %s12, 3
    %p95 = por %p93, %p94
    %p96 = scmp.ne.s32.totalorder %s88, %s91
    %p97 = scmp.eq.s32.totalorder %s12, 0
    %p98 = por %p96, %p97
    %p99 = scmp.ne.s32.totalorder %s88, %s91
    %p100 = scmp.eq.s32.totalorder %s17, 3
    %p101 = por %p99, %p100
    %p102 = scmp.ne.s32.totalorder %s91, %s92
    %p103 = scmp.eq.s32.totalorder %s17, 0
    %p104 = por %p102, %p103
    %p105 = scmp.ne.s32.totalorder %s91, %s92
    %p106 = scmp.eq.s32.totalorder %s18, 3
    %p107 = por %p105, %p106
    %p109 = scmp.ne.s32.totalorder %s92, %s108
    %p110 = scmp.eq.s32.totalorder %s18, 0
    %p111 = por %p109, %p110
    %s112 = ssub.s32 %s20, %s27
    %p113 = scmp.eq.s32.totalorder %s112, 0
    %s115 = sadd.s32 %s114, 1
    %s116 = scalar_select %p113, %s114, %s115
    %p119 = pneg %p113
    %p120 = scmp.eq.s32.totalorder %s12, 3
    %p121 = por %p119, %p120
    %p122 = scmp.ne.s32.totalorder %s114, %s117
    %p123 = scmp.eq.s32.totalorder %s12, 0
    %p124 = por %p122, %p123
    %p125 = scmp.ne.s32.totalorder %s114, %s117
    %p126 = scmp.eq.s32.totalorder %s17, 3
    %p127 = por %p125, %p126
    %p128 = scmp.ne.s32.totalorder %s117, %s118
    %p129 = scmp.eq.s32.totalorder %s17, 0
    %p130 = por %p128, %p129
    %p131 = scmp.ne.s32.totalorder %s117, %s118
    %p132 = scmp.eq.s32.totalorder %s18, 3
    %p133 = por %p131, %p132
    %p135 = scmp.ne.s32.totalorder %s118, %s134
    %p136 = scmp.eq.s32.totalorder %s18, 0
    %p137 = por %p135, %p136
    %s138 = ssub.s32 %s20, %s27
    %p139 = scmp.eq.s32.totalorder %s138, 0
    %s141 = sadd.s32 %s140, 1
    %s142 = scalar_select %p139, %s140, %s141
    %p145 = pneg %p139
    %p146 = scmp.eq.s32.totalorder %s12, 3
    %p147 = por %p145, %p146
    %p148 = scmp.ne.s32.totalorder %s140, %s143
    %p149 = scmp.eq.s32.totalorder %s12, 0
    %p150 = por %p148, %p149
    %p151 = scmp.ne.s32.totalorder %s140, %s143
    %p152 = scmp.eq.s32.totalorder %s17, 3
    %p153 = por %p151, %p152
    %p154 = scmp.ne.s32.totalorder %s143, %s144
    %p155 = scmp.eq.s32.totalorder %s17, 0
    %p156 = por %p154, %p155
    %p157 = scmp.ne.s32.totalorder %s143, %s144
    %p158 = scmp.eq.s32.totalorder %s18, 3
    %p159 = por %p157, %p158
    %p161 = scmp.ne.s32.totalorder %s144, %s160
    %p162 = scmp.eq.s32.totalorder %s18, 0
    %p163 = por %p161, %p162
    %s165 = sadd.s32 %s164, 1
    %p168 = scmp.eq.s32.totalorder %s12, 3
    %p169 = scmp.ne.s32.totalorder %s164, %s166
    %p170 = scmp.eq.s32.totalorder %s12, 0
    %p171 = por %p169, %p170
    %p172 = scmp.ne.s32.totalorder %s164, %s166
    %p173 = scmp.eq.s32.totalorder %s17, 3
    %p174 = por %p172, %p173
    %p175 = scmp.ne.s32.totalorder %s166, %s167
    %p176 = scmp.eq.s32.totalorder %s17, 0
    %p177 = por %p175, %p176
    %p178 = scmp.ne.s32.totalorder %s166, %s167
    %p179 = scmp.eq.s32.totalorder %s18, 3
    %p180 = por %p178, %p179
    %p182 = scmp.ne.s32.totalorder %s167, %s181
    %p183 = scmp.eq.s32.totalorder %s18, 0
    %p184 = por %p182, %p183
    %s185 = ssub.s32 %s20, %s27
    %s186 = ssub.s32 %s19, %s31
    %s187 = sor.u32 %s185, %s186
    %p188 = scmp.eq.s32.totalorder %s187, 0
    %s190 = sadd.s32 %s189, 1
    %s191 = scalar_select %p188, %s189, %s190
    %p194 = pneg %p188
    %p195 = scmp.eq.s32.totalorder %s12, 3
    %p196 = por %p194, %p195
    %p197 = scmp.ne.s32.totalorder %s189, %s192
    %p198 = scmp.eq.s32.totalorder %s12, 0
    %p199 = por %p197, %p198
    %p200 = scmp.ne.s32.totalorder %s189, %s192
    %p201 = scmp.eq.s32.totalorder %s17, 3
    %p202 = por %p200, %p201
    %p203 = scmp.ne.s32.totalorder %s192, %s193
    %p204 = scmp.eq.s32.totalorder %s17, 0
    %p205 = por %p203, %p204
    %p206 = scmp.ne.s32.totalorder %s192, %s193
    %p207 = scmp.eq.s32.totalorder %s18, 3
    %p208 = por %p206, %p207
    %p210 = scmp.ne.s32.totalorder %s193, %s209
    %p211 = scmp.eq.s32.totalorder %s18, 0
    %p212 = por %p210, %p211
    %p213 = scmp.le.s32.totalorder 1, %s12
    %p214 = scmp.lt.s32.totalorder %s12, 5
    %p215 = pnand %p213, %p214
    %p216 = pneg %p215
    // Predicated region
    $region9: #{dar_simple.1} parent=5 // pred_check
      _
    $region10: #{dar_simple.1} parent=5 // pred_check_branch
      %218 = sbr.rel (%p215) target = $region12
    $region11: #{dar_simple.1} parent=5 // pred_region
      %s219 = ssub.s32 %s12, 1
      // Predicated region
      $region13: #{dar_simple.1} parent=11 // pred_check
        %p220 = pneg %p177
      $region14: #{dar_simple.1} parent=11 // pred_check_branch
        %222 = sbr.rel (%p220) target = $region16
      $region15: #{dar_simple.1} parent=11 // pred_region
        _
      $region16: #{dar_simple.1} parent=11 // pred_fallthru
        _
    $region12: #{dar_simple.1} parent=5 // pred_fallthru
      _
    %p223 = scmp.lt.s32.totalorder %s12, 4
    // Predicated region
    $region17: #{dar_simple.1} parent=5 // pred_check
      %p224 = pneg %p223
    $region18: #{dar_simple.1} parent=5 // pred_check_branch
      %226 = sbr.rel (%p224) target = $region20
    $region19: #{dar_simple.1} parent=5 // pred_region
      // Predicated region
      $region21: #{dar_simple.1} parent=19 // pred_check
        %p227 = pneg %p46
      $region22: #{dar_simple.1} parent=19 // pred_check_branch
        %229 = sbr.rel (%p227) target = $region24
      $region23: #{dar_simple.1} parent=19 // pred_region
        %p230 = scmp.lt.s32.totalorder %s20, 1
        %s231 = scalar_select %p230, %s20, 1
        %p232 = scmp.lt.s32.totalorder %s19, 1
        %s233 = scalar_select %p232, %s19, 1
        %s234 = smul.addr %s233, 41
        %s235 = smul.addr %s231, 82
        %s236 = sadd.s32 %s234, %s235
        %s237 = smul.addr %s236, 4
        %s238 = scalar_lea.vmem %s0, %s237
      $region24: #{dar_simple.1} parent=19 // pred_fallthru
        _
      // Predicated region
      $region25: #{dar_simple.1} parent=19 // pred_check
        %p239 = pneg %p72
      $region26: #{dar_simple.1} parent=19 // pred_check_branch
        %241 = sbr.rel (%p239) target = $region28
      $region27: #{dar_simple.1} parent=19 // pred_region
        %p242 = scmp.lt.s32.totalorder %s20, 1
        %s243 = scalar_select %p242, %s20, 1
        %s244 = smul.addr %s243, 2
        %s245 = scalar_lea.vmem %s1, %s244
      $region28: #{dar_simple.1} parent=19 // pred_fallthru
        _
      // Predicated region
      $region29: #{dar_simple.1} parent=19 // pred_check
        %p246 = pneg %p98
      $region30: #{dar_simple.1} parent=19 // pred_check_branch
        %248 = sbr.rel (%p246) target = $region32
      $region31: #{dar_simple.1} parent=19 // pred_region
        %p249 = scmp.lt.s32.totalorder %s20, 1
        %s250 = scalar_select %p249, %s20, 1
        %s251 = scalar_lea.vmem %s2, %s250
      $region32: #{dar_simple.1} parent=19 // pred_fallthru
        _
      // Predicated region
      $region33: #{dar_simple.1} parent=19 // pred_check
        %p252 = pneg %p124
      $region34: #{dar_simple.1} parent=19 // pred_check_branch
        %254 = sbr.rel (%p252) target = $region36
      $region35: #{dar_simple.1} parent=19 // pred_region
        %p255 = scmp.lt.s32.totalorder %s20, 1
        %s256 = scalar_select %p255, %s20, 1
        %s257 = smul.addr %s256, 9
        %s258 = scalar_lea.vmem %s3, %s257
      $region36: #{dar_simple.1} parent=19 // pred_fallthru
        _
      // Predicated region
      $region37: #{dar_simple.1} parent=19 // pred_check
        %p259 = pneg %p150
      $region38: #{dar_simple.1} parent=19 // pred_check_branch
        %261 = sbr.rel (%p259) target = $region40
      $region39: #{dar_simple.1} parent=19 // pred_region
        %p262 = scmp.lt.s32.totalorder %s20, 1
        %s263 = scalar_select %p262, %s20, 1
        %s264 = scalar_lea.vmem %s4, %s263
      $region40: #{dar_simple.1} parent=19 // pred_fallthru
        _
    $region20: #{dar_simple.1} parent=5 // pred_fallthru
      _
    %p265 = scmp.le.s32.totalorder 1, %s12
    %p266 = scmp.lt.s32.totalorder %s12, 5
    %p267 = pnand %p265, %p266
    %p268 = pneg %p267
    // Predicated region
    $region41: #{dar_simple.1} parent=5 // pred_check
      _
    $region42: #{dar_simple.1} parent=5 // pred_check_branch
      %270 = sbr.rel (%p267) target = $region44
    $region43: #{dar_simple.1} parent=5 // pred_region
      %s271 = ssub.s32 %s12, 1
      %p272 = scmp.lt.s32.totalorder %s22, 1
      %s273 = scalar_select %p272, %s22, 1
      %p274 = scmp.lt.s32.totalorder %s21, 1
      %s275 = scalar_select %p274, %s21, 1
      %s276 = smul.addr %s275, 41
      %s277 = smul.addr %s273, 82
      %s278 = sadd.s32 %s276, %s277
      %s279 = smul.addr %s278, 4
      %s280 = scalar_lea.vmem %s0, %s279
      %p281 = pneg %p52
      %p282 = pneg %p49
      %p283 = scmp.lt.s32.totalorder %s22, 1
      %s284 = scalar_select %p283, %s22, 1
      %s285 = smul.addr %s284, 2
      %s286 = scalar_lea.vmem %s1, %s285
      %p287 = pneg %p78
      %p288 = pneg %p75
      %p289 = scmp.lt.s32.totalorder %s22, 1
      %s290 = scalar_select %p289, %s22, 1
      %s291 = scalar_lea.vmem %s2, %s290
      %p292 = pneg %p104
      %p293 = pneg %p101
      %p294 = scmp.lt.s32.totalorder %s22, 1
      %s295 = scalar_select %p294, %s22, 1
      %s296 = smul.addr %s295, 9
      %s297 = scalar_lea.vmem %s3, %s296
      %p298 = pneg %p130
      %p299 = pneg %p127
      %p300 = scmp.lt.s32.totalorder %s22, 1
      %s301 = scalar_select %p300, %s22, 1
      %s302 = scalar_lea.vmem %s4, %s301
      %p303 = pneg %p156
      %p304 = pneg %p153
      %p305 = pneg %p177
      %p306 = pneg %p174
      %p307 = pneg %p205
      %p308 = pneg %p202
      %p309 = scmp.lt.s32.totalorder %s22, 1
      %s310 = scalar_select %p309, %s22, 1
      %p311 = scmp.lt.s32.totalorder %s21, 1
      %s312 = scalar_select %p311, %s21, 1
      %s313 = smul.addr %s312, 41
      %s314 = smul.addr %s310, 82
      %s315 = sadd.s32 %s313, %s314
      %s316 = smul.addr %s315, 8
      %s317 = scalar_lea.vmem %s6, %s316
      %p318 = scmp.lt.s32.totalorder %s22, 1
      %s319 = scalar_select %p318, %s22, 1
      %p320 = scmp.lt.s32.totalorder %s21, 1
      %s321 = scalar_select %p320, %s21, 1
      %s322 = smul.addr %s321, 41
      %s323 = smul.addr %s319, 82
      %s324 = sadd.s32 %s322, %s323
      %s325 = smul.addr %s324, 4
      %s326 = scalar_lea.vmem %s0, %s325
      %p327 = scmp.lt.s32.totalorder %s22, 1
      %s328 = scalar_select %p327, %s22, 1
      %s329 = smul.addr %s328, 2
      %s330 = scalar_lea.vmem %s1, %s329
      %p331 = scmp.lt.s32.totalorder %s22, 1
      %s332 = scalar_select %p331, %s22, 1
      %s333 = scalar_lea.vmem %s2, %s332
      %p334 = scmp.lt.s32.totalorder %s22, 1
      %s335 = scalar_select %p334, %s22, 1
      %s336 = smul.addr %s335, 9
      %s337 = scalar_lea.vmem %s3, %s336
      %p338 = scmp.lt.s32.totalorder %s22, 1
      %s339 = scalar_select %p338, %s22, 1
      %s340 = scalar_lea.vmem %s4, %s339
      %p341 = scmp.lt.s32.totalorder %s22, 1
      %s342 = scalar_select %p341, %s22, 1
      %p343 = scmp.lt.s32.totalorder %s21, 1
      %s344 = scalar_select %p343, %s21, 1
      %s345 = smul.addr %s344, 41
      %s346 = smul.addr %s342, 82
      %s347 = sadd.s32 %s345, %s346
      %s348 = smul.addr %s347, 8
      %s349 = scalar_lea.vmem %s6, %s348
      %vm351 = vcmask 15360
      %352 = vst.msk [vmem:[#allocation2] sm:$0xff] %vm351, 0.0
      %353 = vst.msk [vmem:[#allocation2 + $0x8] sm:$0xff] %vm351, 0.0
      %354 = vst.msk [vmem:[#allocation2 + $0x10] sm:$0xff] %vm351, 0.0
      %355 = vst.msk [vmem:[#allocation2 + $0x18] sm:$0xff] %vm351, 0.0
      %356 = vst.msk [vmem:[#allocation2 + $0x20] sm:$0xff] %vm351, 0.0
      %357 = vst.msk [vmem:[#allocation2 + $0x28] sm:$0xff] %vm351, 0.0
      %358 = vst.msk [vmem:[#allocation2 + $0x30] sm:$0xff] %vm351, 0.0
      %359 = vst.msk [vmem:[#allocation2 + $0x38] sm:$0xff] %vm351, 0.0
      %360 = vst.msk [vmem:[#allocation2 + $0x40] sm:$0xff] %vm351, 0.0
      %361 = vst.msk [vmem:[#allocation2 + $0x48] sm:$0xff] %vm351, 0.0
      %362 = vst.msk [vmem:[#allocation2 + $0x50] sm:$0xff] %vm351, 0.0
      %363 = vst.msk [vmem:[#allocation2 + $0x58] sm:$0xff] %vm351, 0.0
      %364 = vst.msk [vmem:[#allocation2 + $0x60] sm:$0xff] %vm351, 0.0
      %365 = vst.msk [vmem:[#allocation2 + $0x68] sm:$0xff] %vm351, 0.0
      %366 = vst.msk [vmem:[#allocation2 + $0x70] sm:$0xff] %vm351, 0.0
      %367 = vst.msk [vmem:[#allocation2 + $0x78] sm:$0xff] %vm351, 0.0
      %368 = vst.msk [vmem:[#allocation2 + $0x80] sm:$0xff] %vm351, 0.0
      %369 = vst.msk [vmem:[#allocation2 + $0x88] sm:$0xff] %vm351, 0.0
      %370 = vst.msk [vmem:[#allocation2 + $0x90] sm:$0xff] %vm351, 0.0
      %371 = vst.msk [vmem:[#allocation2 + $0x98] sm:$0xff] %vm351, 0.0
      %372 = vst.msk [vmem:[#allocation2 + $0xa0] sm:$0xff] %vm351, 0.0
      %373 = vst.msk [vmem:[#allocation2 + $0xa8] sm:$0xff] %vm351, 0.0
      %374 = vst.msk [vmem:[#allocation2 + $0xb0] sm:$0xff] %vm351, 0.0
      %375 = vst.msk [vmem:[#allocation2 + $0xb8] sm:$0xff] %vm351, 0.0
      %376 = vst.msk [vmem:[#allocation2 + $0xc0] sm:$0xff] %vm351, 0.0
      %377 = vst.msk [vmem:[#allocation2 + $0xc8] sm:$0xff] %vm351, 0.0
      %378 = vst.msk [vmem:[#allocation2 + $0xd0] sm:$0xff] %vm351, 0.0
      %379 = vst.msk [vmem:[#allocation2 + $0xd8] sm:$0xff] %vm351, 0.0
      %380 = vst.msk [vmem:[#allocation2 + $0xe0] sm:$0xff] %vm351, 0.0
      %381 = vst.msk [vmem:[#allocation2 + $0xe8] sm:$0xff] %vm351, 0.0
      %382 = vst.msk [vmem:[#allocation2 + $0xf0] sm:$0xff] %vm351, 0.0
      %383 = vst.msk [vmem:[#allocation2 + $0xf8] sm:$0xff] %vm351, 0.0
      %384 = vst.msk [vmem:[#allocation2 + $0x100] sm:$0xff] %vm351, 0.0
      %385 = vst.msk [vmem:[#allocation2 + $0x108] sm:$0xff] %vm351, 0.0
      %386 = vst.msk [vmem:[#allocation2 + $0x110] sm:$0xff] %vm351, 0.0
      %387 = vst.msk [vmem:[#allocation2 + $0x118] sm:$0xff] %vm351, 0.0
      %388 = vst.msk [vmem:[#allocation2 + $0x120] sm:$0xff] %vm351, 0.0
      %389 = vst.msk [vmem:[#allocation2 + $0x128] sm:$0xff] %vm351, 0.0
      %390 = vst.msk [vmem:[#allocation2 + $0x130] sm:$0xff] %vm351, 0.0
      %391 = vst.msk [vmem:[#allocation2 + $0x138] sm:$0xff] %vm351, 0.0
      %392 = vst.msk [vmem:[#allocation2 + $0x140] sm:$0xff] %vm351, 0.0
      %393 = vst.msk [vmem:[#allocation2 + $0x148] sm:$0xff] %vm351, 0.0
      %394 = vst.msk [vmem:[#allocation2 + $0x150] sm:$0xff] %vm351, 0.0
      %395 = vst.msk [vmem:[#allocation2 + $0x158] sm:$0xff] %vm351, 0.0
      %396 = vst.msk [vmem:[#allocation2 + $0x160] sm:$0xff] %vm351, 0.0
      %397 = vst.msk [vmem:[#allocation2 + $0x168] sm:$0xff] %vm351, 0.0
      %vm398 = vcmask 11264
      %399 = vst.msk [vmem:[#allocation2 + $0x170] sm:$0xf] %vm398, 0.0
      %v400 = vld [vmem:[%s326] sm:$0xf]
      %v401 = vld [vmem:[%s326 + $0x4] sm:$0xf]
      %v402 = vld [vmem:[%s326 + $0x8] sm:$0xf]
      %v403 = vld [vmem:[%s326 + $0xc] sm:$0xf]
      %v404 = vld [vmem:[%s326 + $0x10] sm:$0xf]
      %v405 = vld [vmem:[%s326 + $0x14] sm:$0xf]
      %v406 = vld [vmem:[%s326 + $0x18] sm:$0xf]
      %v407 = vld [vmem:[%s326 + $0x1c] sm:$0xf]
      %v408 = vld [vmem:[%s326 + $0x20] sm:$0xf]
      %v409 = vld [vmem:[%s326 + $0x24] sm:$0xf]
      %v410 = vld [vmem:[%s326 + $0x28] sm:$0xf]
      %v411 = vld [vmem:[%s326 + $0x2c] sm:$0xf]
      %v412 = vld [vmem:[%s326 + $0x30] sm:$0xf]
      %v413 = vld [vmem:[%s326 + $0x34] sm:$0xf]
      %v414 = vld [vmem:[%s326 + $0x38] sm:$0xf]
      %v415 = vld [vmem:[%s326 + $0x3c] sm:$0xf]
      %v416 = vld [vmem:[%s326 + $0x40] sm:$0xf]
      %v417 = vld [vmem:[%s326 + $0x44] sm:$0xf]
      %v418 = vld [vmem:[%s326 + $0x48] sm:$0xf]
      %v419 = vld [vmem:[%s326 + $0x4c] sm:$0xf]
      %v420 = vld [vmem:[%s326 + $0x50] sm:$0xf]
      %v421 = vld [vmem:[%s326 + $0x54] sm:$0xf]
      %v422 = vld [vmem:[%s326 + $0x58] sm:$0xf]
      %v423 = vld [vmem:[%s326 + $0x5c] sm:$0xf]
      %v424 = vld [vmem:[%s326 + $0x60] sm:$0xf]
      %v425 = vld [vmem:[%s326 + $0x64] sm:$0xf]
      %v426 = vld [vmem:[%s326 + $0x68] sm:$0xf]
      %v427 = vld [vmem:[%s326 + $0x6c] sm:$0xf]
      %v428 = vld [vmem:[%s326 + $0x70] sm:$0xf]
      %v429 = vld [vmem:[%s326 + $0x74] sm:$0xf]
      %v430 = vld [vmem:[%s326 + $0x78] sm:$0xf]
      %v431 = vld [vmem:[%s326 + $0x7c] sm:$0xf]
      %v432 = vld [vmem:[%s326 + $0x80] sm:$0xf]
      %v433 = vld [vmem:[%s326 + $0x84] sm:$0xf]
      %v434 = vld [vmem:[%s326 + $0x88] sm:$0xf]
      %v435 = vld [vmem:[%s326 + $0x8c] sm:$0xf]
      %v436 = vld [vmem:[%s326 + $0x90] sm:$0xf]
      %v437 = vld [vmem:[%s326 + $0x94] sm:$0xf]
      %v438 = vld [vmem:[%s326 + $0x98] sm:$0xf]
      %v439 = vld [vmem:[%s326 + $0x9c] sm:$0xf]
      %v440 = vld [vmem:[%s326 + $0xa0] sm:$0x3]
      %v441 = vld [vmem:[%s330] sm:$0x3]
      %v442 = vld [vmem:[%s333] sm:$0x1]
      %v444 = vlaneseq
      %v445 = vshrl.u32 %v444, 7
      %v446 = vsub.s32 0, %v445
      %v447 = vrot.slane %v442, %v446
      %v490 = vunpack.c.l.b16 %v400
      %v491 = vunpack.c.l.b16 %v401
      %v492 = vunpack.c.l.b16 %v402
      %v493 = vunpack.c.l.b16 %v403
      %v494 = vunpack.c.l.b16 %v404
      %v495 = vunpack.c.l.b16 %v405
      %v496 = vunpack.c.l.b16 %v406
      %v497 = vunpack.c.l.b16 %v407
      %v498 = vunpack.c.l.b16 %v408
      %v499 = vunpack.c.l.b16 %v409
      %v500 = vunpack.c.l.b16 %v410
      %v501 = vunpack.c.l.b16 %v411
      %v502 = vunpack.c.l.b16 %v412
      %v503 = vunpack.c.l.b16 %v413
      %v504 = vunpack.c.l.b16 %v414
      %v505 = vunpack.c.l.b16 %v415
      %v506 = vunpack.c.l.b16 %v416
      %v507 = vunpack.c.l.b16 %v417
      %v508 = vunpack.c.l.b16 %v418
      %v509 = vunpack.c.l.b16 %v419
      %v510 = vunpack.c.l.b16 %v420
      %v511 = vunpack.c.l.b16 %v421
      %v512 = vunpack.c.l.b16 %v422
      %v513 = vunpack.c.l.b16 %v423
      %v514 = vunpack.c.l.b16 %v424
      %v515 = vunpack.c.l.b16 %v425
      %v516 = vunpack.c.l.b16 %v426
      %v517 = vunpack.c.l.b16 %v427
      %v518 = vunpack.c.l.b16 %v428
      %v519 = vunpack.c.l.b16 %v429
      %v520 = vunpack.c.l.b16 %v430
      %v521 = vunpack.c.l.b16 %v431
      %v522 = vunpack.c.l.b16 %v432
      %v523 = vunpack.c.l.b16 %v433
      %v524 = vunpack.c.l.b16 %v434
      %v525 = vunpack.c.l.b16 %v435
      %v526 = vunpack.c.l.b16 %v436
      %v527 = vunpack.c.l.b16 %v437
      %v528 = vunpack.c.l.b16 %v438
      %v529 = vunpack.c.l.b16 %v439
      %v530 = vunpack.c.l.b16 %v440
      %v531 = vpack.c.b16 %v491, %v490
      %v532 = vpack.c.b16 %v493, %v492
      %v533 = vpack.c.b16 %v495, %v494
      %v534 = vpack.c.b16 %v497, %v496
      %v535 = vpack.c.b16 %v499, %v498
      %v536 = vpack.c.b16 %v501, %v500
      %v537 = vpack.c.b16 %v503, %v502
      %v538 = vpack.c.b16 %v505, %v504
      %v539 = vpack.c.b16 %v507, %v506
      %v540 = vpack.c.b16 %v509, %v508
      %v541 = vpack.c.b16 %v511, %v510
      %v542 = vpack.c.b16 %v513, %v512
      %v543 = vpack.c.b16 %v515, %v514
      %v544 = vpack.c.b16 %v517, %v516
      %v545 = vpack.c.b16 %v519, %v518
      %v546 = vpack.c.b16 %v521, %v520
      %v547 = vpack.c.b16 %v523, %v522
      %v548 = vpack.c.b16 %v525, %v524
      %v549 = vpack.c.b16 %v527, %v526
      %v550 = vpack.c.b16 %v529, %v528
      %v551 = vpack.c.b16 %v530, %v530
      %vm552 = vcmask 31744
      %v554 = vsel %vm552, %v531, 0
      %v557 = vsel %vm552, %v532, 0
      %v560 = vsel %vm552, %v533, 0
      %v563 = vsel %vm552, %v534, 0
      %v566 = vsel %vm552, %v535, 0
      %v569 = vsel %vm552, %v536, 0
      %v572 = vsel %vm552, %v537, 0
      %v575 = vsel %vm552, %v538, 0
      %v578 = vsel %vm552, %v539, 0
      %v581 = vsel %vm552, %v540, 0
      %v584 = vsel %vm552, %v541, 0
      %v587 = vsel %vm552, %v542, 0
      %v590 = vsel %vm552, %v543, 0
      %v593 = vsel %vm552, %v544, 0
      %v596 = vsel %vm552, %v545, 0
      %v599 = vsel %vm552, %v546, 0
      %v602 = vsel %vm552, %v547, 0
      %v605 = vsel %vm552, %v548, 0
      %v608 = vsel %vm552, %v549, 0
      %v611 = vsel %vm552, %v550, 0
      %v614 = vsel %vm552, %v551, 0
      %vm616 = vcmask 1041408
      %v618 = vsel %vm616, %v441, 0
      %620 = vmatprep.subr.bf16.mxu0 0
      %621 = vmatpush1.bf16.msra.mxu0 0
      %622 = vmatprep.subr.bf16.mxu0 0
      %623 = vmatpush1.bf16.msra.mxu0 0
      %624 = vmatprep.subr.bf16.mxu0 0
      %625 = vmatpush1.bf16.msra.mxu0 0
      %626 = vmatprep.subr.bf16.mxu0 0
      %627 = vmatpush1.bf16.msra.mxu0 0
      %628 = vmatprep.subr.bf16.mxu0 0
      %629 = vmatpush1.bf16.msra.mxu0 0
      %630 = vmatprep.subr.bf16.mxu0 0
      %631 = vmatpush1.bf16.msra.mxu0 0
      %632 = vmatprep.subr.bf16.mxu0 0
      %633 = vmatpush1.bf16.msra.mxu0 0
      %634 = vmatprep.subr.bf16.mxu0 0
      %635 = vmatpush1.bf16.msra.mxu0 %v618
      %636 = vmatprep.subr.bf16.mxu0 0
      %637 = vmatpush2.bf16.msra.mxu0 0
      %638 = vmatprep.subr.bf16.mxu0 0
      %639 = vmatpush2.bf16.msra.mxu0 0
      %640 = vmatprep.subr.bf16.mxu0 0
      %641 = vmatpush2.bf16.msra.mxu0 0
      %642 = vmatprep.subr.bf16.mxu0 0
      %643 = vmatpush2.bf16.msra.mxu0 0
      %644 = vmatprep.subr.bf16.mxu0 0
      %645 = vmatpush2.bf16.msra.mxu0 0
      %646 = vmatprep.subr.bf16.mxu0 0
      %647 = vmatpush2.bf16.msra.mxu0 0
      %648 = vmatprep.subr.bf16.mxu0 0
      %649 = vmatpush2.bf16.msra.mxu0 0
      %650 = vmatprep.subr.bf16.mxu0 0
      %651 = vmatpush2.bf16.msra.mxu0 0
      %652 = vmatprep.mubr.bf16.mxu0 0
      %653 = vmatmul.mubr.bf16.gmra.mxu0 %v554
      %v654 = vpop.f32.mrf.mxu0
      %v655 = vadd.f32 %v447, %v654
      %v656 = vpop.f32.mrf.mxu0
      %v657 = vpop.f32.mrf.mxu0
      %v658 = vadd.f32 %v447, %v657
      %v659 = vpop.f32.mrf.mxu0
      %660 = vmatprep.mubr.bf16.mxu0 0
      %661 = vmatmul.mubr.bf16.gmra.mxu0 %v557
      %v662 = vpop.f32.mrf.mxu0
      %v663 = vadd.f32 %v447, %v662
      %v664 = vpop.f32.mrf.mxu0
      %v665 = vpop.f32.mrf.mxu0
      %v666 = vadd.f32 %v447, %v665
      %v667 = vpop.f32.mrf.mxu0
      %668 = vmatprep.mubr.bf16.mxu0 0
      %669 = vmatmul.mubr.bf16.gmra.mxu0 %v560
      %v670 = vpop.f32.mrf.mxu0
      %v671 = vadd.f32 %v447, %v670
      %v672 = vpop.f32.mrf.mxu0
      %v673 = vpop.f32.mrf.mxu0
      %v674 = vadd.f32 %v447, %v673
      %v675 = vpop.f32.mrf.mxu0
      %676 = vmatprep.mubr.bf16.mxu0 0
      %677 = vmatmul.mubr.bf16.gmra.mxu0 %v563
      %v678 = vpop.f32.mrf.mxu0
      %v679 = vadd.f32 %v447, %v678
      %v680 = vpop.f32.mrf.mxu0
      %v681 = vpop.f32.mrf.mxu0
      %v682 = vadd.f32 %v447, %v681
      %v683 = vpop.f32.mrf.mxu0
      %684 = vmatprep.mubr.bf16.mxu0 0
      %685 = vmatmul.mubr.bf16.gmra.mxu0 %v566
      %v686 = vpop.f32.mrf.mxu0
      %v687 = vadd.f32 %v447, %v686
      %v688 = vpop.f32.mrf.mxu0
      %v689 = vpop.f32.mrf.mxu0
      %v690 = vadd.f32 %v447, %v689
      %v691 = vpop.f32.mrf.mxu0
      %692 = vmatprep.mubr.bf16.mxu0 0
      %693 = vmatmul.mubr.bf16.gmra.mxu0 %v569
      %v694 = vpop.f32.mrf.mxu0
      %v695 = vadd.f32 %v447, %v694
      %v696 = vpop.f32.mrf.mxu0
      %v697 = vpop.f32.mrf.mxu0
      %v698 = vadd.f32 %v447, %v697
      %v699 = vpop.f32.mrf.mxu0
      %700 = vmatprep.mubr.bf16.mxu0 0
      %701 = vmatmul.mubr.bf16.gmra.mxu0 %v572
      %v702 = vpop.f32.mrf.mxu0
      %v703 = vadd.f32 %v447, %v702
      %v704 = vpop.f32.mrf.mxu0
      %v705 = vpop.f32.mrf.mxu0
      %v706 = vadd.f32 %v447, %v705
      %v707 = vpop.f32.mrf.mxu0
      %708 = vmatprep.mubr.bf16.mxu0 0
      %709 = vmatmul.mubr.bf16.gmra.mxu0 %v575
      %v710 = vpop.f32.mrf.mxu0
      %v711 = vadd.f32 %v447, %v710
      %v712 = vpop.f32.mrf.mxu0
      %v713 = vpop.f32.mrf.mxu0
      %v714 = vadd.f32 %v447, %v713
      %v715 = vpop.f32.mrf.mxu0
      %716 = vmatprep.mubr.bf16.mxu0 0
      %717 = vmatmul.mubr.bf16.gmra.mxu0 %v578
      %v718 = vpop.f32.mrf.mxu0
      %v719 = vadd.f32 %v447, %v718
      %v720 = vpop.f32.mrf.mxu0
      %v721 = vpop.f32.mrf.mxu0
      %v722 = vadd.f32 %v447, %v721
      %v723 = vpop.f32.mrf.mxu0
      %724 = vmatprep.mubr.bf16.mxu0 0
      %725 = vmatmul.mubr.bf16.gmra.mxu0 %v581
      %v726 = vpop.f32.mrf.mxu0
      %v727 = vadd.f32 %v447, %v726
      %v728 = vpop.f32.mrf.mxu0
      %v729 = vpop.f32.mrf.mxu0
      %v730 = vadd.f32 %v447, %v729
      %v731 = vpop.f32.mrf.mxu0
      %732 = vmatprep.mubr.bf16.mxu0 0
      %733 = vmatmul.mubr.bf16.gmra.mxu0 %v584
      %v734 = vpop.f32.mrf.mxu0
      %v735 = vadd.f32 %v447, %v734
      %v736 = vpop.f32.mrf.mxu0
      %v737 = vpop.f32.mrf.mxu0
      %v738 = vadd.f32 %v447, %v737
      %v739 = vpop.f32.mrf.mxu0
      %740 = vmatprep.mubr.bf16.mxu0 0
      %741 = vmatmul.mubr.bf16.gmra.mxu0 %v587
      %v742 = vpop.f32.mrf.mxu0
      %v743 = vadd.f32 %v447, %v742
      %v744 = vpop.f32.mrf.mxu0
      %v745 = vpop.f32.mrf.mxu0
      %v746 = vadd.f32 %v447, %v745
      %v747 = vpop.f32.mrf.mxu0
      %748 = vmatprep.mubr.bf16.mxu0 0
      %749 = vmatmul.mubr.bf16.gmra.mxu0 %v590
      %v750 = vpop.f32.mrf.mxu0
      %v751 = vadd.f32 %v447, %v750
      %v752 = vpop.f32.mrf.mxu0
      %v753 = vpop.f32.mrf.mxu0
      %v754 = vadd.f32 %v447, %v753
      %v755 = vpop.f32.mrf.mxu0
      %756 = vmatprep.mubr.bf16.mxu0 0
      %757 = vmatmul.mubr.bf16.gmra.mxu0 %v593
      %v758 = vpop.f32.mrf.mxu0
      %v759 = vadd.f32 %v447, %v758
      %v760 = vpop.f32.mrf.mxu0
      %v761 = vpop.f32.mrf.mxu0
      %v762 = vadd.f32 %v447, %v761
      %v763 = vpop.f32.mrf.mxu0
      %764 = vmatprep.mubr.bf16.mxu0 0
      %765 = vmatmul.mubr.bf16.gmra.mxu0 %v596
      %v766 = vpop.f32.mrf.mxu0
      %v767 = vadd.f32 %v447, %v766
      %v768 = vpop.f32.mrf.mxu0
      %v769 = vpop.f32.mrf.mxu0
      %v770 = vadd.f32 %v447, %v769
      %v771 = vpop.f32.mrf.mxu0
      %772 = vmatprep.mubr.bf16.mxu0 0
      %773 = vmatmul.mubr.bf16.gmra.mxu0 %v599
      %v774 = vpop.f32.mrf.mxu0
      %v775 = vadd.f32 %v447, %v774
      %v776 = vpop.f32.mrf.mxu0
      %v777 = vpop.f32.mrf.mxu0
      %v778 = vadd.f32 %v447, %v777
      %v779 = vpop.f32.mrf.mxu0
      %780 = vmatprep.mubr.bf16.mxu0 0
      %781 = vmatmul.mubr.bf16.gmra.mxu0 %v602
      %v782 = vpop.f32.mrf.mxu0
      %v783 = vadd.f32 %v447, %v782
      %v784 = vpop.f32.mrf.mxu0
      %v785 = vpop.f32.mrf.mxu0
      %v786 = vadd.f32 %v447, %v785
      %v787 = vpop.f32.mrf.mxu0
      %788 = vmatprep.mubr.bf16.mxu0 0
      %789 = vmatmul.mubr.bf16.gmra.mxu0 %v605
      %v790 = vpop.f32.mrf.mxu0
      %v791 = vadd.f32 %v447, %v790
      %v792 = vpop.f32.mrf.mxu0
      %v793 = vpop.f32.mrf.mxu0
      %v794 = vadd.f32 %v447, %v793
      %v795 = vpop.f32.mrf.mxu0
      %796 = vmatprep.mubr.bf16.mxu0 0
      %797 = vmatmul.mubr.bf16.gmra.mxu0 %v608
      %v798 = vpop.f32.mrf.mxu0
      %v799 = vadd.f32 %v447, %v798
      %v800 = vpop.f32.mrf.mxu0
      %v801 = vpop.f32.mrf.mxu0
      %v802 = vadd.f32 %v447, %v801
      %v803 = vpop.f32.mrf.mxu0
      %804 = vmatprep.mubr.bf16.mxu0 0
      %805 = vmatmul.mubr.bf16.gmra.mxu0 %v611
      %v806 = vpop.f32.mrf.mxu0
      %v807 = vadd.f32 %v447, %v806
      %v808 = vpop.f32.mrf.mxu0
      %v809 = vpop.f32.mrf.mxu0
      %v810 = vadd.f32 %v447, %v809
      %v811 = vpop.f32.mrf.mxu0
      %812 = vmatprep.mubr.bf16.mxu0 0
      %813 = vmatmul.mubr.bf16.gmra.mxu0 %v614
      %v814 = vpop.f32.mrf.mxu0
      %v815 = vadd.f32 %v447, %v814
      %v816 = vpop.f32.mrf.mxu0
      %v817 = vpop.f32.mrf.mxu0
      %v818 = vpop.f32.mrf.mxu0
      %819 = vdwg.mxu0
      %v820 = vmax.f32 %v655, 0.0
      %v821 = vmax.f32 %v658, 0.0
      %v822 = vmax.f32 %v663, 0.0
      %v823 = vmax.f32 %v666, 0.0
      %v824 = vmax.f32 %v671, 0.0
      %v825 = vmax.f32 %v674, 0.0
      %v826 = vmax.f32 %v679, 0.0
      %v827 = vmax.f32 %v682, 0.0
      %v828 = vmax.f32 %v687, 0.0
      %v829 = vmax.f32 %v690, 0.0
      %v830 = vmax.f32 %v695, 0.0
      %v831 = vmax.f32 %v698, 0.0
      %v832 = vmax.f32 %v703, 0.0
      %v833 = vmax.f32 %v706, 0.0
      %v834 = vmax.f32 %v711, 0.0
      %v835 = vmax.f32 %v714, 0.0
      %v836 = vmax.f32 %v719, 0.0
      %v837 = vmax.f32 %v722, 0.0
      %v838 = vmax.f32 %v727, 0.0
      %v839 = vmax.f32 %v730, 0.0
      %v840 = vmax.f32 %v735, 0.0
      %v841 = vmax.f32 %v738, 0.0
      %v842 = vmax.f32 %v743, 0.0
      %v843 = vmax.f32 %v746, 0.0
      %v844 = vmax.f32 %v751, 0.0
      %v845 = vmax.f32 %v754, 0.0
      %v846 = vmax.f32 %v759, 0.0
      %v847 = vmax.f32 %v762, 0.0
      %v848 = vmax.f32 %v767, 0.0
      %v849 = vmax.f32 %v770, 0.0
      %v850 = vmax.f32 %v775, 0.0
      %v851 = vmax.f32 %v778, 0.0
      %v852 = vmax.f32 %v783, 0.0
      %v853 = vmax.f32 %v786, 0.0
      %v854 = vmax.f32 %v791, 0.0
      %v855 = vmax.f32 %v794, 0.0
      %v856 = vmax.f32 %v799, 0.0
      %v857 = vmax.f32 %v802, 0.0
      %v858 = vmax.f32 %v807, 0.0
      %v859 = vmax.f32 %v810, 0.0
      %v860 = vmax.f32 %v815, 0.0
      %v861 = vld [vmem:[%s5] sm:$0xff]
      %v862 = vld [vmem:[%s5 + $0x8] sm:$0xff]
      %v863 = vld [vmem:[%s5 + $0x10] sm:$0xff]
      %v864 = vld [vmem:[%s5 + $0x18] sm:$0xff]
      %v865 = vld [vmem:[%s5 + $0x20] sm:$0xff]
      %v866 = vld [vmem:[%s5 + $0x28] sm:$0xff]
      %v867 = vld [vmem:[%s5 + $0x30] sm:$0xff]
      %v868 = vld [vmem:[%s5 + $0x38] sm:$0xff]
      %v869 = vld [vmem:[%s5 + $0x40] sm:$0xff]
      %v870 = vld [vmem:[%s5 + $0x48] sm:$0xff]
      %v871 = vld [vmem:[%s5 + $0x50] sm:$0xff]
      %v872 = vld [vmem:[%s5 + $0x58] sm:$0xff]
      %v873 = vld [vmem:[%s5 + $0x60] sm:$0xff]
      %v874 = vld [vmem:[%s5 + $0x68] sm:$0xff]
      %v875 = vld [vmem:[%s5 + $0x70] sm:$0xff]
      %v876 = vld [vmem:[%s5 + $0x78] sm:$0xff]
      %v877 = vld [vmem:[%s5 + $0x80] sm:$0xff]
      %v878 = vld [vmem:[%s5 + $0x88] sm:$0xff]
      %v879 = vld [vmem:[%s5 + $0x90] sm:$0xff]
      %v880 = vld [vmem:[%s5 + $0x98] sm:$0xff]
      %v881 = vld [vmem:[%s5 + $0xa0] sm:$0xff]
      %v882 = vld [vmem:[%s5 + $0xa8] sm:$0xff]
      %v883 = vld [vmem:[%s5 + $0xb0] sm:$0xff]
      %v884 = vld [vmem:[%s5 + $0xb8] sm:$0xff]
      %v885 = vld [vmem:[%s5 + $0xc0] sm:$0xff]
      %v886 = vld [vmem:[%s5 + $0xc8] sm:$0xff]
      %v887 = vld [vmem:[%s5 + $0xd0] sm:$0xff]
      %v888 = vld [vmem:[%s5 + $0xd8] sm:$0xff]
      %v889 = vld [vmem:[%s5 + $0xe0] sm:$0xff]
      %v890 = vld [vmem:[%s5 + $0xe8] sm:$0xff]
      %v891 = vld [vmem:[%s5 + $0xf0] sm:$0xff]
      %v892 = vld [vmem:[%s5 + $0xf8] sm:$0xff]
      %v893 = vld [vmem:[%s5 + $0x100] sm:$0xff]
      %v894 = vld [vmem:[%s5 + $0x108] sm:$0xff]
      %v895 = vld [vmem:[%s5 + $0x110] sm:$0xff]
      %v896 = vld [vmem:[%s5 + $0x118] sm:$0xff]
      %v897 = vld [vmem:[%s5 + $0x120] sm:$0xff]
      %v898 = vld [vmem:[%s5 + $0x128] sm:$0xff]
      %v899 = vld [vmem:[%s5 + $0x130] sm:$0xff]
      %v900 = vld [vmem:[%s5 + $0x138] sm:$0xff]
      %v901 = vld [vmem:[%s5 + $0x140] sm:$0xf]
      %903 = vset.pattern.permute.xlu0 0
      %904 = vperm.xlu0 %903, %v861
      %v905 = vpop.permute.xlu0 %904
      %908 = vset.pattern.permute.xlu0 0
      %909 = vperm.xlu0 %908, %v862
      %v910 = vpop.permute.xlu0 %909
      %913 = vset.pattern.permute.xlu0 0
      %914 = vperm.xlu0 %913, %v863
      %v915 = vpop.permute.xlu0 %914
      %918 = vset.pattern.permute.xlu0 0
      %919 = vperm.xlu0 %918, %v864
      %v920 = vpop.permute.xlu0 %919
      %923 = vset.pattern.permute.xlu0 0
      %924 = vperm.xlu0 %923, %v865
      %v925 = vpop.permute.xlu0 %924
      %928 = vset.pattern.permute.xlu0 0
      %929 = vperm.xlu0 %928, %v866
      %v930 = vpop.permute.xlu0 %929
      %933 = vset.pattern.permute.xlu0 0
      %934 = vperm.xlu0 %933, %v867
      %v935 = vpop.permute.xlu0 %934
      %938 = vset.pattern.permute.xlu0 0
      %939 = vperm.xlu0 %938, %v868
      %v940 = vpop.permute.xlu0 %939
      %943 = vset.pattern.permute.xlu0 0
      %944 = vperm.xlu0 %943, %v869
      %v945 = vpop.permute.xlu0 %944
      %948 = vset.pattern.permute.xlu0 0
      %949 = vperm.xlu0 %948, %v870
      %v950 = vpop.permute.xlu0 %949
      %953 = vset.pattern.permute.xlu0 0
      %954 = vperm.xlu0 %953, %v871
      %v955 = vpop.permute.xlu0 %954
      %958 = vset.pattern.permute.xlu0 0
      %959 = vperm.xlu0 %958, %v872
      %v960 = vpop.permute.xlu0 %959
      %963 = vset.pattern.permute.xlu0 0
      %964 = vperm.xlu0 %963, %v873
      %v965 = vpop.permute.xlu0 %964
      %968 = vset.pattern.permute.xlu0 0
      %969 = vperm.xlu0 %968, %v874
      %v970 = vpop.permute.xlu0 %969
      %973 = vset.pattern.permute.xlu0 0
      %974 = vperm.xlu0 %973, %v875
      %v975 = vpop.permute.xlu0 %974
      %978 = vset.pattern.permute.xlu0 0
      %979 = vperm.xlu0 %978, %v876
      %v980 = vpop.permute.xlu0 %979
      %983 = vset.pattern.permute.xlu0 0
      %984 = vperm.xlu0 %983, %v877
      %v985 = vpop.permute.xlu0 %984
      %988 = vset.pattern.permute.xlu0 0
      %989 = vperm.xlu0 %988, %v878
      %v990 = vpop.permute.xlu0 %989
      %993 = vset.pattern.permute.xlu0 0
      %994 = vperm.xlu0 %993, %v879
      %v995 = vpop.permute.xlu0 %994
      %998 = vset.pattern.permute.xlu0 0
      %999 = vperm.xlu0 %998, %v880
      %v1000 = vpop.permute.xlu0 %999
      %1003 = vset.pattern.permute.xlu0 0
      %1004 = vperm.xlu0 %1003, %v881
      %v1005 = vpop.permute.xlu0 %1004
      %1008 = vset.pattern.permute.xlu0 0
      %1009 = vperm.xlu0 %1008, %v882
      %v1010 = vpop.permute.xlu0 %1009
      %1013 = vset.pattern.permute.xlu0 0
      %1014 = vperm.xlu0 %1013, %v883
      %v1015 = vpop.permute.xlu0 %1014
      %1018 = vset.pattern.permute.xlu0 0
      %1019 = vperm.xlu0 %1018, %v884
      %v1020 = vpop.permute.xlu0 %1019
      %1023 = vset.pattern.permute.xlu0 0
      %1024 = vperm.xlu0 %1023, %v885
      %v1025 = vpop.permute.xlu0 %1024
      %1028 = vset.pattern.permute.xlu0 0
      %1029 = vperm.xlu0 %1028, %v886
      %v1030 = vpop.permute.xlu0 %1029
      %1033 = vset.pattern.permute.xlu0 0
      %1034 = vperm.xlu0 %1033, %v887
      %v1035 = vpop.permute.xlu0 %1034
      %1038 = vset.pattern.permute.xlu0 0
      %1039 = vperm.xlu0 %1038, %v888
      %v1040 = vpop.permute.xlu0 %1039
      %1043 = vset.pattern.permute.xlu0 0
      %1044 = vperm.xlu0 %1043, %v889
      %v1045 = vpop.permute.xlu0 %1044
      %1048 = vset.pattern.permute.xlu0 0
      %1049 = vperm.xlu0 %1048, %v890
      %v1050 = vpop.permute.xlu0 %1049
      %1053 = vset.pattern.permute.xlu0 0
      %1054 = vperm.xlu0 %1053, %v891
      %v1055 = vpop.permute.xlu0 %1054
      %1058 = vset.pattern.permute.xlu0 0
      %1059 = vperm.xlu0 %1058, %v892
      %v1060 = vpop.permute.xlu0 %1059
      %1063 = vset.pattern.permute.xlu0 0
      %1064 = vperm.xlu0 %1063, %v893
      %v1065 = vpop.permute.xlu0 %1064
      %1068 = vset.pattern.permute.xlu0 0
      %1069 = vperm.xlu0 %1068, %v894
      %v1070 = vpop.permute.xlu0 %1069
      %1073 = vset.pattern.permute.xlu0 0
      %1074 = vperm.xlu0 %1073, %v895
      %v1075 = vpop.permute.xlu0 %1074
      %1078 = vset.pattern.permute.xlu0 0
      %1079 = vperm.xlu0 %1078, %v896
      %v1080 = vpop.permute.xlu0 %1079
      %1083 = vset.pattern.permute.xlu0 0
      %1084 = vperm.xlu0 %1083, %v897
      %v1085 = vpop.permute.xlu0 %1084
      %1088 = vset.pattern.permute.xlu0 0
      %1089 = vperm.xlu0 %1088, %v898
      %v1090 = vpop.permute.xlu0 %1089
      %1093 = vset.pattern.permute.xlu0 0
      %1094 = vperm.xlu0 %1093, %v899
      %v1095 = vpop.permute.xlu0 %1094
      %1098 = vset.pattern.permute.xlu0 0
      %1099 = vperm.xlu0 %1098, %v900
      %v1100 = vpop.permute.xlu0 %1099
      %1103 = vset.pattern.permute.xlu0 0
      %1104 = vperm.xlu0 %1103, %v901
      %v1105 = vpop.permute.xlu0 %1104
      %v1107 = vmul.f32 %v820, %v905
      %v1108 = vmul.f32 %v821, %v910
      %v1109 = vmul.f32 %v822, %v915
      %v1110 = vmul.f32 %v823, %v920
      %v1111 = vmul.f32 %v824, %v925
      %v1112 = vmul.f32 %v825, %v930
      %v1113 = vmul.f32 %v826, %v935
      %v1114 = vmul.f32 %v827, %v940
      %v1115 = vmul.f32 %v828, %v945
      %v1116 = vmul.f32 %v829, %v950
      %v1117 = vmul.f32 %v830, %v955
      %v1118 = vmul.f32 %v831, %v960
      %v1119 = vmul.f32 %v832, %v965
      %v1120 = vmul.f32 %v833, %v970
      %v1121 = vmul.f32 %v834, %v975
      %v1122 = vmul.f32 %v835, %v980
      %v1123 = vmul.f32 %v836, %v985
      %v1124 = vmul.f32 %v837, %v990
      %v1125 = vmul.f32 %v838, %v995
      %v1126 = vmul.f32 %v839, %v1000
      %v1127 = vmul.f32 %v840, %v1005
      %v1128 = vmul.f32 %v841, %v1010
      %v1129 = vmul.f32 %v842, %v1015
      %v1130 = vmul.f32 %v843, %v1020
      %v1131 = vmul.f32 %v844, %v1025
      %v1132 = vmul.f32 %v845, %v1030
      %v1133 = vmul.f32 %v846, %v1035
      %v1134 = vmul.f32 %v847, %v1040
      %v1135 = vmul.f32 %v848, %v1045
      %v1136 = vmul.f32 %v849, %v1050
      %v1137 = vmul.f32 %v850, %v1055
      %v1138 = vmul.f32 %v851, %v1060
      %v1139 = vmul.f32 %v852, %v1065
      %v1140 = vmul.f32 %v853, %v1070
      %v1141 = vmul.f32 %v854, %v1075
      %v1142 = vmul.f32 %v855, %v1080
      %v1143 = vmul.f32 %v856, %v1085
      %v1144 = vmul.f32 %v857, %v1090
      %v1145 = vmul.f32 %v858, %v1095
      %v1146 = vmul.f32 %v859, %v1100
      %v1147 = vmul.f32 %v860, %v1105
      %1148 = vst.msk [vmem:[#allocation2 + $0x18] sm:$0xff] %vm351, %v1107
      %1149 = vst.msk [vmem:[#allocation2 + $0x20] sm:$0xff] %vm351, %v1108
      %1150 = vst.msk [vmem:[#allocation2 + $0x28] sm:$0xff] %vm351, %v1109
      %1151 = vst.msk [vmem:[#allocation2 + $0x30] sm:$0xff] %vm351, %v1110
      %1152 = vst.msk [vmem:[#allocation2 + $0x38] sm:$0xff] %vm351, %v1111
      %1153 = vst.msk [vmem:[#allocation2 + $0x40] sm:$0xff] %vm351, %v1112
      %1154 = vst.msk [vmem:[#allocation2 + $0x48] sm:$0xff] %vm351, %v1113
      %1155 = vst.msk [vmem:[#allocation2 + $0x50] sm:$0xff] %vm351, %v1114
      %1156 = vst.msk [vmem:[#allocation2 + $0x58] sm:$0xff] %vm351, %v1115
      %1157 = vst.msk [vmem:[#allocation2 + $0x60] sm:$0xff] %vm351, %v1116
      %1158 = vst.msk [vmem:[#allocation2 + $0x68] sm:$0xff] %vm351, %v1117
      %1159 = vst.msk [vmem:[#allocation2 + $0x70] sm:$0xff] %vm351, %v1118
      %1160 = vst.msk [vmem:[#allocation2 + $0x78] sm:$0xff] %vm351, %v1119
      %1161 = vst.msk [vmem:[#allocation2 + $0x80] sm:$0xff] %vm351, %v1120
      %1162 = vst.msk [vmem:[#allocation2 + $0x88] sm:$0xff] %vm351, %v1121
      %1163 = vst.msk [vmem:[#allocation2 + $0x90] sm:$0xff] %vm351, %v1122
      %1164 = vst.msk [vmem:[#allocation2 + $0x98] sm:$0xff] %vm351, %v1123
      %1165 = vst.msk [vmem:[#allocation2 + $0xa0] sm:$0xff] %vm351, %v1124
      %1166 = vst.msk [vmem:[#allocation2 + $0xa8] sm:$0xff] %vm351, %v1125
      %1167 = vst.msk [vmem:[#allocation2 + $0xb0] sm:$0xff] %vm351, %v1126
      %1168 = vst.msk [vmem:[#allocation2 + $0xb8] sm:$0xff] %vm351, %v1127
      %1169 = vst.msk [vmem:[#allocation2 + $0xc0] sm:$0xff] %vm351, %v1128
      %1170 = vst.msk [vmem:[#allocation2 + $0xc8] sm:$0xff] %vm351, %v1129
      %1171 = vst.msk [vmem:[#allocation2 + $0xd0] sm:$0xff] %vm351, %v1130
      %1172 = vst.msk [vmem:[#allocation2 + $0xd8] sm:$0xff] %vm351, %v1131
      %1173 = vst.msk [vmem:[#allocation2 + $0xe0] sm:$0xff] %vm351, %v1132
      %1174 = vst.msk [vmem:[#allocation2 + $0xe8] sm:$0xff] %vm351, %v1133
      %1175 = vst.msk [vmem:[#allocation2 + $0xf0] sm:$0xff] %vm351, %v1134
      %1176 = vst.msk [vmem:[#allocation2 + $0xf8] sm:$0xff] %vm351, %v1135
      %1177 = vst.msk [vmem:[#allocation2 + $0x100] sm:$0xff] %vm351, %v1136
      %1178 = vst.msk [vmem:[#allocation2 + $0x108] sm:$0xff] %vm351, %v1137
      %1179 = vst.msk [vmem:[#allocation2 + $0x110] sm:$0xff] %vm351, %v1138
      %1180 = vst.msk [vmem:[#allocation2 + $0x118] sm:$0xff] %vm351, %v1139
      %1181 = vst.msk [vmem:[#allocation2 + $0x120] sm:$0xff] %vm351, %v1140
      %1182 = vst.msk [vmem:[#allocation2 + $0x128] sm:$0xff] %vm351, %v1141
      %1183 = vst.msk [vmem:[#allocation2 + $0x130] sm:$0xff] %vm351, %v1142
      %1184 = vst.msk [vmem:[#allocation2 + $0x138] sm:$0xff] %vm351, %v1143
      %1185 = vst.msk [vmem:[#allocation2 + $0x140] sm:$0xff] %vm351, %v1144
      %1186 = vst.msk [vmem:[#allocation2 + $0x148] sm:$0xff] %vm351, %v1145
      %1187 = vst.msk [vmem:[#allocation2 + $0x150] sm:$0xff] %vm351, %v1146
      %1188 = vst.msk [vmem:[#allocation2 + $0x158] sm:$0xf] %vm398, %v1147
      %v1189 = vld [vmem:[#allocation2 + $0x5] sm:$0xff]
      %v1190 = vld [vmem:[#allocation2 + $0xd] sm:$0xff]
      %v1191 = vld [vmem:[#allocation2 + $0x15] sm:$0xff]
      %v1192 = vld [vmem:[#allocation2 + $0x1d] sm:$0xff]
      %v1193 = vld [vmem:[#allocation2 + $0x25] sm:$0xff]
      %v1194 = vld [vmem:[#allocation2 + $0x2d] sm:$0xff]
      %v1195 = vld [vmem:[#allocation2 + $0x35] sm:$0xff]
      %v1196 = vld [vmem:[#allocation2 + $0x3d] sm:$0xff]
      %v1197 = vld [vmem:[#allocation2 + $0x45] sm:$0xff]
      %v1198 = vld [vmem:[#allocation2 + $0x4d] sm:$0xff]
      %v1199 = vld [vmem:[#allocation2 + $0x55] sm:$0xff]
      %v1200 = vld [vmem:[#allocation2 + $0x5d] sm:$0xff]
      %v1201 = vld [vmem:[#allocation2 + $0x65] sm:$0xff]
      %v1202 = vld [vmem:[#allocation2 + $0x6d] sm:$0xff]
      %v1203 = vld [vmem:[#allocation2 + $0x75] sm:$0xff]
      %v1204 = vld [vmem:[#allocation2 + $0x7d] sm:$0xff]
      %v1205 = vld [vmem:[#allocation2 + $0x85] sm:$0xff]
      %v1206 = vld [vmem:[#allocation2 + $0x8d] sm:$0xff]
      %v1207 = vld [vmem:[#allocation2 + $0x95] sm:$0xff]
      %v1208 = vld [vmem:[#allocation2 + $0x9d] sm:$0xff]
      %v1209 = vld [vmem:[#allocation2 + $0xa5] sm:$0xff]
      %v1210 = vld [vmem:[#allocation2 + $0xad] sm:$0xff]
      %v1211 = vld [vmem:[#allocation2 + $0xb5] sm:$0xff]
      %v1212 = vld [vmem:[#allocation2 + $0xbd] sm:$0xff]
      %v1213 = vld [vmem:[#allocation2 + $0xc5] sm:$0xff]
      %v1214 = vld [vmem:[#allocation2 + $0xcd] sm:$0xff]
      %v1215 = vld [vmem:[#allocation2 + $0xd5] sm:$0xff]
      %v1216 = vld [vmem:[#allocation2 + $0xdd] sm:$0xff]
      %v1217 = vld [vmem:[#allocation2 + $0xe5] sm:$0xff]
      %v1218 = vld [vmem:[#allocation2 + $0xed] sm:$0xff]
      %v1219 = vld [vmem:[#allocation2 + $0xf5] sm:$0xff]
      %v1220 = vld [vmem:[#allocation2 + $0xfd] sm:$0xff]
      %v1221 = vld [vmem:[#allocation2 + $0x105] sm:$0xff]
      %v1222 = vld [vmem:[#allocation2 + $0x10d] sm:$0xff]
      %v1223 = vld [vmem:[#allocation2 + $0x115] sm:$0xff]
      %v1224 = vld [vmem:[#allocation2 + $0x11d] sm:$0xff]
      %v1225 = vld [vmem:[#allocation2 + $0x125] sm:$0xff]
      %v1226 = vld [vmem:[#allocation2 + $0x12d] sm:$0xff]
      %v1227 = vld [vmem:[#allocation2 + $0x135] sm:$0xff]
      %v1228 = vld [vmem:[#allocation2 + $0x13d] sm:$0xff]
      %v1229 = vld [vmem:[#allocation2 + $0x145] sm:$0xf]
      %v1230 = vld [vmem:[%s337] sm:$0x1]
      %v1231 = vunpack.c.l.bf16 %v1230
      %v1232 = vld [vmem:[#allocation2 + $0x6] sm:$0xff]
      %v1233 = vld [vmem:[#allocation2 + $0xe] sm:$0xff]
      %v1234 = vld [vmem:[#allocation2 + $0x16] sm:$0xff]
      %v1235 = vld [vmem:[#allocation2 + $0x1e] sm:$0xff]
      %v1236 = vld [vmem:[#allocation2 + $0x26] sm:$0xff]
      %v1237 = vld [vmem:[#allocation2 + $0x2e] sm:$0xff]
      %v1238 = vld [vmem:[#allocation2 + $0x36] sm:$0xff]
      %v1239 = vld [vmem:[#allocation2 + $0x3e] sm:$0xff]
      %v1240 = vld [vmem:[#allocation2 + $0x46] sm:$0xff]
      %v1241 = vld [vmem:[#allocation2 + $0x4e] sm:$0xff]
      %v1242 = vld [vmem:[#allocation2 + $0x56] sm:$0xff]
      %v1243 = vld [vmem:[#allocation2 + $0x5e] sm:$0xff]
      %v1244 = vld [vmem:[#allocation2 + $0x66] sm:$0xff]
      %v1245 = vld [vmem:[#allocation2 + $0x6e] sm:$0xff]
      %v1246 = vld [vmem:[#allocation2 + $0x76] sm:$0xff]
      %v1247 = vld [vmem:[#allocation2 + $0x7e] sm:$0xff]
      %v1248 = vld [vmem:[#allocation2 + $0x86] sm:$0xff]
      %v1249 = vld [vmem:[#allocation2 + $0x8e] sm:$0xff]
      %v1250 = vld [vmem:[#allocation2 + $0x96] sm:$0xff]
      %v1251 = vld [vmem:[#allocation2 + $0x9e] sm:$0xff]
      %v1252 = vld [vmem:[#allocation2 + $0xa6] sm:$0xff]
      %v1253 = vld [vmem:[#allocation2 + $0xae] sm:$0xff]
      %v1254 = vld [vmem:[#allocation2 + $0xb6] sm:$0xff]
      %v1255 = vld [vmem:[#allocation2 + $0xbe] sm:$0xff]
      %v1256 = vld [vmem:[#allocation2 + $0xc6] sm:$0xff]
      %v1257 = vld [vmem:[#allocation2 + $0xce] sm:$0xff]
      %v1258 = vld [vmem:[#allocation2 + $0xd6] sm:$0xff]
      %v1259 = vld [vmem:[#allocation2 + $0xde] sm:$0xff]
      %v1260 = vld [vmem:[#allocation2 + $0xe6] sm:$0xff]
      %v1261 = vld [vmem:[#allocation2 + $0xee] sm:$0xff]
      %v1262 = vld [vmem:[#allocation2 + $0xf6] sm:$0xff]
      %v1263 = vld [vmem:[#allocation2 + $0xfe] sm:$0xff]
      %v1264 = vld [vmem:[#allocation2 + $0x106] sm:$0xff]
      %v1265 = vld [vmem:[#allocation2 + $0x10e] sm:$0xff]
      %v1266 = vld [vmem:[#allocation2 + $0x116] sm:$0xff]
      %v1267 = vld [vmem:[#allocation2 + $0x11e] sm:$0xff]
      %v1268 = vld [vmem:[#allocation2 + $0x126] sm:$0xff]
      %v1269 = vld [vmem:[#allocation2 + $0x12e] sm:$0xff]
      %v1270 = vld [vmem:[#allocation2 + $0x136] sm:$0xff]
      %v1271 = vld [vmem:[#allocation2 + $0x13e] sm:$0xff]
      %v1272 = vld [vmem:[#allocation2 + $0x146] sm:$0xf]
      %s1273 = scalar_lea.vmem %s337, 1
      %v1274 = vld [vmem:[%s1273] sm:$0x1]
      %v1275 = vunpack.c.l.bf16 %v1274
      %v1277 = vsel %vm351, %v1232, 0
      %v1280 = vsel %vm351, %v1233, 0
      %v1283 = vsel %vm351, %v1234, 0
      %v1286 = vsel %vm351, %v1235, 0
      %v1289 = vsel %vm351, %v1236, 0
      %v1292 = vsel %vm351, %v1237, 0
      %v1295 = vsel %vm351, %v1238, 0
      %v1298 = vsel %vm351, %v1239, 0
      %v1301 = vsel %vm351, %v1240, 0
      %v1304 = vsel %vm351, %v1241, 0
      %v1307 = vsel %vm351, %v1242, 0
      %v1310 = vsel %vm351, %v1243, 0
      %v1313 = vsel %vm351, %v1244, 0
      %v1316 = vsel %vm351, %v1245, 0
      %v1319 = vsel %vm351, %v1246, 0
      %v1322 = vsel %vm351, %v1247, 0
      %v1325 = vsel %vm351, %v1248, 0
      %v1328 = vsel %vm351, %v1249, 0
      %v1331 = vsel %vm351, %v1250, 0
      %v1334 = vsel %vm351, %v1251, 0
      %v1337 = vsel %vm351, %v1252, 0
      %v1340 = vsel %vm351, %v1253, 0
      %v1343 = vsel %vm351, %v1254, 0
      %v1346 = vsel %vm351, %v1255, 0
      %v1349 = vsel %vm351, %v1256, 0
      %v1352 = vsel %vm351, %v1257, 0
      %v1355 = vsel %vm351, %v1258, 0
      %v1358 = vsel %vm351, %v1259, 0
      %v1361 = vsel %vm351, %v1260, 0
      %v1364 = vsel %vm351, %v1261, 0
      %v1367 = vsel %vm351, %v1262, 0
      %v1370 = vsel %vm351, %v1263, 0
      %v1373 = vsel %vm351, %v1264, 0
      %v1376 = vsel %vm351, %v1265, 0
      %v1379 = vsel %vm351, %v1266, 0
      %v1382 = vsel %vm351, %v1267, 0
      %v1385 = vsel %vm351, %v1268, 0
      %v1388 = vsel %vm351, %v1269, 0
      %v1391 = vsel %vm351, %v1270, 0
      %v1394 = vsel %vm351, %v1271, 0
      %v1397 = vsel %vm351, %v1272, 0
      %v1400 = vsel %vm616, %v1275, 0
      %1402 = vmatprep.subr.mxu0 0.0
      %1403 = vmatpush1.msra.mxu0 0.0
      %1404 = vmatprep.subr.mxu0 0.0
      %1405 = vmatpush1.msra.mxu0 0.0
      %1406 = vmatprep.subr.mxu0 0.0
      %1407 = vmatpush1.msra.mxu0 0.0
      %1408 = vmatprep.subr.mxu0 0.0
      %1409 = vmatpush1.msra.mxu0 0.0
      %1410 = vmatprep.subr.mxu0 0.0
      %1411 = vmatpush1.msra.mxu0 0.0
      %1412 = vmatprep.subr.mxu0 0.0
      %1413 = vmatpush1.msra.mxu0 0.0
      %1414 = vmatprep.subr.mxu0 0.0
      %1415 = vmatpush1.msra.mxu0 0.0
      %1416 = vmatprep.subr.mxu0 0.0
      %1417 = vmatpush1.msra.mxu0 0.0
      %1418 = vmatprep.subr.mxu0 0.0
      %1419 = vmatpush1.msra.mxu0 0.0
      %1420 = vmatprep.subr.mxu0 0.0
      %1421 = vmatpush1.msra.mxu0 0.0
      %1422 = vmatprep.subr.mxu0 0.0
      %1423 = vmatpush1.msra.mxu0 0.0
      %1424 = vmatprep.subr.mxu0 0.0
      %1425 = vmatpush1.msra.mxu0 0.0
      %1426 = vmatprep.subr.mxu0 0.0
      %1427 = vmatpush1.msra.mxu0 0.0
      %1428 = vmatprep.subr.mxu0 0.0
      %1429 = vmatpush1.msra.mxu0 0.0
      %1430 = vmatprep.subr.mxu0 0.0
      %1431 = vmatpush1.msra.mxu0 0.0
      %1432 = vmatprep.subr.mxu0 0.0
      %1433 = vmatpush1.msra.mxu0 %v1400
      %1434 = vmatprep.subr.mxu0 0.0
      %1435 = vmatpush2.msra.mxu0 0.0
      %1436 = vmatprep.subr.mxu0 0.0
      %1437 = vmatpush2.msra.mxu0 0.0
      %1438 = vmatprep.subr.mxu0 0.0
      %1439 = vmatpush2.msra.mxu0 0.0
      %1440 = vmatprep.subr.mxu0 0.0
      %1441 = vmatpush2.msra.mxu0 0.0
      %1442 = vmatprep.subr.mxu0 0.0
      %1443 = vmatpush2.msra.mxu0 0.0
      %1444 = vmatprep.subr.mxu0 0.0
      %1445 = vmatpush2.msra.mxu0 0.0
      %1446 = vmatprep.subr.mxu0 0.0
      %1447 = vmatpush2.msra.mxu0 0.0
      %1448 = vmatprep.subr.mxu0 0.0
      %1449 = vmatpush2.msra.mxu0 0.0
      %1450 = vmatprep.subr.mxu0 0.0
      %1451 = vmatpush2.msra.mxu0 0.0
      %1452 = vmatprep.subr.mxu0 0.0
      %1453 = vmatpush2.msra.mxu0 0.0
      %1454 = vmatprep.subr.mxu0 0.0
      %1455 = vmatpush2.msra.mxu0 0.0
      %1456 = vmatprep.subr.mxu0 0.0
      %1457 = vmatpush2.msra.mxu0 0.0
      %1458 = vmatprep.subr.mxu0 0.0
      %1459 = vmatpush2.msra.mxu0 0.0
      %1460 = vmatprep.subr.mxu0 0.0
      %1461 = vmatpush2.msra.mxu0 0.0
      %1462 = vmatprep.subr.mxu0 0.0
      %1463 = vmatpush2.msra.mxu0 0.0
      %1464 = vmatprep.subr.mxu0 0.0
      %1465 = vmatpush2.msra.mxu0 0.0
      %1466 = vmatprep.mubr.f32.mxu0 0.0
      %1467 = vmatmul.mubr.f32.gmra.mxu0 %v1277
      %v1468 = vpop.f32.mrf.mxu0
      %v1469 = vadd.f32 0.0, %v1468
      %v1470 = vpop.f32.mrf.mxu0
      %1471 = vmatprep.mubr.f32.mxu0 0.0
      %1472 = vmatmul.mubr.f32.gmra.mxu0 %v1280
      %v1473 = vpop.f32.mrf.mxu0
      %v1474 = vadd.f32 0.0, %v1473
      %v1475 = vpop.f32.mrf.mxu0
      %1476 = vmatprep.mubr.f32.mxu0 0.0
      %1477 = vmatmul.mubr.f32.gmra.mxu0 %v1283
      %v1478 = vpop.f32.mrf.mxu0
      %v1479 = vadd.f32 0.0, %v1478
      %v1480 = vpop.f32.mrf.mxu0
      %1481 = vmatprep.mubr.f32.mxu0 0.0
      %1482 = vmatmul.mubr.f32.gmra.mxu0 %v1286
      %v1483 = vpop.f32.mrf.mxu0
      %v1484 = vadd.f32 0.0, %v1483
      %v1485 = vpop.f32.mrf.mxu0
      %1486 = vmatprep.mubr.f32.mxu0 0.0
      %1487 = vmatmul.mubr.f32.gmra.mxu0 %v1289
      %v1488 = vpop.f32.mrf.mxu0
      %v1489 = vadd.f32 0.0, %v1488
      %v1490 = vpop.f32.mrf.mxu0
      %1491 = vmatprep.mubr.f32.mxu0 0.0
      %1492 = vmatmul.mubr.f32.gmra.mxu0 %v1292
      %v1493 = vpop.f32.mrf.mxu0
      %v1494 = vadd.f32 0.0, %v1493
      %v1495 = vpop.f32.mrf.mxu0
      %1496 = vmatprep.mubr.f32.mxu0 0.0
      %1497 = vmatmul.mubr.f32.gmra.mxu0 %v1295
      %v1498 = vpop.f32.mrf.mxu0
      %v1499 = vadd.f32 0.0, %v1498
      %v1500 = vpop.f32.mrf.mxu0
      %1501 = vmatprep.mubr.f32.mxu0 0.0
      %1502 = vmatmul.mubr.f32.gmra.mxu0 %v1298
      %v1503 = vpop.f32.mrf.mxu0
      %v1504 = vadd.f32 0.0, %v1503
      %v1505 = vpop.f32.mrf.mxu0
      %1506 = vmatprep.mubr.f32.mxu0 0.0
      %1507 = vmatmul.mubr.f32.gmra.mxu0 %v1301
      %v1508 = vpop.f32.mrf.mxu0
      %v1509 = vadd.f32 0.0, %v1508
      %v1510 = vpop.f32.mrf.mxu0
      %1511 = vmatprep.mubr.f32.mxu0 0.0
      %1512 = vmatmul.mubr.f32.gmra.mxu0 %v1304
      %v1513 = vpop.f32.mrf.mxu0
      %v1514 = vadd.f32 0.0, %v1513
      %v1515 = vpop.f32.mrf.mxu0
      %1516 = vmatprep.mubr.f32.mxu0 0.0
      %1517 = vmatmul.mubr.f32.gmra.mxu0 %v1307
      %v1518 = vpop.f32.mrf.mxu0
      %v1519 = vadd.f32 0.0, %v1518
      %v1520 = vpop.f32.mrf.mxu0
      %1521 = vmatprep.mubr.f32.mxu0 0.0
      %1522 = vmatmul.mubr.f32.gmra.mxu0 %v1310
      %v1523 = vpop.f32.mrf.mxu0
      %v1524 = vadd.f32 0.0, %v1523
      %v1525 = vpop.f32.mrf.mxu0
      %1526 = vmatprep.mubr.f32.mxu0 0.0
      %1527 = vmatmul.mubr.f32.gmra.mxu0 %v1313
      %v1528 = vpop.f32.mrf.mxu0
      %v1529 = vadd.f32 0.0, %v1528
      %v1530 = vpop.f32.mrf.mxu0
      %1531 = vmatprep.mubr.f32.mxu0 0.0
      %1532 = vmatmul.mubr.f32.gmra.mxu0 %v1316
      %v1533 = vpop.f32.mrf.mxu0
      %v1534 = vadd.f32 0.0, %v1533
      %v1535 = vpop.f32.mrf.mxu0
      %1536 = vmatprep.mubr.f32.mxu0 0.0
      %1537 = vmatmul.mubr.f32.gmra.mxu0 %v1319
      %v1538 = vpop.f32.mrf.mxu0
      %v1539 = vadd.f32 0.0, %v1538
      %v1540 = vpop.f32.mrf.mxu0
      %1541 = vmatprep.mubr.f32.mxu0 0.0
      %1542 = vmatmul.mubr.f32.gmra.mxu0 %v1322
      %v1543 = vpop.f32.mrf.mxu0
      %v1544 = vadd.f32 0.0, %v1543
      %v1545 = vpop.f32.mrf.mxu0
      %1546 = vmatprep.mubr.f32.mxu0 0.0
      %1547 = vmatmul.mubr.f32.gmra.mxu0 %v1325
      %v1548 = vpop.f32.mrf.mxu0
      %v1549 = vadd.f32 0.0, %v1548
      %v1550 = vpop.f32.mrf.mxu0
      %1551 = vmatprep.mubr.f32.mxu0 0.0
      %1552 = vmatmul.mubr.f32.gmra.mxu0 %v1328
      %v1553 = vpop.f32.mrf.mxu0
      %v1554 = vadd.f32 0.0, %v1553
      %v1555 = vpop.f32.mrf.mxu0
      %1556 = vmatprep.mubr.f32.mxu0 0.0
      %1557 = vmatmul.mubr.f32.gmra.mxu0 %v1331
      %v1558 = vpop.f32.mrf.mxu0
      %v1559 = vadd.f32 0.0, %v1558
      %v1560 = vpop.f32.mrf.mxu0
      %1561 = vmatprep.mubr.f32.mxu0 0.0
      %1562 = vmatmul.mubr.f32.gmra.mxu0 %v1334
      %v1563 = vpop.f32.mrf.mxu0
      %v1564 = vadd.f32 0.0, %v1563
      %v1565 = vpop.f32.mrf.mxu0
      %1566 = vmatprep.mubr.f32.mxu0 0.0
      %1567 = vmatmul.mubr.f32.gmra.mxu0 %v1337
      %v1568 = vpop.f32.mrf.mxu0
      %v1569 = vadd.f32 0.0, %v1568
      %v1570 = vpop.f32.mrf.mxu0
      %1571 = vmatprep.mubr.f32.mxu0 0.0
      %1572 = vmatmul.mubr.f32.gmra.mxu0 %v1340
      %v1573 = vpop.f32.mrf.mxu0
      %v1574 = vadd.f32 0.0, %v1573
      %v1575 = vpop.f32.mrf.mxu0
      %1576 = vmatprep.mubr.f32.mxu0 0.0
      %1577 = vmatmul.mubr.f32.gmra.mxu0 %v1343
      %v1578 = vpop.f32.mrf.mxu0
      %v1579 = vadd.f32 0.0, %v1578
      %v1580 = vpop.f32.mrf.mxu0
      %1581 = vmatprep.mubr.f32.mxu0 0.0
      %1582 = vmatmul.mubr.f32.gmra.mxu0 %v1346
      %v1583 = vpop.f32.mrf.mxu0
      %v1584 = vadd.f32 0.0, %v1583
      %v1585 = vpop.f32.mrf.mxu0
      %1586 = vmatprep.mubr.f32.mxu0 0.0
      %1587 = vmatmul.mubr.f32.gmra.mxu0 %v1349
      %v1588 = vpop.f32.mrf.mxu0
      %v1589 = vadd.f32 0.0, %v1588
      %v1590 = vpop.f32.mrf.mxu0
      %1591 = vmatprep.mubr.f32.mxu0 0.0
      %1592 = vmatmul.mubr.f32.gmra.mxu0 %v1352
      %v1593 = vpop.f32.mrf.mxu0
      %v1594 = vadd.f32 0.0, %v1593
      %v1595 = vpop.f32.mrf.mxu0
      %1596 = vmatprep.mubr.f32.mxu0 0.0
      %1597 = vmatmul.mubr.f32.gmra.mxu0 %v1355
      %v1598 = vpop.f32.mrf.mxu0
      %v1599 = vadd.f32 0.0, %v1598
      %v1600 = vpop.f32.mrf.mxu0
      %1601 = vmatprep.mubr.f32.mxu0 0.0
      %1602 = vmatmul.mubr.f32.gmra.mxu0 %v1358
      %v1603 = vpop.f32.mrf.mxu0
      %v1604 = vadd.f32 0.0, %v1603
      %v1605 = vpop.f32.mrf.mxu0
      %1606 = vmatprep.mubr.f32.mxu0 0.0
      %1607 = vmatmul.mubr.f32.gmra.mxu0 %v1361
      %v1608 = vpop.f32.mrf.mxu0
      %v1609 = vadd.f32 0.0, %v1608
      %v1610 = vpop.f32.mrf.mxu0
      %1611 = vmatprep.mubr.f32.mxu0 0.0
      %1612 = vmatmul.mubr.f32.gmra.mxu0 %v1364
      %v1613 = vpop.f32.mrf.mxu0
      %v1614 = vadd.f32 0.0, %v1613
      %v1615 = vpop.f32.mrf.mxu0
      %1616 = vmatprep.mubr.f32.mxu0 0.0
      %1617 = vmatmul.mubr.f32.gmra.mxu0 %v1367
      %v1618 = vpop.f32.mrf.mxu0
      %v1619 = vadd.f32 0.0, %v1618
      %v1620 = vpop.f32.mrf.mxu0
      %1621 = vmatprep.mubr.f32.mxu0 0.0
      %1622 = vmatmul.mubr.f32.gmra.mxu0 %v1370
      %v1623 = vpop.f32.mrf.mxu0
      %v1624 = vadd.f32 0.0, %v1623
      %v1625 = vpop.f32.mrf.mxu0
      %1626 = vmatprep.mubr.f32.mxu0 0.0
      %1627 = vmatmul.mubr.f32.gmra.mxu0 %v1373
      %v1628 = vpop.f32.mrf.mxu0
      %v1629 = vadd.f32 0.0, %v1628
      %v1630 = vpop.f32.mrf.mxu0
      %1631 = vmatprep.mubr.f32.mxu0 0.0
      %1632 = vmatmul.mubr.f32.gmra.mxu0 %v1376
      %v1633 = vpop.f32.mrf.mxu0
      %v1634 = vadd.f32 0.0, %v1633
      %v1635 = vpop.f32.mrf.mxu0
      %1636 = vmatprep.mubr.f32.mxu0 0.0
      %1637 = vmatmul.mubr.f32.gmra.mxu0 %v1379
      %v1638 = vpop.f32.mrf.mxu0
      %v1639 = vadd.f32 0.0, %v1638
      %v1640 = vpop.f32.mrf.mxu0
      %1641 = vmatprep.mubr.f32.mxu0 0.0
      %1642 = vmatmul.mubr.f32.gmra.mxu0 %v1382
      %v1643 = vpop.f32.mrf.mxu0
      %v1644 = vadd.f32 0.0, %v1643
      %v1645 = vpop.f32.mrf.mxu0
      %1646 = vmatprep.mubr.f32.mxu0 0.0
      %1647 = vmatmul.mubr.f32.gmra.mxu0 %v1385
      %v1648 = vpop.f32.mrf.mxu0
      %v1649 = vadd.f32 0.0, %v1648
      %v1650 = vpop.f32.mrf.mxu0
      %1651 = vmatprep.mubr.f32.mxu0 0.0
      %1652 = vmatmul.mubr.f32.gmra.mxu0 %v1388
      %v1653 = vpop.f32.mrf.mxu0
      %v1654 = vadd.f32 0.0, %v1653
      %v1655 = vpop.f32.mrf.mxu0
      %1656 = vmatprep.mubr.f32.mxu0 0.0
      %1657 = vmatmul.mubr.f32.gmra.mxu0 %v1391
      %v1658 = vpop.f32.mrf.mxu0
      %v1659 = vadd.f32 0.0, %v1658
      %v1660 = vpop.f32.mrf.mxu0
      %1661 = vmatprep.mubr.f32.mxu0 0.0
      %1662 = vmatmul.mubr.f32.gmra.mxu0 %v1394
      %v1663 = vpop.f32.mrf.mxu0
      %v1664 = vadd.f32 0.0, %v1663
      %v1665 = vpop.f32.mrf.mxu0
      %1666 = vmatprep.mubr.f32.mxu0 0.0
      %1667 = vmatmul.mubr.f32.gmra.mxu0 %v1397
      %v1668 = vpop.f32.mrf.mxu0
      %v1669 = vadd.f32 0.0, %v1668
      %v1670 = vpop.f32.mrf.mxu0
      %1671 = vdwg.mxu0
      %v1673 = vsel %vm351, %v1189, 0
      %v1676 = vsel %vm351, %v1190, 0
      %v1679 = vsel %vm351, %v1191, 0
      %v1682 = vsel %vm351, %v1192, 0
      %v1685 = vsel %vm351, %v1193, 0
      %v1688 = vsel %vm351, %v1194, 0
      %v1691 = vsel %vm351, %v1195, 0
      %v1694 = vsel %vm351, %v1196, 0
      %v1697 = vsel %vm351, %v1197, 0
      %v1700 = vsel %vm351, %v1198, 0
      %v1703 = vsel %vm351, %v1199, 0
      %v1706 = vsel %vm351, %v1200, 0
      %v1709 = vsel %vm351, %v1201, 0
      %v1712 = vsel %vm351, %v1202, 0
      %v1715 = vsel %vm351, %v1203, 0
      %v1718 = vsel %vm351, %v1204, 0
      %v1721 = vsel %vm351, %v1205, 0
      %v1724 = vsel %vm351, %v1206, 0
      %v1727 = vsel %vm351, %v1207, 0
      %v1730 = vsel %vm351, %v1208, 0
      %v1733 = vsel %vm351, %v1209, 0
      %v1736 = vsel %vm351, %v1210, 0
      %v1739 = vsel %vm351, %v1211, 0
      %v1742 = vsel %vm351, %v1212, 0
      %v1745 = vsel %vm351, %v1213, 0
      %v1748 = vsel %vm351, %v1214, 0
      %v1751 = vsel %vm351, %v1215, 0
      %v1754 = vsel %vm351, %v1216, 0
      %v1757 = vsel %vm351, %v1217, 0
      %v1760 = vsel %vm351, %v1218, 0
      %v1763 = vsel %vm351, %v1219, 0
      %v1766 = vsel %vm351, %v1220, 0
      %v1769 = vsel %vm351, %v1221, 0
      %v1772 = vsel %vm351, %v1222, 0
      %v1775 = vsel %vm351, %v1223, 0
      %v1778 = vsel %vm351, %v1224, 0
      %v1781 = vsel %vm351, %v1225, 0
      %v1784 = vsel %vm351, %v1226, 0
      %v1787 = vsel %vm351, %v1227, 0
      %v1790 = vsel %vm351, %v1228, 0
      %v1793 = vsel %vm351, %v1229, 0
      %v1796 = vsel %vm616, %v1231, 0
      %1798 = vmatprep.subr.mxu0 0.0
      %1799 = vmatpush1.msra.mxu0 0.0
      %1800 = vmatprep.subr.mxu0 0.0
      %1801 = vmatpush1.msra.mxu0 0.0
      %1802 = vmatprep.subr.mxu0 0.0
      %1803 = vmatpush1.msra.mxu0 0.0
      %1804 = vmatprep.subr.mxu0 0.0
      %1805 = vmatpush1.msra.mxu0 0.0
      %1806 = vmatprep.subr.mxu0 0.0
      %1807 = vmatpush1.msra.mxu0 0.0
      %1808 = vmatprep.subr.mxu0 0.0
      %1809 = vmatpush1.msra.mxu0 0.0
      %1810 = vmatprep.subr.mxu0 0.0
      %1811 = vmatpush1.msra.mxu0 0.0
      %1812 = vmatprep.subr.mxu0 0.0
      %1813 = vmatpush1.msra.mxu0 0.0
      %1814 = vmatprep.subr.mxu0 0.0
      %1815 = vmatpush1.msra.mxu0 0.0
      %1816 = vmatprep.subr.mxu0 0.0
      %1817 = vmatpush1.msra.mxu0 0.0
      %1818 = vmatprep.subr.mxu0 0.0
      %1819 = vmatpush1.msra.mxu0 0.0
      %1820 = vmatprep.subr.mxu0 0.0
      %1821 = vmatpush1.msra.mxu0 0.0
      %1822 = vmatprep.subr.mxu0 0.0
      %1823 = vmatpush1.msra.mxu0 0.0
      %1824 = vmatprep.subr.mxu0 0.0
      %1825 = vmatpush1.msra.mxu0 0.0
      %1826 = vmatprep.subr.mxu0 0.0
      %1827 = vmatpush1.msra.mxu0 0.0
      %1828 = vmatprep.subr.mxu0 0.0
      %1829 = vmatpush1.msra.mxu0 %v1796
      %1830 = vmatprep.subr.mxu0 0.0
      %1831 = vmatpush2.msra.mxu0 0.0
      %1832 = vmatprep.subr.mxu0 0.0
      %1833 = vmatpush2.msra.mxu0 0.0
      %1834 = vmatprep.subr.mxu0 0.0
      %1835 = vmatpush2.msra.mxu0 0.0
      %1836 = vmatprep.subr.mxu0 0.0
      %1837 = vmatpush2.msra.mxu0 0.0
      %1838 = vmatprep.subr.mxu0 0.0
      %1839 = vmatpush2.msra.mxu0 0.0
      %1840 = vmatprep.subr.mxu0 0.0
      %1841 = vmatpush2.msra.mxu0 0.0
      %1842 = vmatprep.subr.mxu0 0.0
      %1843 = vmatpush2.msra.mxu0 0.0
      %1844 = vmatprep.subr.mxu0 0.0
      %1845 = vmatpush2.msra.mxu0 0.0
      %1846 = vmatprep.subr.mxu0 0.0
      %1847 = vmatpush2.msra.mxu0 0.0
      %1848 = vmatprep.subr.mxu0 0.0
      %1849 = vmatpush2.msra.mxu0 0.0
      %1850 = vmatprep.subr.mxu0 0.0
      %1851 = vmatpush2.msra.mxu0 0.0
      %1852 = vmatprep.subr.mxu0 0.0
      %1853 = vmatpush2.msra.mxu0 0.0
      %1854 = vmatprep.subr.mxu0 0.0
      %1855 = vmatpush2.msra.mxu0 0.0
      %1856 = vmatprep.subr.mxu0 0.0
      %1857 = vmatpush2.msra.mxu0 0.0
      %1858 = vmatprep.subr.mxu0 0.0
      %1859 = vmatpush2.msra.mxu0 0.0
      %1860 = vmatprep.subr.mxu0 0.0
      %1861 = vmatpush2.msra.mxu0 0.0
      %1862 = vmatprep.mubr.f32.mxu0 0.0
      %1863 = vmatmul.mubr.f32.gmra.mxu0 %v1673
      %v1864 = vpop.f32.mrf.mxu0
      %v1865 = vadd.f32 %v1469, %v1864
      %v1866 = vpop.f32.mrf.mxu0
      %1867 = vmatprep.mubr.f32.mxu0 0.0
      %1868 = vmatmul.mubr.f32.gmra.mxu0 %v1676
      %v1869 = vpop.f32.mrf.mxu0
      %v1870 = vadd.f32 %v1474, %v1869
      %v1871 = vpop.f32.mrf.mxu0
      %1872 = vmatprep.mubr.f32.mxu0 0.0
      %1873 = vmatmul.mubr.f32.gmra.mxu0 %v1679
      %v1874 = vpop.f32.mrf.mxu0
      %v1875 = vadd.f32 %v1479, %v1874
      %v1876 = vpop.f32.mrf.mxu0
      %1877 = vmatprep.mubr.f32.mxu0 0.0
      %1878 = vmatmul.mubr.f32.gmra.mxu0 %v1682
      %v1879 = vpop.f32.mrf.mxu0
      %v1880 = vadd.f32 %v1484, %v1879
      %v1881 = vpop.f32.mrf.mxu0
      %1882 = vmatprep.mubr.f32.mxu0 0.0
      %1883 = vmatmul.mubr.f32.gmra.mxu0 %v1685
      %v1884 = vpop.f32.mrf.mxu0
      %v1885 = vadd.f32 %v1489, %v1884
      %v1886 = vpop.f32.mrf.mxu0
      %1887 = vmatprep.mubr.f32.mxu0 0.0
      %1888 = vmatmul.mubr.f32.gmra.mxu0 %v1688
      %v1889 = vpop.f32.mrf.mxu0
      %v1890 = vadd.f32 %v1494, %v1889
      %v1891 = vpop.f32.mrf.mxu0
      %1892 = vmatprep.mubr.f32.mxu0 0.0
      %1893 = vmatmul.mubr.f32.gmra.mxu0 %v1691
      %v1894 = vpop.f32.mrf.mxu0
      %v1895 = vadd.f32 %v1499, %v1894
      %v1896 = vpop.f32.mrf.mxu0
      %1897 = vmatprep.mubr.f32.mxu0 0.0
      %1898 = vmatmul.mubr.f32.gmra.mxu0 %v1694
      %v1899 = vpop.f32.mrf.mxu0
      %v1900 = vadd.f32 %v1504, %v1899
      %v1901 = vpop.f32.mrf.mxu0
      %1902 = vmatprep.mubr.f32.mxu0 0.0
      %1903 = vmatmul.mubr.f32.gmra.mxu0 %v1697
      %v1904 = vpop.f32.mrf.mxu0
      %v1905 = vadd.f32 %v1509, %v1904
      %v1906 = vpop.f32.mrf.mxu0
      %1907 = vmatprep.mubr.f32.mxu0 0.0
      %1908 = vmatmul.mubr.f32.gmra.mxu0 %v1700
      %v1909 = vpop.f32.mrf.mxu0
      %v1910 = vadd.f32 %v1514, %v1909
      %v1911 = vpop.f32.mrf.mxu0
      %1912 = vmatprep.mubr.f32.mxu0 0.0
      %1913 = vmatmul.mubr.f32.gmra.mxu0 %v1703
      %v1914 = vpop.f32.mrf.mxu0
      %v1915 = vadd.f32 %v1519, %v1914
      %v1916 = vpop.f32.mrf.mxu0
      %1917 = vmatprep.mubr.f32.mxu0 0.0
      %1918 = vmatmul.mubr.f32.gmra.mxu0 %v1706
      %v1919 = vpop.f32.mrf.mxu0
      %v1920 = vadd.f32 %v1524, %v1919
      %v1921 = vpop.f32.mrf.mxu0
      %1922 = vmatprep.mubr.f32.mxu0 0.0
      %1923 = vmatmul.mubr.f32.gmra.mxu0 %v1709
      %v1924 = vpop.f32.mrf.mxu0
      %v1925 = vadd.f32 %v1529, %v1924
      %v1926 = vpop.f32.mrf.mxu0
      %1927 = vmatprep.mubr.f32.mxu0 0.0
      %1928 = vmatmul.mubr.f32.gmra.mxu0 %v1712
      %v1929 = vpop.f32.mrf.mxu0
      %v1930 = vadd.f32 %v1534, %v1929
      %v1931 = vpop.f32.mrf.mxu0
      %1932 = vmatprep.mubr.f32.mxu0 0.0
      %1933 = vmatmul.mubr.f32.gmra.mxu0 %v1715
      %v1934 = vpop.f32.mrf.mxu0
      %v1935 = vadd.f32 %v1539, %v1934
      %v1936 = vpop.f32.mrf.mxu0
      %1937 = vmatprep.mubr.f32.mxu0 0.0
      %1938 = vmatmul.mubr.f32.gmra.mxu0 %v1718
      %v1939 = vpop.f32.mrf.mxu0
      %v1940 = vadd.f32 %v1544, %v1939
      %v1941 = vpop.f32.mrf.mxu0
      %1942 = vmatprep.mubr.f32.mxu0 0.0
      %1943 = vmatmul.mubr.f32.gmra.mxu0 %v1721
      %v1944 = vpop.f32.mrf.mxu0
      %v1945 = vadd.f32 %v1549, %v1944
      %v1946 = vpop.f32.mrf.mxu0
      %1947 = vmatprep.mubr.f32.mxu0 0.0
      %1948 = vmatmul.mubr.f32.gmra.mxu0 %v1724
      %v1949 = vpop.f32.mrf.mxu0
      %v1950 = vadd.f32 %v1554, %v1949
      %v1951 = vpop.f32.mrf.mxu0
      %1952 = vmatprep.mubr.f32.mxu0 0.0
      %1953 = vmatmul.mubr.f32.gmra.mxu0 %v1727
      %v1954 = vpop.f32.mrf.mxu0
      %v1955 = vadd.f32 %v1559, %v1954
      %v1956 = vpop.f32.mrf.mxu0
      %1957 = vmatprep.mubr.f32.mxu0 0.0
      %1958 = vmatmul.mubr.f32.gmra.mxu0 %v1730
      %v1959 = vpop.f32.mrf.mxu0
      %v1960 = vadd.f32 %v1564, %v1959
      %v1961 = vpop.f32.mrf.mxu0
      %1962 = vmatprep.mubr.f32.mxu0 0.0
      %1963 = vmatmul.mubr.f32.gmra.mxu0 %v1733
      %v1964 = vpop.f32.mrf.mxu0
      %v1965 = vadd.f32 %v1569, %v1964
      %v1966 = vpop.f32.mrf.mxu0
      %1967 = vmatprep.mubr.f32.mxu0 0.0
      %1968 = vmatmul.mubr.f32.gmra.mxu0 %v1736
      %v1969 = vpop.f32.mrf.mxu0
      %v1970 = vadd.f32 %v1574, %v1969
      %v1971 = vpop.f32.mrf.mxu0
      %1972 = vmatprep.mubr.f32.mxu0 0.0
      %1973 = vmatmul.mubr.f32.gmra.mxu0 %v1739
      %v1974 = vpop.f32.mrf.mxu0
      %v1975 = vadd.f32 %v1579, %v1974
      %v1976 = vpop.f32.mrf.mxu0
      %1977 = vmatprep.mubr.f32.mxu0 0.0
      %1978 = vmatmul.mubr.f32.gmra.mxu0 %v1742
      %v1979 = vpop.f32.mrf.mxu0
      %v1980 = vadd.f32 %v1584, %v1979
      %v1981 = vpop.f32.mrf.mxu0
      %1982 = vmatprep.mubr.f32.mxu0 0.0
      %1983 = vmatmul.mubr.f32.gmra.mxu0 %v1745
      %v1984 = vpop.f32.mrf.mxu0
      %v1985 = vadd.f32 %v1589, %v1984
      %v1986 = vpop.f32.mrf.mxu0
      %1987 = vmatprep.mubr.f32.mxu0 0.0
      %1988 = vmatmul.mubr.f32.gmra.mxu0 %v1748
      %v1989 = vpop.f32.mrf.mxu0
      %v1990 = vadd.f32 %v1594, %v1989
      %v1991 = vpop.f32.mrf.mxu0
      %1992 = vmatprep.mubr.f32.mxu0 0.0
      %1993 = vmatmul.mubr.f32.gmra.mxu0 %v1751
      %v1994 = vpop.f32.mrf.mxu0
      %v1995 = vadd.f32 %v1599, %v1994
      %v1996 = vpop.f32.mrf.mxu0
      %1997 = vmatprep.mubr.f32.mxu0 0.0
      %1998 = vmatmul.mubr.f32.gmra.mxu0 %v1754
      %v1999 = vpop.f32.mrf.mxu0
      %v2000 = vadd.f32 %v1604, %v1999
      %v2001 = vpop.f32.mrf.mxu0
      %2002 = vmatprep.mubr.f32.mxu0 0.0
      %2003 = vmatmul.mubr.f32.gmra.mxu0 %v1757
      %v2004 = vpop.f32.mrf.mxu0
      %v2005 = vadd.f32 %v1609, %v2004
      %v2006 = vpop.f32.mrf.mxu0
      %2007 = vmatprep.mubr.f32.mxu0 0.0
      %2008 = vmatmul.mubr.f32.gmra.mxu0 %v1760
      %v2009 = vpop.f32.mrf.mxu0
      %v2010 = vadd.f32 %v1614, %v2009
      %v2011 = vpop.f32.mrf.mxu0
      %2012 = vmatprep.mubr.f32.mxu0 0.0
      %2013 = vmatmul.mubr.f32.gmra.mxu0 %v1763
      %v2014 = vpop.f32.mrf.mxu0
      %v2015 = vadd.f32 %v1619, %v2014
      %v2016 = vpop.f32.mrf.mxu0
      %2017 = vmatprep.mubr.f32.mxu0 0.0
      %2018 = vmatmul.mubr.f32.gmra.mxu0 %v1766
      %v2019 = vpop.f32.mrf.mxu0
      %v2020 = vadd.f32 %v1624, %v2019
      %v2021 = vpop.f32.mrf.mxu0
      %2022 = vmatprep.mubr.f32.mxu0 0.0
      %2023 = vmatmul.mubr.f32.gmra.mxu0 %v1769
      %v2024 = vpop.f32.mrf.mxu0
      %v2025 = vadd.f32 %v1629, %v2024
      %v2026 = vpop.f32.mrf.mxu0
      %2027 = vmatprep.mubr.f32.mxu0 0.0
      %2028 = vmatmul.mubr.f32.gmra.mxu0 %v1772
      %v2029 = vpop.f32.mrf.mxu0
      %v2030 = vadd.f32 %v1634, %v2029
      %v2031 = vpop.f32.mrf.mxu0
      %2032 = vmatprep.mubr.f32.mxu0 0.0
      %2033 = vmatmul.mubr.f32.gmra.mxu0 %v1775
      %v2034 = vpop.f32.mrf.mxu0
      %v2035 = vadd.f32 %v1639, %v2034
      %v2036 = vpop.f32.mrf.mxu0
      %2037 = vmatprep.mubr.f32.mxu0 0.0
      %2038 = vmatmul.mubr.f32.gmra.mxu0 %v1778
      %v2039 = vpop.f32.mrf.mxu0
      %v2040 = vadd.f32 %v1644, %v2039
      %v2041 = vpop.f32.mrf.mxu0
      %2042 = vmatprep.mubr.f32.mxu0 0.0
      %2043 = vmatmul.mubr.f32.gmra.mxu0 %v1781
      %v2044 = vpop.f32.mrf.mxu0
      %v2045 = vadd.f32 %v1649, %v2044
      %v2046 = vpop.f32.mrf.mxu0
      %2047 = vmatprep.mubr.f32.mxu0 0.0
      %2048 = vmatmul.mubr.f32.gmra.mxu0 %v1784
      %v2049 = vpop.f32.mrf.mxu0
      %v2050 = vadd.f32 %v1654, %v2049
      %v2051 = vpop.f32.mrf.mxu0
      %2052 = vmatprep.mubr.f32.mxu0 0.0
      %2053 = vmatmul.mubr.f32.gmra.mxu0 %v1787
      %v2054 = vpop.f32.mrf.mxu0
      %v2055 = vadd.f32 %v1659, %v2054
      %v2056 = vpop.f32.mrf.mxu0
      %2057 = vmatprep.mubr.f32.mxu0 0.0
      %2058 = vmatmul.mubr.f32.gmra.mxu0 %v1790
      %v2059 = vpop.f32.mrf.mxu0
      %v2060 = vadd.f32 %v1664, %v2059
      %v2061 = vpop.f32.mrf.mxu0
      %2062 = vmatprep.mubr.f32.mxu0 0.0
      %2063 = vmatmul.mubr.f32.gmra.mxu0 %v1793
      %v2064 = vpop.f32.mrf.mxu0
      %v2065 = vadd.f32 %v1669, %v2064
      %v2066 = vpop.f32.mrf.mxu0
      %2067 = vdwg.mxu0
      %v2068 = vld [vmem:[#allocation2 + $0x7] sm:$0xff]
      %v2069 = vld [vmem:[#allocation2 + $0xf] sm:$0xff]
      %v2070 = vld [vmem:[#allocation2 + $0x17] sm:$0xff]
      %v2071 = vld [vmem:[#allocation2 + $0x1f] sm:$0xff]
      %v2072 = vld [vmem:[#allocation2 + $0x27] sm:$0xff]
      %v2073 = vld [vmem:[#allocation2 + $0x2f] sm:$0xff]
      %v2074 = vld [vmem:[#allocation2 + $0x37] sm:$0xff]
      %v2075 = vld [vmem:[#allocation2 + $0x3f] sm:$0xff]
      %v2076 = vld [vmem:[#allocation2 + $0x47] sm:$0xff]
      %v2077 = vld [vmem:[#allocation2 + $0x4f] sm:$0xff]
      %v2078 = vld [vmem:[#allocation2 + $0x57] sm:$0xff]
      %v2079 = vld [vmem:[#allocation2 + $0x5f] sm:$0xff]
      %v2080 = vld [vmem:[#allocation2 + $0x67] sm:$0xff]
      %v2081 = vld [vmem:[#allocation2 + $0x6f] sm:$0xff]
      %v2082 = vld [vmem:[#allocation2 + $0x77] sm:$0xff]
      %v2083 = vld [vmem:[#allocation2 + $0x7f] sm:$0xff]
      %v2084 = vld [vmem:[#allocation2 + $0x87] sm:$0xff]
      %v2085 = vld [vmem:[#allocation2 + $0x8f] sm:$0xff]
      %v2086 = vld [vmem:[#allocation2 + $0x97] sm:$0xff]
      %v2087 = vld [vmem:[#allocation2 + $0x9f] sm:$0xff]
      %v2088 = vld [vmem:[#allocation2 + $0xa7] sm:$0xff]
      %v2089 = vld [vmem:[#allocation2 + $0xaf] sm:$0xff]
      %v2090 = vld [vmem:[#allocation2 + $0xb7] sm:$0xff]
      %v2091 = vld [vmem:[#allocation2 + $0xbf] sm:$0xff]
      %v2092 = vld [vmem:[#allocation2 + $0xc7] sm:$0xff]
      %v2093 = vld [vmem:[#allocation2 + $0xcf] sm:$0xff]
      %v2094 = vld [vmem:[#allocation2 + $0xd7] sm:$0xff]
      %v2095 = vld [vmem:[#allocation2 + $0xdf] sm:$0xff]
      %v2096 = vld [vmem:[#allocation2 + $0xe7] sm:$0xff]
      %v2097 = vld [vmem:[#allocation2 + $0xef] sm:$0xff]
      %v2098 = vld [vmem:[#allocation2 + $0xf7] sm:$0xff]
      %v2099 = vld [vmem:[#allocation2 + $0xff] sm:$0xff]
      %v2100 = vld [vmem:[#allocation2 + $0x107] sm:$0xff]
      %v2101 = vld [vmem:[#allocation2 + $0x10f] sm:$0xff]
      %v2102 = vld [vmem:[#allocation2 + $0x117] sm:$0xff]
      %v2103 = vld [vmem:[#allocation2 + $0x11f] sm:$0xff]
      %v2104 = vld [vmem:[#allocation2 + $0x127] sm:$0xff]
      %v2105 = vld [vmem:[#allocation2 + $0x12f] sm:$0xff]
      %v2106 = vld [vmem:[#allocation2 + $0x137] sm:$0xff]
      %v2107 = vld [vmem:[#allocation2 + $0x13f] sm:$0xff]
      %v2108 = vld [vmem:[#allocation2 + $0x147] sm:$0xf]
      %s2109 = scalar_lea.vmem %s337, 2
      %v2110 = vld [vmem:[%s2109] sm:$0x1]
      %v2111 = vunpack.c.l.bf16 %v2110
      %v2113 = vsel %vm351, %v2068, 0
      %v2116 = vsel %vm351, %v2069, 0
      %v2119 = vsel %vm351, %v2070, 0
      %v2122 = vsel %vm351, %v2071, 0
      %v2125 = vsel %vm351, %v2072, 0
      %v2128 = vsel %vm351, %v2073, 0
      %v2131 = vsel %vm351, %v2074, 0
      %v2134 = vsel %vm351, %v2075, 0
      %v2137 = vsel %vm351, %v2076, 0
      %v2140 = vsel %vm351, %v2077, 0
      %v2143 = vsel %vm351, %v2078, 0
      %v2146 = vsel %vm351, %v2079, 0
      %v2149 = vsel %vm351, %v2080, 0
      %v2152 = vsel %vm351, %v2081, 0
      %v2155 = vsel %vm351, %v2082, 0
      %v2158 = vsel %vm351, %v2083, 0
      %v2161 = vsel %vm351, %v2084, 0
      %v2164 = vsel %vm351, %v2085, 0
      %v2167 = vsel %vm351, %v2086, 0
      %v2170 = vsel %vm351, %v2087, 0
      %v2173 = vsel %vm351, %v2088, 0
      %v2176 = vsel %vm351, %v2089, 0
      %v2179 = vsel %vm351, %v2090, 0
      %v2182 = vsel %vm351, %v2091, 0
      %v2185 = vsel %vm351, %v2092, 0
      %v2188 = vsel %vm351, %v2093, 0
      %v2191 = vsel %vm351, %v2094, 0
      %v2194 = vsel %vm351, %v2095, 0
      %v2197 = vsel %vm351, %v2096, 0
      %v2200 = vsel %vm351, %v2097, 0
      %v2203 = vsel %vm351, %v2098, 0
      %v2206 = vsel %vm351, %v2099, 0
      %v2209 = vsel %vm351, %v2100, 0
      %v2212 = vsel %vm351, %v2101, 0
      %v2215 = vsel %vm351, %v2102, 0
      %v2218 = vsel %vm351, %v2103, 0
      %v2221 = vsel %vm351, %v2104, 0
      %v2224 = vsel %vm351, %v2105, 0
      %v2227 = vsel %vm351, %v2106, 0
      %v2230 = vsel %vm351, %v2107, 0
      %v2233 = vsel %vm351, %v2108, 0
      %v2236 = vsel %vm616, %v2111, 0
      %2238 = vmatprep.subr.mxu0 0.0
      %2239 = vmatpush1.msra.mxu0 0.0
      %2240 = vmatprep.subr.mxu0 0.0
      %2241 = vmatpush1.msra.mxu0 0.0
      %2242 = vmatprep.subr.mxu0 0.0
      %2243 = vmatpush1.msra.mxu0 0.0
      %2244 = vmatprep.subr.mxu0 0.0
      %2245 = vmatpush1.msra.mxu0 0.0
      %2246 = vmatprep.subr.mxu0 0.0
      %2247 = vmatpush1.msra.mxu0 0.0
      %2248 = vmatprep.subr.mxu0 0.0
      %2249 = vmatpush1.msra.mxu0 0.0
      %2250 = vmatprep.subr.mxu0 0.0
      %2251 = vmatpush1.msra.mxu0 0.0
      %2252 = vmatprep.subr.mxu0 0.0
      %2253 = vmatpush1.msra.mxu0 0.0
      %2254 = vmatprep.subr.mxu0 0.0
      %2255 = vmatpush1.msra.mxu0 0.0
      %2256 = vmatprep.subr.mxu0 0.0
      %2257 = vmatpush1.msra.mxu0 0.0
      %2258 = vmatprep.subr.mxu0 0.0
      %2259 = vmatpush1.msra.mxu0 0.0
      %2260 = vmatprep.subr.mxu0 0.0
      %2261 = vmatpush1.msra.mxu0 0.0
      %2262 = vmatprep.subr.mxu0 0.0
      %2263 = vmatpush1.msra.mxu0 0.0
      %2264 = vmatprep.subr.mxu0 0.0
      %2265 = vmatpush1.msra.mxu0 0.0
      %2266 = vmatprep.subr.mxu0 0.0
      %2267 = vmatpush1.msra.mxu0 0.0
      %2268 = vmatprep.subr.mxu0 0.0
      %2269 = vmatpush1.msra.mxu0 %v2236
      %2270 = vmatprep.subr.mxu0 0.0
      %2271 = vmatpush2.msra.mxu0 0.0
      %2272 = vmatprep.subr.mxu0 0.0
      %2273 = vmatpush2.msra.mxu0 0.0
      %2274 = vmatprep.subr.mxu0 0.0
      %2275 = vmatpush2.msra.mxu0 0.0
      %2276 = vmatprep.subr.mxu0 0.0
      %2277 = vmatpush2.msra.mxu0 0.0
      %2278 = vmatprep.subr.mxu0 0.0
      %2279 = vmatpush2.msra.mxu0 0.0
      %2280 = vmatprep.subr.mxu0 0.0
      %2281 = vmatpush2.msra.mxu0 0.0
      %2282 = vmatprep.subr.mxu0 0.0
      %2283 = vmatpush2.msra.mxu0 0.0
      %2284 = vmatprep.subr.mxu0 0.0
      %2285 = vmatpush2.msra.mxu0 0.0
      %2286 = vmatprep.subr.mxu0 0.0
      %2287 = vmatpush2.msra.mxu0 0.0
      %2288 = vmatprep.subr.mxu0 0.0
      %2289 = vmatpush2.msra.mxu0 0.0
      %2290 = vmatprep.subr.mxu0 0.0
      %2291 = vmatpush2.msra.mxu0 0.0
      %2292 = vmatprep.subr.mxu0 0.0
      %2293 = vmatpush2.msra.mxu0 0.0
      %2294 = vmatprep.subr.mxu0 0.0
      %2295 = vmatpush2.msra.mxu0 0.0
      %2296 = vmatprep.subr.mxu0 0.0
      %2297 = vmatpush2.msra.mxu0 0.0
      %2298 = vmatprep.subr.mxu0 0.0
      %2299 = vmatpush2.msra.mxu0 0.0
      %2300 = vmatprep.subr.mxu0 0.0
      %2301 = vmatpush2.msra.mxu0 0.0
      %2302 = vmatprep.mubr.f32.mxu0 0.0
      %2303 = vmatmul.mubr.f32.gmra.mxu0 %v2113
      %v2304 = vpop.f32.mrf.mxu0
      %v2305 = vadd.f32 0.0, %v2304
      %v2306 = vpop.f32.mrf.mxu0
      %2307 = vmatprep.mubr.f32.mxu0 0.0
      %2308 = vmatmul.mubr.f32.gmra.mxu0 %v2116
      %v2309 = vpop.f32.mrf.mxu0
      %v2310 = vadd.f32 0.0, %v2309
      %v2311 = vpop.f32.mrf.mxu0
      %2312 = vmatprep.mubr.f32.mxu0 0.0
      %2313 = vmatmul.mubr.f32.gmra.mxu0 %v2119
      %v2314 = vpop.f32.mrf.mxu0
      %v2315 = vadd.f32 0.0, %v2314
      %v2316 = vpop.f32.mrf.mxu0
      %2317 = vmatprep.mubr.f32.mxu0 0.0
      %2318 = vmatmul.mubr.f32.gmra.mxu0 %v2122
      %v2319 = vpop.f32.mrf.mxu0
      %v2320 = vadd.f32 0.0, %v2319
      %v2321 = vpop.f32.mrf.mxu0
      %2322 = vmatprep.mubr.f32.mxu0 0.0
      %2323 = vmatmul.mubr.f32.gmra.mxu0 %v2125
      %v2324 = vpop.f32.mrf.mxu0
      %v2325 = vadd.f32 0.0, %v2324
      %v2326 = vpop.f32.mrf.mxu0
      %2327 = vmatprep.mubr.f32.mxu0 0.0
      %2328 = vmatmul.mubr.f32.gmra.mxu0 %v2128
      %v2329 = vpop.f32.mrf.mxu0
      %v2330 = vadd.f32 0.0, %v2329
      %v2331 = vpop.f32.mrf.mxu0
      %2332 = vmatprep.mubr.f32.mxu0 0.0
      %2333 = vmatmul.mubr.f32.gmra.mxu0 %v2131
      %v2334 = vpop.f32.mrf.mxu0
      %v2335 = vadd.f32 0.0, %v2334
      %v2336 = vpop.f32.mrf.mxu0
      %2337 = vmatprep.mubr.f32.mxu0 0.0
      %2338 = vmatmul.mubr.f32.gmra.mxu0 %v2134
      %v2339 = vpop.f32.mrf.mxu0
      %v2340 = vadd.f32 0.0, %v2339
      %v2341 = vpop.f32.mrf.mxu0
      %2342 = vmatprep.mubr.f32.mxu0 0.0
      %2343 = vmatmul.mubr.f32.gmra.mxu0 %v2137
      %v2344 = vpop.f32.mrf.mxu0
      %v2345 = vadd.f32 0.0, %v2344
      %v2346 = vpop.f32.mrf.mxu0
      %2347 = vmatprep.mubr.f32.mxu0 0.0
      %2348 = vmatmul.mubr.f32.gmra.mxu0 %v2140
      %v2349 = vpop.f32.mrf.mxu0
      %v2350 = vadd.f32 0.0, %v2349
      %v2351 = vpop.f32.mrf.mxu0
      %2352 = vmatprep.mubr.f32.mxu0 0.0
      %2353 = vmatmul.mubr.f32.gmra.mxu0 %v2143
      %v2354 = vpop.f32.mrf.mxu0
      %v2355 = vadd.f32 0.0, %v2354
      %v2356 = vpop.f32.mrf.mxu0
      %2357 = vmatprep.mubr.f32.mxu0 0.0
      %2358 = vmatmul.mubr.f32.gmra.mxu0 %v2146
      %v2359 = vpop.f32.mrf.mxu0
      %v2360 = vadd.f32 0.0, %v2359
      %v2361 = vpop.f32.mrf.mxu0
      %2362 = vmatprep.mubr.f32.mxu0 0.0
      %2363 = vmatmul.mubr.f32.gmra.mxu0 %v2149
      %v2364 = vpop.f32.mrf.mxu0
      %v2365 = vadd.f32 0.0, %v2364
      %v2366 = vpop.f32.mrf.mxu0
      %2367 = vmatprep.mubr.f32.mxu0 0.0
      %2368 = vmatmul.mubr.f32.gmra.mxu0 %v2152
      %v2369 = vpop.f32.mrf.mxu0
      %v2370 = vadd.f32 0.0, %v2369
      %v2371 = vpop.f32.mrf.mxu0
      %2372 = vmatprep.mubr.f32.mxu0 0.0
      %2373 = vmatmul.mubr.f32.gmra.mxu0 %v2155
      %v2374 = vpop.f32.mrf.mxu0
      %v2375 = vadd.f32 0.0, %v2374
      %v2376 = vpop.f32.mrf.mxu0
      %2377 = vmatprep.mubr.f32.mxu0 0.0
      %2378 = vmatmul.mubr.f32.gmra.mxu0 %v2158
      %v2379 = vpop.f32.mrf.mxu0
      %v2380 = vadd.f32 0.0, %v2379
      %v2381 = vpop.f32.mrf.mxu0
      %2382 = vmatprep.mubr.f32.mxu0 0.0
      %2383 = vmatmul.mubr.f32.gmra.mxu0 %v2161
      %v2384 = vpop.f32.mrf.mxu0
      %v2385 = vadd.f32 0.0, %v2384
      %v2386 = vpop.f32.mrf.mxu0
      %2387 = vmatprep.mubr.f32.mxu0 0.0
      %2388 = vmatmul.mubr.f32.gmra.mxu0 %v2164
      %v2389 = vpop.f32.mrf.mxu0
      %v2390 = vadd.f32 0.0, %v2389
      %v2391 = vpop.f32.mrf.mxu0
      %2392 = vmatprep.mubr.f32.mxu0 0.0
      %2393 = vmatmul.mubr.f32.gmra.mxu0 %v2167
      %v2394 = vpop.f32.mrf.mxu0
      %v2395 = vadd.f32 0.0, %v2394
      %v2396 = vpop.f32.mrf.mxu0
      %2397 = vmatprep.mubr.f32.mxu0 0.0
      %2398 = vmatmul.mubr.f32.gmra.mxu0 %v2170
      %v2399 = vpop.f32.mrf.mxu0
      %v2400 = vadd.f32 0.0, %v2399
      %v2401 = vpop.f32.mrf.mxu0
      %2402 = vmatprep.mubr.f32.mxu0 0.0
      %2403 = vmatmul.mubr.f32.gmra.mxu0 %v2173
      %v2404 = vpop.f32.mrf.mxu0
      %v2405 = vadd.f32 0.0, %v2404
      %v2406 = vpop.f32.mrf.mxu0
      %2407 = vmatprep.mubr.f32.mxu0 0.0
      %2408 = vmatmul.mubr.f32.gmra.mxu0 %v2176
      %v2409 = vpop.f32.mrf.mxu0
      %v2410 = vadd.f32 0.0, %v2409
      %v2411 = vpop.f32.mrf.mxu0
      %2412 = vmatprep.mubr.f32.mxu0 0.0
      %2413 = vmatmul.mubr.f32.gmra.mxu0 %v2179
      %v2414 = vpop.f32.mrf.mxu0
      %v2415 = vadd.f32 0.0, %v2414
      %v2416 = vpop.f32.mrf.mxu0
      %2417 = vmatprep.mubr.f32.mxu0 0.0
      %2418 = vmatmul.mubr.f32.gmra.mxu0 %v2182
      %v2419 = vpop.f32.mrf.mxu0
      %v2420 = vadd.f32 0.0, %v2419
      %v2421 = vpop.f32.mrf.mxu0
      %2422 = vmatprep.mubr.f32.mxu0 0.0
      %2423 = vmatmul.mubr.f32.gmra.mxu0 %v2185
      %v2424 = vpop.f32.mrf.mxu0
      %v2425 = vadd.f32 0.0, %v2424
      %v2426 = vpop.f32.mrf.mxu0
      %2427 = vmatprep.mubr.f32.mxu0 0.0
      %2428 = vmatmul.mubr.f32.gmra.mxu0 %v2188
      %v2429 = vpop.f32.mrf.mxu0
      %v2430 = vadd.f32 0.0, %v2429
      %v2431 = vpop.f32.mrf.mxu0
      %2432 = vmatprep.mubr.f32.mxu0 0.0
      %2433 = vmatmul.mubr.f32.gmra.mxu0 %v2191
      %v2434 = vpop.f32.mrf.mxu0
      %v2435 = vadd.f32 0.0, %v2434
      %v2436 = vpop.f32.mrf.mxu0
      %2437 = vmatprep.mubr.f32.mxu0 0.0
      %2438 = vmatmul.mubr.f32.gmra.mxu0 %v2194
      %v2439 = vpop.f32.mrf.mxu0
      %v2440 = vadd.f32 0.0, %v2439
      %v2441 = vpop.f32.mrf.mxu0
      %2442 = vmatprep.mubr.f32.mxu0 0.0
      %2443 = vmatmul.mubr.f32.gmra.mxu0 %v2197
      %v2444 = vpop.f32.mrf.mxu0
      %v2445 = vadd.f32 0.0, %v2444
      %v2446 = vpop.f32.mrf.mxu0
      %2447 = vmatprep.mubr.f32.mxu0 0.0
      %2448 = vmatmul.mubr.f32.gmra.mxu0 %v2200
      %v2449 = vpop.f32.mrf.mxu0
      %v2450 = vadd.f32 0.0, %v2449
      %v2451 = vpop.f32.mrf.mxu0
      %2452 = vmatprep.mubr.f32.mxu0 0.0
      %2453 = vmatmul.mubr.f32.gmra.mxu0 %v2203
      %v2454 = vpop.f32.mrf.mxu0
      %v2455 = vadd.f32 0.0, %v2454
      %v2456 = vpop.f32.mrf.mxu0
      %2457 = vmatprep.mubr.f32.mxu0 0.0
      %2458 = vmatmul.mubr.f32.gmra.mxu0 %v2206
      %v2459 = vpop.f32.mrf.mxu0
      %v2460 = vadd.f32 0.0, %v2459
      %v2461 = vpop.f32.mrf.mxu0
      %2462 = vmatprep.mubr.f32.mxu0 0.0
      %2463 = vmatmul.mubr.f32.gmra.mxu0 %v2209
      %v2464 = vpop.f32.mrf.mxu0
      %v2465 = vadd.f32 0.0, %v2464
      %v2466 = vpop.f32.mrf.mxu0
      %2467 = vmatprep.mubr.f32.mxu0 0.0
      %2468 = vmatmul.mubr.f32.gmra.mxu0 %v2212
      %v2469 = vpop.f32.mrf.mxu0
      %v2470 = vadd.f32 0.0, %v2469
      %v2471 = vpop.f32.mrf.mxu0
      %2472 = vmatprep.mubr.f32.mxu0 0.0
      %2473 = vmatmul.mubr.f32.gmra.mxu0 %v2215
      %v2474 = vpop.f32.mrf.mxu0
      %v2475 = vadd.f32 0.0, %v2474
      %v2476 = vpop.f32.mrf.mxu0
      %2477 = vmatprep.mubr.f32.mxu0 0.0
      %2478 = vmatmul.mubr.f32.gmra.mxu0 %v2218
      %v2479 = vpop.f32.mrf.mxu0
      %v2480 = vadd.f32 0.0, %v2479
      %v2481 = vpop.f32.mrf.mxu0
      %2482 = vmatprep.mubr.f32.mxu0 0.0
      %2483 = vmatmul.mubr.f32.gmra.mxu0 %v2221
      %v2484 = vpop.f32.mrf.mxu0
      %v2485 = vadd.f32 0.0, %v2484
      %v2486 = vpop.f32.mrf.mxu0
      %2487 = vmatprep.mubr.f32.mxu0 0.0
      %2488 = vmatmul.mubr.f32.gmra.mxu0 %v2224
      %v2489 = vpop.f32.mrf.mxu0
      %v2490 = vadd.f32 0.0, %v2489
      %v2491 = vpop.f32.mrf.mxu0
      %2492 = vmatprep.mubr.f32.mxu0 0.0
      %2493 = vmatmul.mubr.f32.gmra.mxu0 %v2227
      %v2494 = vpop.f32.mrf.mxu0
      %v2495 = vadd.f32 0.0, %v2494
      %v2496 = vpop.f32.mrf.mxu0
      %2497 = vmatprep.mubr.f32.mxu0 0.0
      %2498 = vmatmul.mubr.f32.gmra.mxu0 %v2230
      %v2499 = vpop.f32.mrf.mxu0
      %v2500 = vadd.f32 0.0, %v2499
      %v2501 = vpop.f32.mrf.mxu0
      %2502 = vmatprep.mubr.f32.mxu0 0.0
      %2503 = vmatmul.mubr.f32.gmra.mxu0 %v2233
      %v2504 = vpop.f32.mrf.mxu0
      %v2505 = vadd.f32 0.0, %v2504
      %v2506 = vpop.f32.mrf.mxu0
      %2507 = vdwg.mxu0
      %v2508 = vadd.f32 %v1865, %v2305
      %v2509 = vadd.f32 %v1870, %v2310
      %v2510 = vadd.f32 %v1875, %v2315
      %v2511 = vadd.f32 %v1880, %v2320
      %v2512 = vadd.f32 %v1885, %v2325
      %v2513 = vadd.f32 %v1890, %v2330
      %v2514 = vadd.f32 %v1895, %v2335
      %v2515 = vadd.f32 %v1900, %v2340
      %v2516 = vadd.f32 %v1905, %v2345
      %v2517 = vadd.f32 %v1910, %v2350
      %v2518 = vadd.f32 %v1915, %v2355
      %v2519 = vadd.f32 %v1920, %v2360
      %v2520 = vadd.f32 %v1925, %v2365
      %v2521 = vadd.f32 %v1930, %v2370
      %v2522 = vadd.f32 %v1935, %v2375
      %v2523 = vadd.f32 %v1940, %v2380
      %v2524 = vadd.f32 %v1945, %v2385
      %v2525 = vadd.f32 %v1950, %v2390
      %v2526 = vadd.f32 %v1955, %v2395
      %v2527 = vadd.f32 %v1960, %v2400
      %v2528 = vadd.f32 %v1965, %v2405
      %v2529 = vadd.f32 %v1970, %v2410
      %v2530 = vadd.f32 %v1975, %v2415
      %v2531 = vadd.f32 %v1980, %v2420
      %v2532 = vadd.f32 %v1985, %v2425
      %v2533 = vadd.f32 %v1990, %v2430
      %v2534 = vadd.f32 %v1995, %v2435
      %v2535 = vadd.f32 %v2000, %v2440
      %v2536 = vadd.f32 %v2005, %v2445
      %v2537 = vadd.f32 %v2010, %v2450
      %v2538 = vadd.f32 %v2015, %v2455
      %v2539 = vadd.f32 %v2020, %v2460
      %v2540 = vadd.f32 %v2025, %v2465
      %v2541 = vadd.f32 %v2030, %v2470
      %v2542 = vadd.f32 %v2035, %v2475
      %v2543 = vadd.f32 %v2040, %v2480
      %v2544 = vadd.f32 %v2045, %v2485
      %v2545 = vadd.f32 %v2050, %v2490
      %v2546 = vadd.f32 %v2055, %v2495
      %v2547 = vadd.f32 %v2060, %v2500
      %v2548 = vadd.f32 %v2065, %v2505
      %v2549 = vld [vmem:[#allocation2 + $0x17] sm:$0xff]
      %v2550 = vld [vmem:[#allocation2 + $0x1f] sm:$0xff]
      %v2551 = vld [vmem:[#allocation2 + $0x27] sm:$0xff]
      %v2552 = vld [vmem:[#allocation2 + $0x2f] sm:$0xff]
      %v2553 = vld [vmem:[#allocation2 + $0x37] sm:$0xff]
      %v2554 = vld [vmem:[#allocation2 + $0x3f] sm:$0xff]
      %v2555 = vld [vmem:[#allocation2 + $0x47] sm:$0xff]
      %v2556 = vld [vmem:[#allocation2 + $0x4f] sm:$0xff]
      %v2557 = vld [vmem:[#allocation2 + $0x57] sm:$0xff]
      %v2558 = vld [vmem:[#allocation2 + $0x5f] sm:$0xff]
      %v2559 = vld [vmem:[#allocation2 + $0x67] sm:$0xff]
      %v2560 = vld [vmem:[#allocation2 + $0x6f] sm:$0xff]
      %v2561 = vld [vmem:[#allocation2 + $0x77] sm:$0xff]
      %v2562 = vld [vmem:[#allocation2 + $0x7f] sm:$0xff]
      %v2563 = vld [vmem:[#allocation2 + $0x87] sm:$0xff]
      %v2564 = vld [vmem:[#allocation2 + $0x8f] sm:$0xff]
      %v2565 = vld [vmem:[#allocation2 + $0x97] sm:$0xff]
      %v2566 = vld [vmem:[#allocation2 + $0x9f] sm:$0xff]
      %v2567 = vld [vmem:[#allocation2 + $0xa7] sm:$0xff]
      %v2568 = vld [vmem:[#allocation2 + $0xaf] sm:$0xff]
      %v2569 = vld [vmem:[#allocation2 + $0xb7] sm:$0xff]
      %v2570 = vld [vmem:[#allocation2 + $0xbf] sm:$0xff]
      %v2571 = vld [vmem:[#allocation2 + $0xc7] sm:$0xff]
      %v2572 = vld [vmem:[#allocation2 + $0xcf] sm:$0xff]
      %v2573 = vld [vmem:[#allocation2 + $0xd7] sm:$0xff]
      %v2574 = vld [vmem:[#allocation2 + $0xdf] sm:$0xff]
      %v2575 = vld [vmem:[#allocation2 + $0xe7] sm:$0xff]
      %v2576 = vld [vmem:[#allocation2 + $0xef] sm:$0xff]
      %v2577 = vld [vmem:[#allocation2 + $0xf7] sm:$0xff]
      %v2578 = vld [vmem:[#allocation2 + $0xff] sm:$0xff]
      %v2579 = vld [vmem:[#allocation2 + $0x107] sm:$0xff]
      %v2580 = vld [vmem:[#allocation2 + $0x10f] sm:$0xff]
      %v2581 = vld [vmem:[#allocation2 + $0x117] sm:$0xff]
      %v2582 = vld [vmem:[#allocation2 + $0x11f] sm:$0xff]
      %v2583 = vld [vmem:[#allocation2 + $0x127] sm:$0xff]
      %v2584 = vld [vmem:[#allocation2 + $0x12f] sm:$0xff]
      %v2585 = vld [vmem:[#allocation2 + $0x137] sm:$0xff]
      %v2586 = vld [vmem:[#allocation2 + $0x13f] sm:$0xff]
      %v2587 = vld [vmem:[#allocation2 + $0x147] sm:$0xff]
      %v2588 = vld [vmem:[#allocation2 + $0x14f] sm:$0xff]
      %v2589 = vld [vmem:[#allocation2 + $0x157] sm:$0xf]
      %s2590 = scalar_lea.vmem %s337, 3
      %v2591 = vld [vmem:[%s2590] sm:$0x1]
      %v2592 = vunpack.c.l.bf16 %v2591
      %v2594 = vsel %vm351, %v2549, 0
      %v2597 = vsel %vm351, %v2550, 0
      %v2600 = vsel %vm351, %v2551, 0
      %v2603 = vsel %vm351, %v2552, 0
      %v2606 = vsel %vm351, %v2553, 0
      %v2609 = vsel %vm351, %v2554, 0
      %v2612 = vsel %vm351, %v2555, 0
      %v2615 = vsel %vm351, %v2556, 0
      %v2618 = vsel %vm351, %v2557, 0
      %v2621 = vsel %vm351, %v2558, 0
      %v2624 = vsel %vm351, %v2559, 0
      %v2627 = vsel %vm351, %v2560, 0
      %v2630 = vsel %vm351, %v2561, 0
      %v2633 = vsel %vm351, %v2562, 0
      %v2636 = vsel %vm351, %v2563, 0
      %v2639 = vsel %vm351, %v2564, 0
      %v2642 = vsel %vm351, %v2565, 0
      %v2645 = vsel %vm351, %v2566, 0
      %v2648 = vsel %vm351, %v2567, 0
      %v2651 = vsel %vm351, %v2568, 0
      %v2654 = vsel %vm351, %v2569, 0
      %v2657 = vsel %vm351, %v2570, 0
      %v2660 = vsel %vm351, %v2571, 0
      %v2663 = vsel %vm351, %v2572, 0
      %v2666 = vsel %vm351, %v2573, 0
      %v2669 = vsel %vm351, %v2574, 0
      %v2672 = vsel %vm351, %v2575, 0
      %v2675 = vsel %vm351, %v2576, 0
      %v2678 = vsel %vm351, %v2577, 0
      %v2681 = vsel %vm351, %v2578, 0
      %v2684 = vsel %vm351, %v2579, 0
      %v2687 = vsel %vm351, %v2580, 0
      %v2690 = vsel %vm351, %v2581, 0
      %v2693 = vsel %vm351, %v2582, 0
      %v2696 = vsel %vm351, %v2583, 0
      %v2699 = vsel %vm351, %v2584, 0
      %v2702 = vsel %vm351, %v2585, 0
      %v2705 = vsel %vm351, %v2586, 0
      %v2708 = vsel %vm351, %v2587, 0
      %v2711 = vsel %vm351, %v2588, 0
      %v2714 = vsel %vm351, %v2589, 0
      %v2717 = vsel %vm616, %v2592, 0
      %2719 = vmatprep.subr.mxu0 0.0
      %2720 = vmatpush1.msra.mxu0 0.0
      %2721 = vmatprep.subr.mxu0 0.0
      %2722 = vmatpush1.msra.mxu0 0.0
      %2723 = vmatprep.subr.mxu0 0.0
      %2724 = vmatpush1.msra.mxu0 0.0
      %2725 = vmatprep.subr.mxu0 0.0
      %2726 = vmatpush1.msra.mxu0 0.0
      %2727 = vmatprep.subr.mxu0 0.0
      %2728 = vmatpush1.msra.mxu0 0.0
      %2729 = vmatprep.subr.mxu0 0.0
      %2730 = vmatpush1.msra.mxu0 0.0
      %2731 = vmatprep.subr.mxu0 0.0
      %2732 = vmatpush1.msra.mxu0 0.0
      %2733 = vmatprep.subr.mxu0 0.0
      %2734 = vmatpush1.msra.mxu0 0.0
      %2735 = vmatprep.subr.mxu0 0.0
      %2736 = vmatpush1.msra.mxu0 0.0
      %2737 = vmatprep.subr.mxu0 0.0
      %2738 = vmatpush1.msra.mxu0 0.0
      %2739 = vmatprep.subr.mxu0 0.0
      %2740 = vmatpush1.msra.mxu0 0.0
      %2741 = vmatprep.subr.mxu0 0.0
      %2742 = vmatpush1.msra.mxu0 0.0
      %2743 = vmatprep.subr.mxu0 0.0
      %2744 = vmatpush1.msra.mxu0 0.0
      %2745 = vmatprep.subr.mxu0 0.0
      %2746 = vmatpush1.msra.mxu0 0.0
      %2747 = vmatprep.subr.mxu0 0.0
      %2748 = vmatpush1.msra.mxu0 0.0
      %2749 = vmatprep.subr.mxu0 0.0
      %2750 = vmatpush1.msra.mxu0 %v2717
      %2751 = vmatprep.subr.mxu0 0.0
      %2752 = vmatpush2.msra.mxu0 0.0
      %2753 = vmatprep.subr.mxu0 0.0
      %2754 = vmatpush2.msra.mxu0 0.0
      %2755 = vmatprep.subr.mxu0 0.0
      %2756 = vmatpush2.msra.mxu0 0.0
      %2757 = vmatprep.subr.mxu0 0.0
      %2758 = vmatpush2.msra.mxu0 0.0
      %2759 = vmatprep.subr.mxu0 0.0
      %2760 = vmatpush2.msra.mxu0 0.0
      %2761 = vmatprep.subr.mxu0 0.0
      %2762 = vmatpush2.msra.mxu0 0.0
      %2763 = vmatprep.subr.mxu0 0.0
      %2764 = vmatpush2.msra.mxu0 0.0
      %2765 = vmatprep.subr.mxu0 0.0
      %2766 = vmatpush2.msra.mxu0 0.0
      %2767 = vmatprep.subr.mxu0 0.0
      %2768 = vmatpush2.msra.mxu0 0.0
      %2769 = vmatprep.subr.mxu0 0.0
      %2770 = vmatpush2.msra.mxu0 0.0
      %2771 = vmatprep.subr.mxu0 0.0
      %2772 = vmatpush2.msra.mxu0 0.0
      %2773 = vmatprep.subr.mxu0 0.0
      %2774 = vmatpush2.msra.mxu0 0.0
      %2775 = vmatprep.subr.mxu0 0.0
      %2776 = vmatpush2.msra.mxu0 0.0
      %2777 = vmatprep.subr.mxu0 0.0
      %2778 = vmatpush2.msra.mxu0 0.0
      %2779 = vmatprep.subr.mxu0 0.0
      %2780 = vmatpush2.msra.mxu0 0.0
      %2781 = vmatprep.subr.mxu0 0.0
      %2782 = vmatpush2.msra.mxu0 0.0
      %2783 = vmatprep.mubr.f32.mxu0 0.0
      %2784 = vmatmul.mubr.f32.gmra.mxu0 %v2594
      %v2785 = vpop.f32.mrf.mxu0
      %v2786 = vadd.f32 0.0, %v2785
      %v2787 = vpop.f32.mrf.mxu0
      %2788 = vmatprep.mubr.f32.mxu0 0.0
      %2789 = vmatmul.mubr.f32.gmra.mxu0 %v2597
      %v2790 = vpop.f32.mrf.mxu0
      %v2791 = vadd.f32 0.0, %v2790
      %v2792 = vpop.f32.mrf.mxu0
      %2793 = vmatprep.mubr.f32.mxu0 0.0
      %2794 = vmatmul.mubr.f32.gmra.mxu0 %v2600
      %v2795 = vpop.f32.mrf.mxu0
      %v2796 = vadd.f32 0.0, %v2795
      %v2797 = vpop.f32.mrf.mxu0
      %2798 = vmatprep.mubr.f32.mxu0 0.0
      %2799 = vmatmul.mubr.f32.gmra.mxu0 %v2603
      %v2800 = vpop.f32.mrf.mxu0
      %v2801 = vadd.f32 0.0, %v2800
      %v2802 = vpop.f32.mrf.mxu0
      %2803 = vmatprep.mubr.f32.mxu0 0.0
      %2804 = vmatmul.mubr.f32.gmra.mxu0 %v2606
      %v2805 = vpop.f32.mrf.mxu0
      %v2806 = vadd.f32 0.0, %v2805
      %v2807 = vpop.f32.mrf.mxu0
      %2808 = vmatprep.mubr.f32.mxu0 0.0
      %2809 = vmatmul.mubr.f32.gmra.mxu0 %v2609
      %v2810 = vpop.f32.mrf.mxu0
      %v2811 = vadd.f32 0.0, %v2810
      %v2812 = vpop.f32.mrf.mxu0
      %2813 = vmatprep.mubr.f32.mxu0 0.0
      %2814 = vmatmul.mubr.f32.gmra.mxu0 %v2612
      %v2815 = vpop.f32.mrf.mxu0
      %v2816 = vadd.f32 0.0, %v2815
      %v2817 = vpop.f32.mrf.mxu0
      %2818 = vmatprep.mubr.f32.mxu0 0.0
      %2819 = vmatmul.mubr.f32.gmra.mxu0 %v2615
      %v2820 = vpop.f32.mrf.mxu0
      %v2821 = vadd.f32 0.0, %v2820
      %v2822 = vpop.f32.mrf.mxu0
      %2823 = vmatprep.mubr.f32.mxu0 0.0
      %2824 = vmatmul.mubr.f32.gmra.mxu0 %v2618
      %v2825 = vpop.f32.mrf.mxu0
      %v2826 = vadd.f32 0.0, %v2825
      %v2827 = vpop.f32.mrf.mxu0
      %2828 = vmatprep.mubr.f32.mxu0 0.0
      %2829 = vmatmul.mubr.f32.gmra.mxu0 %v2621
      %v2830 = vpop.f32.mrf.mxu0
      %v2831 = vadd.f32 0.0, %v2830
      %v2832 = vpop.f32.mrf.mxu0
      %2833 = vmatprep.mubr.f32.mxu0 0.0
      %2834 = vmatmul.mubr.f32.gmra.mxu0 %v2624
      %v2835 = vpop.f32.mrf.mxu0
      %v2836 = vadd.f32 0.0, %v2835
      %v2837 = vpop.f32.mrf.mxu0
      %2838 = vmatprep.mubr.f32.mxu0 0.0
      %2839 = vmatmul.mubr.f32.gmra.mxu0 %v2627
      %v2840 = vpop.f32.mrf.mxu0
      %v2841 = vadd.f32 0.0, %v2840
      %v2842 = vpop.f32.mrf.mxu0
      %2843 = vmatprep.mubr.f32.mxu0 0.0
      %2844 = vmatmul.mubr.f32.gmra.mxu0 %v2630
      %v2845 = vpop.f32.mrf.mxu0
      %v2846 = vadd.f32 0.0, %v2845
      %v2847 = vpop.f32.mrf.mxu0
      %2848 = vmatprep.mubr.f32.mxu0 0.0
      %2849 = vmatmul.mubr.f32.gmra.mxu0 %v2633
      %v2850 = vpop.f32.mrf.mxu0
      %v2851 = vadd.f32 0.0, %v2850
      %v2852 = vpop.f32.mrf.mxu0
      %2853 = vmatprep.mubr.f32.mxu0 0.0
      %2854 = vmatmul.mubr.f32.gmra.mxu0 %v2636
      %v2855 = vpop.f32.mrf.mxu0
      %v2856 = vadd.f32 0.0, %v2855
      %v2857 = vpop.f32.mrf.mxu0
      %2858 = vmatprep.mubr.f32.mxu0 0.0
      %2859 = vmatmul.mubr.f32.gmra.mxu0 %v2639
      %v2860 = vpop.f32.mrf.mxu0
      %v2861 = vadd.f32 0.0, %v2860
      %v2862 = vpop.f32.mrf.mxu0
      %2863 = vmatprep.mubr.f32.mxu0 0.0
      %2864 = vmatmul.mubr.f32.gmra.mxu0 %v2642
      %v2865 = vpop.f32.mrf.mxu0
      %v2866 = vadd.f32 0.0, %v2865
      %v2867 = vpop.f32.mrf.mxu0
      %2868 = vmatprep.mubr.f32.mxu0 0.0
      %2869 = vmatmul.mubr.f32.gmra.mxu0 %v2645
      %v2870 = vpop.f32.mrf.mxu0
      %v2871 = vadd.f32 0.0, %v2870
      %v2872 = vpop.f32.mrf.mxu0
      %2873 = vmatprep.mubr.f32.mxu0 0.0
      %2874 = vmatmul.mubr.f32.gmra.mxu0 %v2648
      %v2875 = vpop.f32.mrf.mxu0
      %v2876 = vadd.f32 0.0, %v2875
      %v2877 = vpop.f32.mrf.mxu0
      %2878 = vmatprep.mubr.f32.mxu0 0.0
      %2879 = vmatmul.mubr.f32.gmra.mxu0 %v2651
      %v2880 = vpop.f32.mrf.mxu0
      %v2881 = vadd.f32 0.0, %v2880
      %v2882 = vpop.f32.mrf.mxu0
      %2883 = vmatprep.mubr.f32.mxu0 0.0
      %2884 = vmatmul.mubr.f32.gmra.mxu0 %v2654
      %v2885 = vpop.f32.mrf.mxu0
      %v2886 = vadd.f32 0.0, %v2885
      %v2887 = vpop.f32.mrf.mxu0
      %2888 = vmatprep.mubr.f32.mxu0 0.0
      %2889 = vmatmul.mubr.f32.gmra.mxu0 %v2657
      %v2890 = vpop.f32.mrf.mxu0
      %v2891 = vadd.f32 0.0, %v2890
      %v2892 = vpop.f32.mrf.mxu0
      %2893 = vmatprep.mubr.f32.mxu0 0.0
      %2894 = vmatmul.mubr.f32.gmra.mxu0 %v2660
      %v2895 = vpop.f32.mrf.mxu0
      %v2896 = vadd.f32 0.0, %v2895
      %v2897 = vpop.f32.mrf.mxu0
      %2898 = vmatprep.mubr.f32.mxu0 0.0
      %2899 = vmatmul.mubr.f32.gmra.mxu0 %v2663
      %v2900 = vpop.f32.mrf.mxu0
      %v2901 = vadd.f32 0.0, %v2900
      %v2902 = vpop.f32.mrf.mxu0
      %2903 = vmatprep.mubr.f32.mxu0 0.0
      %2904 = vmatmul.mubr.f32.gmra.mxu0 %v2666
      %v2905 = vpop.f32.mrf.mxu0
      %v2906 = vadd.f32 0.0, %v2905
      %v2907 = vpop.f32.mrf.mxu0
      %2908 = vmatprep.mubr.f32.mxu0 0.0
      %2909 = vmatmul.mubr.f32.gmra.mxu0 %v2669
      %v2910 = vpop.f32.mrf.mxu0
      %v2911 = vadd.f32 0.0, %v2910
      %v2912 = vpop.f32.mrf.mxu0
      %2913 = vmatprep.mubr.f32.mxu0 0.0
      %2914 = vmatmul.mubr.f32.gmra.mxu0 %v2672
      %v2915 = vpop.f32.mrf.mxu0
      %v2916 = vadd.f32 0.0, %v2915
      %v2917 = vpop.f32.mrf.mxu0
      %2918 = vmatprep.mubr.f32.mxu0 0.0
      %2919 = vmatmul.mubr.f32.gmra.mxu0 %v2675
      %v2920 = vpop.f32.mrf.mxu0
      %v2921 = vadd.f32 0.0, %v2920
      %v2922 = vpop.f32.mrf.mxu0
      %2923 = vmatprep.mubr.f32.mxu0 0.0
      %2924 = vmatmul.mubr.f32.gmra.mxu0 %v2678
      %v2925 = vpop.f32.mrf.mxu0
      %v2926 = vadd.f32 0.0, %v2925
      %v2927 = vpop.f32.mrf.mxu0
      %2928 = vmatprep.mubr.f32.mxu0 0.0
      %2929 = vmatmul.mubr.f32.gmra.mxu0 %v2681
      %v2930 = vpop.f32.mrf.mxu0
      %v2931 = vadd.f32 0.0, %v2930
      %v2932 = vpop.f32.mrf.mxu0
      %2933 = vmatprep.mubr.f32.mxu0 0.0
      %2934 = vmatmul.mubr.f32.gmra.mxu0 %v2684
      %v2935 = vpop.f32.mrf.mxu0
      %v2936 = vadd.f32 0.0, %v2935
      %v2937 = vpop.f32.mrf.mxu0
      %2938 = vmatprep.mubr.f32.mxu0 0.0
      %2939 = vmatmul.mubr.f32.gmra.mxu0 %v2687
      %v2940 = vpop.f32.mrf.mxu0
      %v2941 = vadd.f32 0.0, %v2940
      %v2942 = vpop.f32.mrf.mxu0
      %2943 = vmatprep.mubr.f32.mxu0 0.0
      %2944 = vmatmul.mubr.f32.gmra.mxu0 %v2690
      %v2945 = vpop.f32.mrf.mxu0
      %v2946 = vadd.f32 0.0, %v2945
      %v2947 = vpop.f32.mrf.mxu0
      %2948 = vmatprep.mubr.f32.mxu0 0.0
      %2949 = vmatmul.mubr.f32.gmra.mxu0 %v2693
      %v2950 = vpop.f32.mrf.mxu0
      %v2951 = vadd.f32 0.0, %v2950
      %v2952 = vpop.f32.mrf.mxu0
      %2953 = vmatprep.mubr.f32.mxu0 0.0
      %2954 = vmatmul.mubr.f32.gmra.mxu0 %v2696
      %v2955 = vpop.f32.mrf.mxu0
      %v2956 = vadd.f32 0.0, %v2955
      %v2957 = vpop.f32.mrf.mxu0
      %2958 = vmatprep.mubr.f32.mxu0 0.0
      %2959 = vmatmul.mubr.f32.gmra.mxu0 %v2699
      %v2960 = vpop.f32.mrf.mxu0
      %v2961 = vadd.f32 0.0, %v2960
      %v2962 = vpop.f32.mrf.mxu0
      %2963 = vmatprep.mubr.f32.mxu0 0.0
      %2964 = vmatmul.mubr.f32.gmra.mxu0 %v2702
      %v2965 = vpop.f32.mrf.mxu0
      %v2966 = vadd.f32 0.0, %v2965
      %v2967 = vpop.f32.mrf.mxu0
      %2968 = vmatprep.mubr.f32.mxu0 0.0
      %2969 = vmatmul.mubr.f32.gmra.mxu0 %v2705
      %v2970 = vpop.f32.mrf.mxu0
      %v2971 = vadd.f32 0.0, %v2970
      %v2972 = vpop.f32.mrf.mxu0
      %2973 = vmatprep.mubr.f32.mxu0 0.0
      %2974 = vmatmul.mubr.f32.gmra.mxu0 %v2708
      %v2975 = vpop.f32.mrf.mxu0
      %v2976 = vadd.f32 0.0, %v2975
      %v2977 = vpop.f32.mrf.mxu0
      %2978 = vmatprep.mubr.f32.mxu0 0.0
      %2979 = vmatmul.mubr.f32.gmra.mxu0 %v2711
      %v2980 = vpop.f32.mrf.mxu0
      %v2981 = vadd.f32 0.0, %v2980
      %v2982 = vpop.f32.mrf.mxu0
      %2983 = vmatprep.mubr.f32.mxu0 0.0
      %2984 = vmatmul.mubr.f32.gmra.mxu0 %v2714
      %v2985 = vpop.f32.mrf.mxu0
      %v2986 = vadd.f32 0.0, %v2985
      %v2987 = vpop.f32.mrf.mxu0
      %2988 = vdwg.mxu0
      %v2989 = vadd.f32 %v2508, %v2786
      %v2990 = vadd.f32 %v2509, %v2791
      %v2991 = vadd.f32 %v2510, %v2796
      %v2992 = vadd.f32 %v2511, %v2801
      %v2993 = vadd.f32 %v2512, %v2806
      %v2994 = vadd.f32 %v2513, %v2811
      %v2995 = vadd.f32 %v2514, %v2816
      %v2996 = vadd.f32 %v2515, %v2821
      %v2997 = vadd.f32 %v2516, %v2826
      %v2998 = vadd.f32 %v2517, %v2831
      %v2999 = vadd.f32 %v2518, %v2836
      %v3000 = vadd.f32 %v2519, %v2841
      %v3001 = vadd.f32 %v2520, %v2846
      %v3002 = vadd.f32 %v2521, %v2851
      %v3003 = vadd.f32 %v2522, %v2856
      %v3004 = vadd.f32 %v2523, %v2861
      %v3005 = vadd.f32 %v2524, %v2866
      %v3006 = vadd.f32 %v2525, %v2871
      %v3007 = vadd.f32 %v2526, %v2876
      %v3008 = vadd.f32 %v2527, %v2881
      %v3009 = vadd.f32 %v2528, %v2886
      %v3010 = vadd.f32 %v2529, %v2891
      %v3011 = vadd.f32 %v2530, %v2896
      %v3012 = vadd.f32 %v2531, %v2901
      %v3013 = vadd.f32 %v2532, %v2906
      %v3014 = vadd.f32 %v2533, %v2911
      %v3015 = vadd.f32 %v2534, %v2916
      %v3016 = vadd.f32 %v2535, %v2921
      %v3017 = vadd.f32 %v2536, %v2926
      %v3018 = vadd.f32 %v2537, %v2931
      %v3019 = vadd.f32 %v2538, %v2936
      %v3020 = vadd.f32 %v2539, %v2941
      %v3021 = vadd.f32 %v2540, %v2946
      %v3022 = vadd.f32 %v2541, %v2951
      %v3023 = vadd.f32 %v2542, %v2956
      %v3024 = vadd.f32 %v2543, %v2961
      %v3025 = vadd.f32 %v2544, %v2966
      %v3026 = vadd.f32 %v2545, %v2971
      %v3027 = vadd.f32 %v2546, %v2976
      %v3028 = vadd.f32 %v2547, %v2981
      %v3029 = vadd.f32 %v2548, %v2986
      %v3030 = vld [vmem:[#allocation2 + $0x18] sm:$0xff]
      %v3031 = vld [vmem:[#allocation2 + $0x20] sm:$0xff]
      %v3032 = vld [vmem:[#allocation2 + $0x28] sm:$0xff]
      %v3033 = vld [vmem:[#allocation2 + $0x30] sm:$0xff]
      %v3034 = vld [vmem:[#allocation2 + $0x38] sm:$0xff]
      %v3035 = vld [vmem:[#allocation2 + $0x40] sm:$0xff]
      %v3036 = vld [vmem:[#allocation2 + $0x48] sm:$0xff]
      %v3037 = vld [vmem:[#allocation2 + $0x50] sm:$0xff]
      %v3038 = vld [vmem:[#allocation2 + $0x58] sm:$0xff]
      %v3039 = vld [vmem:[#allocation2 + $0x60] sm:$0xff]
      %v3040 = vld [vmem:[#allocation2 + $0x68] sm:$0xff]
      %v3041 = vld [vmem:[#allocation2 + $0x70] sm:$0xff]
      %v3042 = vld [vmem:[#allocation2 + $0x78] sm:$0xff]
      %v3043 = vld [vmem:[#allocation2 + $0x80] sm:$0xff]
      %v3044 = vld [vmem:[#allocation2 + $0x88] sm:$0xff]
      %v3045 = vld [vmem:[#allocation2 + $0x90] sm:$0xff]
      %v3046 = vld [vmem:[#allocation2 + $0x98] sm:$0xff]
      %v3047 = vld [vmem:[#allocation2 + $0xa0] sm:$0xff]
      %v3048 = vld [vmem:[#allocation2 + $0xa8] sm:$0xff]
      %v3049 = vld [vmem:[#allocation2 + $0xb0] sm:$0xff]
      %v3050 = vld [vmem:[#allocation2 + $0xb8] sm:$0xff]
      %v3051 = vld [vmem:[#allocation2 + $0xc0] sm:$0xff]
      %v3052 = vld [vmem:[#allocation2 + $0xc8] sm:$0xff]
      %v3053 = vld [vmem:[#allocation2 + $0xd0] sm:$0xff]
      %v3054 = vld [vmem:[#allocation2 + $0xd8] sm:$0xff]
      %v3055 = vld [vmem:[#allocation2 + $0xe0] sm:$0xff]
      %v3056 = vld [vmem:[#allocation2 + $0xe8] sm:$0xff]
      %v3057 = vld [vmem:[#allocation2 + $0xf0] sm:$0xff]
      %v3058 = vld [vmem:[#allocation2 + $0xf8] sm:$0xff]
      %v3059 = vld [vmem:[#allocation2 + $0x100] sm:$0xff]
      %v3060 = vld [vmem:[#allocation2 + $0x108] sm:$0xff]
      %v3061 = vld [vmem:[#allocation2 + $0x110] sm:$0xff]
      %v3062 = vld [vmem:[#allocation2 + $0x118] sm:$0xff]
      %v3063 = vld [vmem:[#allocation2 + $0x120] sm:$0xff]
      %v3064 = vld [vmem:[#allocation2 + $0x128] sm:$0xff]
      %v3065 = vld [vmem:[#allocation2 + $0x130] sm:$0xff]
      %v3066 = vld [vmem:[#allocation2 + $0x138] sm:$0xff]
      %v3067 = vld [vmem:[#allocation2 + $0x140] sm:$0xff]
      %v3068 = vld [vmem:[#allocation2 + $0x148] sm:$0xff]
      %v3069 = vld [vmem:[#allocation2 + $0x150] sm:$0xff]
      %v3070 = vld [vmem:[#allocation2 + $0x158] sm:$0xf]
      %s3071 = scalar_lea.vmem %s337, 4
      %v3072 = vld [vmem:[%s3071] sm:$0x1]
      %v3073 = vunpack.c.l.bf16 %v3072
      %v3075 = vsel %vm351, %v3030, 0
      %v3078 = vsel %vm351, %v3031, 0
      %v3081 = vsel %vm351, %v3032, 0
      %v3084 = vsel %vm351, %v3033, 0
      %v3087 = vsel %vm351, %v3034, 0
      %v3090 = vsel %vm351, %v3035, 0
      %v3093 = vsel %vm351, %v3036, 0
      %v3096 = vsel %vm351, %v3037, 0
      %v3099 = vsel %vm351, %v3038, 0
      %v3102 = vsel %vm351, %v3039, 0
      %v3105 = vsel %vm351, %v3040, 0
      %v3108 = vsel %vm351, %v3041, 0
      %v3111 = vsel %vm351, %v3042, 0
      %v3114 = vsel %vm351, %v3043, 0
      %v3117 = vsel %vm351, %v3044, 0
      %v3120 = vsel %vm351, %v3045, 0
      %v3123 = vsel %vm351, %v3046, 0
      %v3126 = vsel %vm351, %v3047, 0
      %v3129 = vsel %vm351, %v3048, 0
      %v3132 = vsel %vm351, %v3049, 0
      %v3135 = vsel %vm351, %v3050, 0
      %v3138 = vsel %vm351, %v3051, 0
      %v3141 = vsel %vm351, %v3052, 0
      %v3144 = vsel %vm351, %v3053, 0
      %v3147 = vsel %vm351, %v3054, 0
      %v3150 = vsel %vm351, %v3055, 0
      %v3153 = vsel %vm351, %v3056, 0
      %v3156 = vsel %vm351, %v3057, 0
      %v3159 = vsel %vm351, %v3058, 0
      %v3162 = vsel %vm351, %v3059, 0
      %v3165 = vsel %vm351, %v3060, 0
      %v3168 = vsel %vm351, %v3061, 0
      %v3171 = vsel %vm351, %v3062, 0
      %v3174 = vsel %vm351, %v3063, 0
      %v3177 = vsel %vm351, %v3064, 0
      %v3180 = vsel %vm351, %v3065, 0
      %v3183 = vsel %vm351, %v3066, 0
      %v3186 = vsel %vm351, %v3067, 0
      %v3189 = vsel %vm351, %v3068, 0
      %v3192 = vsel %vm351, %v3069, 0
      %v3195 = vsel %vm351, %v3070, 0
      %v3198 = vsel %vm616, %v3073, 0
      %3200 = vmatprep.subr.mxu0 0.0
      %3201 = vmatpush1.msra.mxu0 0.0
      %3202 = vmatprep.subr.mxu0 0.0
      %3203 = vmatpush1.msra.mxu0 0.0
      %3204 = vmatprep.subr.mxu0 0.0
      %3205 = vmatpush1.msra.mxu0 0.0
      %3206 = vmatprep.subr.mxu0 0.0
      %3207 = vmatpush1.msra.mxu0 0.0
      %3208 = vmatprep.subr.mxu0 0.0
      %3209 = vmatpush1.msra.mxu0 0.0
      %3210 = vmatprep.subr.mxu0 0.0
      %3211 = vmatpush1.msra.mxu0 0.0
      %3212 = vmatprep.subr.mxu0 0.0
      %3213 = vmatpush1.msra.mxu0 0.0
      %3214 = vmatprep.subr.mxu0 0.0
      %3215 = vmatpush1.msra.mxu0 0.0
      %3216 = vmatprep.subr.mxu0 0.0
      %3217 = vmatpush1.msra.mxu0 0.0
      %3218 = vmatprep.subr.mxu0 0.0
      %3219 = vmatpush1.msra.mxu0 0.0
      %3220 = vmatprep.subr.mxu0 0.0
      %3221 = vmatpush1.msra.mxu0 0.0
      %3222 = vmatprep.subr.mxu0 0.0
      %3223 = vmatpush1.msra.mxu0 0.0
      %3224 = vmatprep.subr.mxu0 0.0
      %3225 = vmatpush1.msra.mxu0 0.0
      %3226 = vmatprep.subr.mxu0 0.0
      %3227 = vmatpush1.msra.mxu0 0.0
      %3228 = vmatprep.subr.mxu0 0.0
      %3229 = vmatpush1.msra.mxu0 0.0
      %3230 = vmatprep.subr.mxu0 0.0
      %3231 = vmatpush1.msra.mxu0 %v3198
      %3232 = vmatprep.subr.mxu0 0.0
      %3233 = vmatpush2.msra.mxu0 0.0
      %3234 = vmatprep.subr.mxu0 0.0
      %3235 = vmatpush2.msra.mxu0 0.0
      %3236 = vmatprep.subr.mxu0 0.0
      %3237 = vmatpush2.msra.mxu0 0.0
      %3238 = vmatprep.subr.mxu0 0.0
      %3239 = vmatpush2.msra.mxu0 0.0
      %3240 = vmatprep.subr.mxu0 0.0
      %3241 = vmatpush2.msra.mxu0 0.0
      %3242 = vmatprep.subr.mxu0 0.0
      %3243 = vmatpush2.msra.mxu0 0.0
      %3244 = vmatprep.subr.mxu0 0.0
      %3245 = vmatpush2.msra.mxu0 0.0
      %3246 = vmatprep.subr.mxu0 0.0
      %3247 = vmatpush2.msra.mxu0 0.0
      %3248 = vmatprep.subr.mxu0 0.0
      %3249 = vmatpush2.msra.mxu0 0.0
      %3250 = vmatprep.subr.mxu0 0.0
      %3251 = vmatpush2.msra.mxu0 0.0
      %3252 = vmatprep.subr.mxu0 0.0
      %3253 = vmatpush2.msra.mxu0 0.0
      %3254 = vmatprep.subr.mxu0 0.0
      %3255 = vmatpush2.msra.mxu0 0.0
      %3256 = vmatprep.subr.mxu0 0.0
      %3257 = vmatpush2.msra.mxu0 0.0
      %3258 = vmatprep.subr.mxu0 0.0
      %3259 = vmatpush2.msra.mxu0 0.0
      %3260 = vmatprep.subr.mxu0 0.0
      %3261 = vmatpush2.msra.mxu0 0.0
      %3262 = vmatprep.subr.mxu0 0.0
      %3263 = vmatpush2.msra.mxu0 0.0
      %3264 = vmatprep.mubr.f32.mxu0 0.0
      %3265 = vmatmul.mubr.f32.gmra.mxu0 %v3075
      %v3266 = vpop.f32.mrf.mxu0
      %v3267 = vadd.f32 0.0, %v3266
      %v3268 = vpop.f32.mrf.mxu0
      %3269 = vmatprep.mubr.f32.mxu0 0.0
      %3270 = vmatmul.mubr.f32.gmra.mxu0 %v3078
      %v3271 = vpop.f32.mrf.mxu0
      %v3272 = vadd.f32 0.0, %v3271
      %v3273 = vpop.f32.mrf.mxu0
      %3274 = vmatprep.mubr.f32.mxu0 0.0
      %3275 = vmatmul.mubr.f32.gmra.mxu0 %v3081
      %v3276 = vpop.f32.mrf.mxu0
      %v3277 = vadd.f32 0.0, %v3276
      %v3278 = vpop.f32.mrf.mxu0
      %3279 = vmatprep.mubr.f32.mxu0 0.0
      %3280 = vmatmul.mubr.f32.gmra.mxu0 %v3084
      %v3281 = vpop.f32.mrf.mxu0
      %v3282 = vadd.f32 0.0, %v3281
      %v3283 = vpop.f32.mrf.mxu0
      %3284 = vmatprep.mubr.f32.mxu0 0.0
      %3285 = vmatmul.mubr.f32.gmra.mxu0 %v3087
      %v3286 = vpop.f32.mrf.mxu0
      %v3287 = vadd.f32 0.0, %v3286
      %v3288 = vpop.f32.mrf.mxu0
      %3289 = vmatprep.mubr.f32.mxu0 0.0
      %3290 = vmatmul.mubr.f32.gmra.mxu0 %v3090
      %v3291 = vpop.f32.mrf.mxu0
      %v3292 = vadd.f32 0.0, %v3291
      %v3293 = vpop.f32.mrf.mxu0
      %3294 = vmatprep.mubr.f32.mxu0 0.0
      %3295 = vmatmul.mubr.f32.gmra.mxu0 %v3093
      %v3296 = vpop.f32.mrf.mxu0
      %v3297 = vadd.f32 0.0, %v3296
      %v3298 = vpop.f32.mrf.mxu0
      %3299 = vmatprep.mubr.f32.mxu0 0.0
      %3300 = vmatmul.mubr.f32.gmra.mxu0 %v3096
      %v3301 = vpop.f32.mrf.mxu0
      %v3302 = vadd.f32 0.0, %v3301
      %v3303 = vpop.f32.mrf.mxu0
      %3304 = vmatprep.mubr.f32.mxu0 0.0
      %3305 = vmatmul.mubr.f32.gmra.mxu0 %v3099
      %v3306 = vpop.f32.mrf.mxu0
      %v3307 = vadd.f32 0.0, %v3306
      %v3308 = vpop.f32.mrf.mxu0
      %3309 = vmatprep.mubr.f32.mxu0 0.0
      %3310 = vmatmul.mubr.f32.gmra.mxu0 %v3102
      %v3311 = vpop.f32.mrf.mxu0
      %v3312 = vadd.f32 0.0, %v3311
      %v3313 = vpop.f32.mrf.mxu0
      %3314 = vmatprep.mubr.f32.mxu0 0.0
      %3315 = vmatmul.mubr.f32.gmra.mxu0 %v3105
      %v3316 = vpop.f32.mrf.mxu0
      %v3317 = vadd.f32 0.0, %v3316
      %v3318 = vpop.f32.mrf.mxu0
      %3319 = vmatprep.mubr.f32.mxu0 0.0
      %3320 = vmatmul.mubr.f32.gmra.mxu0 %v3108
      %v3321 = vpop.f32.mrf.mxu0
      %v3322 = vadd.f32 0.0, %v3321
      %v3323 = vpop.f32.mrf.mxu0
      %3324 = vmatprep.mubr.f32.mxu0 0.0
      %3325 = vmatmul.mubr.f32.gmra.mxu0 %v3111
      %v3326 = vpop.f32.mrf.mxu0
      %v3327 = vadd.f32 0.0, %v3326
      %v3328 = vpop.f32.mrf.mxu0
      %3329 = vmatprep.mubr.f32.mxu0 0.0
      %3330 = vmatmul.mubr.f32.gmra.mxu0 %v3114
      %v3331 = vpop.f32.mrf.mxu0
      %v3332 = vadd.f32 0.0, %v3331
      %v3333 = vpop.f32.mrf.mxu0
      %3334 = vmatprep.mubr.f32.mxu0 0.0
      %3335 = vmatmul.mubr.f32.gmra.mxu0 %v3117
      %v3336 = vpop.f32.mrf.mxu0
      %v3337 = vadd.f32 0.0, %v3336
      %v3338 = vpop.f32.mrf.mxu0
      %3339 = vmatprep.mubr.f32.mxu0 0.0
      %3340 = vmatmul.mubr.f32.gmra.mxu0 %v3120
      %v3341 = vpop.f32.mrf.mxu0
      %v3342 = vadd.f32 0.0, %v3341
      %v3343 = vpop.f32.mrf.mxu0
      %3344 = vmatprep.mubr.f32.mxu0 0.0
      %3345 = vmatmul.mubr.f32.gmra.mxu0 %v3123
      %v3346 = vpop.f32.mrf.mxu0
      %v3347 = vadd.f32 0.0, %v3346
      %v3348 = vpop.f32.mrf.mxu0
      %3349 = vmatprep.mubr.f32.mxu0 0.0
      %3350 = vmatmul.mubr.f32.gmra.mxu0 %v3126
      %v3351 = vpop.f32.mrf.mxu0
      %v3352 = vadd.f32 0.0, %v3351
      %v3353 = vpop.f32.mrf.mxu0
      %3354 = vmatprep.mubr.f32.mxu0 0.0
      %3355 = vmatmul.mubr.f32.gmra.mxu0 %v3129
      %v3356 = vpop.f32.mrf.mxu0
      %v3357 = vadd.f32 0.0, %v3356
      %v3358 = vpop.f32.mrf.mxu0
      %3359 = vmatprep.mubr.f32.mxu0 0.0
      %3360 = vmatmul.mubr.f32.gmra.mxu0 %v3132
      %v3361 = vpop.f32.mrf.mxu0
      %v3362 = vadd.f32 0.0, %v3361
      %v3363 = vpop.f32.mrf.mxu0
      %3364 = vmatprep.mubr.f32.mxu0 0.0
      %3365 = vmatmul.mubr.f32.gmra.mxu0 %v3135
      %v3366 = vpop.f32.mrf.mxu0
      %v3367 = vadd.f32 0.0, %v3366
      %v3368 = vpop.f32.mrf.mxu0
      %3369 = vmatprep.mubr.f32.mxu0 0.0
      %3370 = vmatmul.mubr.f32.gmra.mxu0 %v3138
      %v3371 = vpop.f32.mrf.mxu0
      %v3372 = vadd.f32 0.0, %v3371
      %v3373 = vpop.f32.mrf.mxu0
      %3374 = vmatprep.mubr.f32.mxu0 0.0
      %3375 = vmatmul.mubr.f32.gmra.mxu0 %v3141
      %v3376 = vpop.f32.mrf.mxu0
      %v3377 = vadd.f32 0.0, %v3376
      %v3378 = vpop.f32.mrf.mxu0
      %3379 = vmatprep.mubr.f32.mxu0 0.0
      %3380 = vmatmul.mubr.f32.gmra.mxu0 %v3144
      %v3381 = vpop.f32.mrf.mxu0
      %v3382 = vadd.f32 0.0, %v3381
      %v3383 = vpop.f32.mrf.mxu0
      %3384 = vmatprep.mubr.f32.mxu0 0.0
      %3385 = vmatmul.mubr.f32.gmra.mxu0 %v3147
      %v3386 = vpop.f32.mrf.mxu0
      %v3387 = vadd.f32 0.0, %v3386
      %v3388 = vpop.f32.mrf.mxu0
      %3389 = vmatprep.mubr.f32.mxu0 0.0
      %3390 = vmatmul.mubr.f32.gmra.mxu0 %v3150
      %v3391 = vpop.f32.mrf.mxu0
      %v3392 = vadd.f32 0.0, %v3391
      %v3393 = vpop.f32.mrf.mxu0
      %3394 = vmatprep.mubr.f32.mxu0 0.0
      %3395 = vmatmul.mubr.f32.gmra.mxu0 %v3153
      %v3396 = vpop.f32.mrf.mxu0
      %v3397 = vadd.f32 0.0, %v3396
      %v3398 = vpop.f32.mrf.mxu0
      %3399 = vmatprep.mubr.f32.mxu0 0.0
      %3400 = vmatmul.mubr.f32.gmra.mxu0 %v3156
      %v3401 = vpop.f32.mrf.mxu0
      %v3402 = vadd.f32 0.0, %v3401
      %v3403 = vpop.f32.mrf.mxu0
      %3404 = vmatprep.mubr.f32.mxu0 0.0
      %3405 = vmatmul.mubr.f32.gmra.mxu0 %v3159
      %v3406 = vpop.f32.mrf.mxu0
      %v3407 = vadd.f32 0.0, %v3406
      %v3408 = vpop.f32.mrf.mxu0
      %3409 = vmatprep.mubr.f32.mxu0 0.0
      %3410 = vmatmul.mubr.f32.gmra.mxu0 %v3162
      %v3411 = vpop.f32.mrf.mxu0
      %v3412 = vadd.f32 0.0, %v3411
      %v3413 = vpop.f32.mrf.mxu0
      %3414 = vmatprep.mubr.f32.mxu0 0.0
      %3415 = vmatmul.mubr.f32.gmra.mxu0 %v3165
      %v3416 = vpop.f32.mrf.mxu0
      %v3417 = vadd.f32 0.0, %v3416
      %v3418 = vpop.f32.mrf.mxu0
      %3419 = vmatprep.mubr.f32.mxu0 0.0
      %3420 = vmatmul.mubr.f32.gmra.mxu0 %v3168
      %v3421 = vpop.f32.mrf.mxu0
      %v3422 = vadd.f32 0.0, %v3421
      %v3423 = vpop.f32.mrf.mxu0
      %3424 = vmatprep.mubr.f32.mxu0 0.0
      %3425 = vmatmul.mubr.f32.gmra.mxu0 %v3171
      %v3426 = vpop.f32.mrf.mxu0
      %v3427 = vadd.f32 0.0, %v3426
      %v3428 = vpop.f32.mrf.mxu0
      %3429 = vmatprep.mubr.f32.mxu0 0.0
      %3430 = vmatmul.mubr.f32.gmra.mxu0 %v3174
      %v3431 = vpop.f32.mrf.mxu0
      %v3432 = vadd.f32 0.0, %v3431
      %v3433 = vpop.f32.mrf.mxu0
      %3434 = vmatprep.mubr.f32.mxu0 0.0
      %3435 = vmatmul.mubr.f32.gmra.mxu0 %v3177
      %v3436 = vpop.f32.mrf.mxu0
      %v3437 = vadd.f32 0.0, %v3436
      %v3438 = vpop.f32.mrf.mxu0
      %3439 = vmatprep.mubr.f32.mxu0 0.0
      %3440 = vmatmul.mubr.f32.gmra.mxu0 %v3180
      %v3441 = vpop.f32.mrf.mxu0
      %v3442 = vadd.f32 0.0, %v3441
      %v3443 = vpop.f32.mrf.mxu0
      %3444 = vmatprep.mubr.f32.mxu0 0.0
      %3445 = vmatmul.mubr.f32.gmra.mxu0 %v3183
      %v3446 = vpop.f32.mrf.mxu0
      %v3447 = vadd.f32 0.0, %v3446
      %v3448 = vpop.f32.mrf.mxu0
      %3449 = vmatprep.mubr.f32.mxu0 0.0
      %3450 = vmatmul.mubr.f32.gmra.mxu0 %v3186
      %v3451 = vpop.f32.mrf.mxu0
      %v3452 = vadd.f32 0.0, %v3451
      %v3453 = vpop.f32.mrf.mxu0
      %3454 = vmatprep.mubr.f32.mxu0 0.0
      %3455 = vmatmul.mubr.f32.gmra.mxu0 %v3189
      %v3456 = vpop.f32.mrf.mxu0
      %v3457 = vadd.f32 0.0, %v3456
      %v3458 = vpop.f32.mrf.mxu0
      %3459 = vmatprep.mubr.f32.mxu0 0.0
      %3460 = vmatmul.mubr.f32.gmra.mxu0 %v3192
      %v3461 = vpop.f32.mrf.mxu0
      %v3462 = vadd.f32 0.0, %v3461
      %v3463 = vpop.f32.mrf.mxu0
      %3464 = vmatprep.mubr.f32.mxu0 0.0
      %3465 = vmatmul.mubr.f32.gmra.mxu0 %v3195
      %v3466 = vpop.f32.mrf.mxu0
      %v3467 = vadd.f32 0.0, %v3466
      %v3468 = vpop.f32.mrf.mxu0
      %3469 = vdwg.mxu0
      %v3470 = vadd.f32 %v2989, %v3267
      %v3471 = vadd.f32 %v2990, %v3272
      %v3472 = vadd.f32 %v2991, %v3277
      %v3473 = vadd.f32 %v2992, %v3282
      %v3474 = vadd.f32 %v2993, %v3287
      %v3475 = vadd.f32 %v2994, %v3292
      %v3476 = vadd.f32 %v2995, %v3297
      %v3477 = vadd.f32 %v2996, %v3302
      %v3478 = vadd.f32 %v2997, %v3307
      %v3479 = vadd.f32 %v2998, %v3312
      %v3480 = vadd.f32 %v2999, %v3317
      %v3481 = vadd.f32 %v3000, %v3322
      %v3482 = vadd.f32 %v3001, %v3327
      %v3483 = vadd.f32 %v3002, %v3332
      %v3484 = vadd.f32 %v3003, %v3337
      %v3485 = vadd.f32 %v3004, %v3342
      %v3486 = vadd.f32 %v3005, %v3347
      %v3487 = vadd.f32 %v3006, %v3352
      %v3488 = vadd.f32 %v3007, %v3357
      %v3489 = vadd.f32 %v3008, %v3362
      %v3490 = vadd.f32 %v3009, %v3367
      %v3491 = vadd.f32 %v3010, %v3372
      %v3492 = vadd.f32 %v3011, %v3377
      %v3493 = vadd.f32 %v3012, %v3382
      %v3494 = vadd.f32 %v3013, %v3387
      %v3495 = vadd.f32 %v3014, %v3392
      %v3496 = vadd.f32 %v3015, %v3397
      %v3497 = vadd.f32 %v3016, %v3402
      %v3498 = vadd.f32 %v3017, %v3407
      %v3499 = vadd.f32 %v3018, %v3412
      %v3500 = vadd.f32 %v3019, %v3417
      %v3501 = vadd.f32 %v3020, %v3422
      %v3502 = vadd.f32 %v3021, %v3427
      %v3503 = vadd.f32 %v3022, %v3432
      %v3504 = vadd.f32 %v3023, %v3437
      %v3505 = vadd.f32 %v3024, %v3442
      %v3506 = vadd.f32 %v3025, %v3447
      %v3507 = vadd.f32 %v3026, %v3452
      %v3508 = vadd.f32 %v3027, %v3457
      %v3509 = vadd.f32 %v3028, %v3462
      %v3510 = vadd.f32 %v3029, %v3467
      %v3511 = vld [vmem:[#allocation2 + $0x19] sm:$0xff]
      %v3512 = vld [vmem:[#allocation2 + $0x21] sm:$0xff]
      %v3513 = vld [vmem:[#allocation2 + $0x29] sm:$0xff]
      %v3514 = vld [vmem:[#allocation2 + $0x31] sm:$0xff]
      %v3515 = vld [vmem:[#allocation2 + $0x39] sm:$0xff]
      %v3516 = vld [vmem:[#allocation2 + $0x41] sm:$0xff]
      %v3517 = vld [vmem:[#allocation2 + $0x49] sm:$0xff]
      %v3518 = vld [vmem:[#allocation2 + $0x51] sm:$0xff]
      %v3519 = vld [vmem:[#allocation2 + $0x59] sm:$0xff]
      %v3520 = vld [vmem:[#allocation2 + $0x61] sm:$0xff]
      %v3521 = vld [vmem:[#allocation2 + $0x69] sm:$0xff]
      %v3522 = vld [vmem:[#allocation2 + $0x71] sm:$0xff]
      %v3523 = vld [vmem:[#allocation2 + $0x79] sm:$0xff]
      %v3524 = vld [vmem:[#allocation2 + $0x81] sm:$0xff]
      %v3525 = vld [vmem:[#allocation2 + $0x89] sm:$0xff]
      %v3526 = vld [vmem:[#allocation2 + $0x91] sm:$0xff]
      %v3527 = vld [vmem:[#allocation2 + $0x99] sm:$0xff]
      %v3528 = vld [vmem:[#allocation2 + $0xa1] sm:$0xff]
      %v3529 = vld [vmem:[#allocation2 + $0xa9] sm:$0xff]
      %v3530 = vld [vmem:[#allocation2 + $0xb1] sm:$0xff]
      %v3531 = vld [vmem:[#allocation2 + $0xb9] sm:$0xff]
      %v3532 = vld [vmem:[#allocation2 + $0xc1] sm:$0xff]
      %v3533 = vld [vmem:[#allocation2 + $0xc9] sm:$0xff]
      %v3534 = vld [vmem:[#allocation2 + $0xd1] sm:$0xff]
      %v3535 = vld [vmem:[#allocation2 + $0xd9] sm:$0xff]
      %v3536 = vld [vmem:[#allocation2 + $0xe1] sm:$0xff]
      %v3537 = vld [vmem:[#allocation2 + $0xe9] sm:$0xff]
      %v3538 = vld [vmem:[#allocation2 + $0xf1] sm:$0xff]
      %v3539 = vld [vmem:[#allocation2 + $0xf9] sm:$0xff]
      %v3540 = vld [vmem:[#allocation2 + $0x101] sm:$0xff]
      %v3541 = vld [vmem:[#allocation2 + $0x109] sm:$0xff]
      %v3542 = vld [vmem:[#allocation2 + $0x111] sm:$0xff]
      %v3543 = vld [vmem:[#allocation2 + $0x119] sm:$0xff]
      %v3544 = vld [vmem:[#allocation2 + $0x121] sm:$0xff]
      %v3545 = vld [vmem:[#allocation2 + $0x129] sm:$0xff]
      %v3546 = vld [vmem:[#allocation2 + $0x131] sm:$0xff]
      %v3547 = vld [vmem:[#allocation2 + $0x139] sm:$0xff]
      %v3548 = vld [vmem:[#allocation2 + $0x141] sm:$0xff]
      %v3549 = vld [vmem:[#allocation2 + $0x149] sm:$0xff]
      %v3550 = vld [vmem:[#allocation2 + $0x151] sm:$0xff]
      %v3551 = vld [vmem:[#allocation2 + $0x159] sm:$0xf]
      %s3552 = scalar_lea.vmem %s337, 5
      %v3553 = vld [vmem:[%s3552] sm:$0x1]
      %v3554 = vunpack.c.l.bf16 %v3553
      %v3556 = vsel %vm351, %v3511, 0
      %v3559 = vsel %vm351, %v3512, 0
      %v3562 = vsel %vm351, %v3513, 0
      %v3565 = vsel %vm351, %v3514, 0
      %v3568 = vsel %vm351, %v3515, 0
      %v3571 = vsel %vm351, %v3516, 0
      %v3574 = vsel %vm351, %v3517, 0
      %v3577 = vsel %vm351, %v3518, 0
      %v3580 = vsel %vm351, %v3519, 0
      %v3583 = vsel %vm351, %v3520, 0
      %v3586 = vsel %vm351, %v3521, 0
      %v3589 = vsel %vm351, %v3522, 0
      %v3592 = vsel %vm351, %v3523, 0
      %v3595 = vsel %vm351, %v3524, 0
      %v3598 = vsel %vm351, %v3525, 0
      %v3601 = vsel %vm351, %v3526, 0
      %v3604 = vsel %vm351, %v3527, 0
      %v3607 = vsel %vm351, %v3528, 0
      %v3610 = vsel %vm351, %v3529, 0
      %v3613 = vsel %vm351, %v3530, 0
      %v3616 = vsel %vm351, %v3531, 0
      %v3619 = vsel %vm351, %v3532, 0
      %v3622 = vsel %vm351, %v3533, 0
      %v3625 = vsel %vm351, %v3534, 0
      %v3628 = vsel %vm351, %v3535, 0
      %v3631 = vsel %vm351, %v3536, 0
      %v3634 = vsel %vm351, %v3537, 0
      %v3637 = vsel %vm351, %v3538, 0
      %v3640 = vsel %vm351, %v3539, 0
      %v3643 = vsel %vm351, %v3540, 0
      %v3646 = vsel %vm351, %v3541, 0
      %v3649 = vsel %vm351, %v3542, 0
      %v3652 = vsel %vm351, %v3543, 0
      %v3655 = vsel %vm351, %v3544, 0
      %v3658 = vsel %vm351, %v3545, 0
      %v3661 = vsel %vm351, %v3546, 0
      %v3664 = vsel %vm351, %v3547, 0
      %v3667 = vsel %vm351, %v3548, 0
      %v3670 = vsel %vm351, %v3549, 0
      %v3673 = vsel %vm351, %v3550, 0
      %v3676 = vsel %vm351, %v3551, 0
      %v3679 = vsel %vm616, %v3554, 0
      %3681 = vmatprep.subr.mxu0 0.0
      %3682 = vmatpush1.msra.mxu0 0.0
      %3683 = vmatprep.subr.mxu0 0.0
      %3684 = vmatpush1.msra.mxu0 0.0
      %3685 = vmatprep.subr.mxu0 0.0
      %3686 = vmatpush1.msra.mxu0 0.0
      %3687 = vmatprep.subr.mxu0 0.0
      %3688 = vmatpush1.msra.mxu0 0.0
      %3689 = vmatprep.subr.mxu0 0.0
      %3690 = vmatpush1.msra.mxu0 0.0
      %3691 = vmatprep.subr.mxu0 0.0
      %3692 = vmatpush1.msra.mxu0 0.0
      %3693 = vmatprep.subr.mxu0 0.0
      %3694 = vmatpush1.msra.mxu0 0.0
      %3695 = vmatprep.subr.mxu0 0.0
      %3696 = vmatpush1.msra.mxu0 0.0
      %3697 = vmatprep.subr.mxu0 0.0
      %3698 = vmatpush1.msra.mxu0 0.0
      %3699 = vmatprep.subr.mxu0 0.0
      %3700 = vmatpush1.msra.mxu0 0.0
      %3701 = vmatprep.subr.mxu0 0.0
      %3702 = vmatpush1.msra.mxu0 0.0
      %3703 = vmatprep.subr.mxu0 0.0
      %3704 = vmatpush1.msra.mxu0 0.0
      %3705 = vmatprep.subr.mxu0 0.0
      %3706 = vmatpush1.msra.mxu0 0.0
      %3707 = vmatprep.subr.mxu0 0.0
      %3708 = vmatpush1.msra.mxu0 0.0
      %3709 = vmatprep.subr.mxu0 0.0
      %3710 = vmatpush1.msra.mxu0 0.0
      %3711 = vmatprep.subr.mxu0 0.0
      %3712 = vmatpush1.msra.mxu0 %v3679
      %3713 = vmatprep.subr.mxu0 0.0
      %3714 = vmatpush2.msra.mxu0 0.0
      %3715 = vmatprep.subr.mxu0 0.0
      %3716 = vmatpush2.msra.mxu0 0.0
      %3717 = vmatprep.subr.mxu0 0.0
      %3718 = vmatpush2.msra.mxu0 0.0
      %3719 = vmatprep.subr.mxu0 0.0
      %3720 = vmatpush2.msra.mxu0 0.0
      %3721 = vmatprep.subr.mxu0 0.0
      %3722 = vmatpush2.msra.mxu0 0.0
      %3723 = vmatprep.subr.mxu0 0.0
      %3724 = vmatpush2.msra.mxu0 0.0
      %3725 = vmatprep.subr.mxu0 0.0
      %3726 = vmatpush2.msra.mxu0 0.0
      %3727 = vmatprep.subr.mxu0 0.0
      %3728 = vmatpush2.msra.mxu0 0.0
      %3729 = vmatprep.subr.mxu0 0.0
      %3730 = vmatpush2.msra.mxu0 0.0
      %3731 = vmatprep.subr.mxu0 0.0
      %3732 = vmatpush2.msra.mxu0 0.0
      %3733 = vmatprep.subr.mxu0 0.0
      %3734 = vmatpush2.msra.mxu0 0.0
      %3735 = vmatprep.subr.mxu0 0.0
      %3736 = vmatpush2.msra.mxu0 0.0
      %3737 = vmatprep.subr.mxu0 0.0
      %3738 = vmatpush2.msra.mxu0 0.0
      %3739 = vmatprep.subr.mxu0 0.0
      %3740 = vmatpush2.msra.mxu0 0.0
      %3741 = vmatprep.subr.mxu0 0.0
      %3742 = vmatpush2.msra.mxu0 0.0
      %3743 = vmatprep.subr.mxu0 0.0
      %3744 = vmatpush2.msra.mxu0 0.0
      %3745 = vmatprep.mubr.f32.mxu0 0.0
      %3746 = vmatmul.mubr.f32.gmra.mxu0 %v3556
      %v3747 = vpop.f32.mrf.mxu0
      %v3748 = vadd.f32 0.0, %v3747
      %v3749 = vpop.f32.mrf.mxu0
      %3750 = vmatprep.mubr.f32.mxu0 0.0
      %3751 = vmatmul.mubr.f32.gmra.mxu0 %v3559
      %v3752 = vpop.f32.mrf.mxu0
      %v3753 = vadd.f32 0.0, %v3752
      %v3754 = vpop.f32.mrf.mxu0
      %3755 = vmatprep.mubr.f32.mxu0 0.0
      %3756 = vmatmul.mubr.f32.gmra.mxu0 %v3562
      %v3757 = vpop.f32.mrf.mxu0
      %v3758 = vadd.f32 0.0, %v3757
      %v3759 = vpop.f32.mrf.mxu0
      %3760 = vmatprep.mubr.f32.mxu0 0.0
      %3761 = vmatmul.mubr.f32.gmra.mxu0 %v3565
      %v3762 = vpop.f32.mrf.mxu0
      %v3763 = vadd.f32 0.0, %v3762
      %v3764 = vpop.f32.mrf.mxu0
      %3765 = vmatprep.mubr.f32.mxu0 0.0
      %3766 = vmatmul.mubr.f32.gmra.mxu0 %v3568
      %v3767 = vpop.f32.mrf.mxu0
      %v3768 = vadd.f32 0.0, %v3767
      %v3769 = vpop.f32.mrf.mxu0
      %3770 = vmatprep.mubr.f32.mxu0 0.0
      %3771 = vmatmul.mubr.f32.gmra.mxu0 %v3571
      %v3772 = vpop.f32.mrf.mxu0
      %v3773 = vadd.f32 0.0, %v3772
      %v3774 = vpop.f32.mrf.mxu0
      %3775 = vmatprep.mubr.f32.mxu0 0.0
      %3776 = vmatmul.mubr.f32.gmra.mxu0 %v3574
      %v3777 = vpop.f32.mrf.mxu0
      %v3778 = vadd.f32 0.0, %v3777
      %v3779 = vpop.f32.mrf.mxu0
      %3780 = vmatprep.mubr.f32.mxu0 0.0
      %3781 = vmatmul.mubr.f32.gmra.mxu0 %v3577
      %v3782 = vpop.f32.mrf.mxu0
      %v3783 = vadd.f32 0.0, %v3782
      %v3784 = vpop.f32.mrf.mxu0
      %3785 = vmatprep.mubr.f32.mxu0 0.0
      %3786 = vmatmul.mubr.f32.gmra.mxu0 %v3580
      %v3787 = vpop.f32.mrf.mxu0
      %v3788 = vadd.f32 0.0, %v3787
      %v3789 = vpop.f32.mrf.mxu0
      %3790 = vmatprep.mubr.f32.mxu0 0.0
      %3791 = vmatmul.mubr.f32.gmra.mxu0 %v3583
      %v3792 = vpop.f32.mrf.mxu0
      %v3793 = vadd.f32 0.0, %v3792
      %v3794 = vpop.f32.mrf.mxu0
      %3795 = vmatprep.mubr.f32.mxu0 0.0
      %3796 = vmatmul.mubr.f32.gmra.mxu0 %v3586
      %v3797 = vpop.f32.mrf.mxu0
      %v3798 = vadd.f32 0.0, %v3797
      %v3799 = vpop.f32.mrf.mxu0
      %3800 = vmatprep.mubr.f32.mxu0 0.0
      %3801 = vmatmul.mubr.f32.gmra.mxu0 %v3589
      %v3802 = vpop.f32.mrf.mxu0
      %v3803 = vadd.f32 0.0, %v3802
      %v3804 = vpop.f32.mrf.mxu0
      %3805 = vmatprep.mubr.f32.mxu0 0.0
      %3806 = vmatmul.mubr.f32.gmra.mxu0 %v3592
      %v3807 = vpop.f32.mrf.mxu0
      %v3808 = vadd.f32 0.0, %v3807
      %v3809 = vpop.f32.mrf.mxu0
      %3810 = vmatprep.mubr.f32.mxu0 0.0
      %3811 = vmatmul.mubr.f32.gmra.mxu0 %v3595
      %v3812 = vpop.f32.mrf.mxu0
      %v3813 = vadd.f32 0.0, %v3812
      %v3814 = vpop.f32.mrf.mxu0
      %3815 = vmatprep.mubr.f32.mxu0 0.0
      %3816 = vmatmul.mubr.f32.gmra.mxu0 %v3598
      %v3817 = vpop.f32.mrf.mxu0
      %v3818 = vadd.f32 0.0, %v3817
      %v3819 = vpop.f32.mrf.mxu0
      %3820 = vmatprep.mubr.f32.mxu0 0.0
      %3821 = vmatmul.mubr.f32.gmra.mxu0 %v3601
      %v3822 = vpop.f32.mrf.mxu0
      %v3823 = vadd.f32 0.0, %v3822
      %v3824 = vpop.f32.mrf.mxu0
      %3825 = vmatprep.mubr.f32.mxu0 0.0
      %3826 = vmatmul.mubr.f32.gmra.mxu0 %v3604
      %v3827 = vpop.f32.mrf.mxu0
      %v3828 = vadd.f32 0.0, %v3827
      %v3829 = vpop.f32.mrf.mxu0
      %3830 = vmatprep.mubr.f32.mxu0 0.0
      %3831 = vmatmul.mubr.f32.gmra.mxu0 %v3607
      %v3832 = vpop.f32.mrf.mxu0
      %v3833 = vadd.f32 0.0, %v3832
      %v3834 = vpop.f32.mrf.mxu0
      %3835 = vmatprep.mubr.f32.mxu0 0.0
      %3836 = vmatmul.mubr.f32.gmra.mxu0 %v3610
      %v3837 = vpop.f32.mrf.mxu0
      %v3838 = vadd.f32 0.0, %v3837
      %v3839 = vpop.f32.mrf.mxu0
      %3840 = vmatprep.mubr.f32.mxu0 0.0
      %3841 = vmatmul.mubr.f32.gmra.mxu0 %v3613
      %v3842 = vpop.f32.mrf.mxu0
      %v3843 = vadd.f32 0.0, %v3842
      %v3844 = vpop.f32.mrf.mxu0
      %3845 = vmatprep.mubr.f32.mxu0 0.0
      %3846 = vmatmul.mubr.f32.gmra.mxu0 %v3616
      %v3847 = vpop.f32.mrf.mxu0
      %v3848 = vadd.f32 0.0, %v3847
      %v3849 = vpop.f32.mrf.mxu0
      %3850 = vmatprep.mubr.f32.mxu0 0.0
      %3851 = vmatmul.mubr.f32.gmra.mxu0 %v3619
      %v3852 = vpop.f32.mrf.mxu0
      %v3853 = vadd.f32 0.0, %v3852
      %v3854 = vpop.f32.mrf.mxu0
      %3855 = vmatprep.mubr.f32.mxu0 0.0
      %3856 = vmatmul.mubr.f32.gmra.mxu0 %v3622
      %v3857 = vpop.f32.mrf.mxu0
      %v3858 = vadd.f32 0.0, %v3857
      %v3859 = vpop.f32.mrf.mxu0
      %3860 = vmatprep.mubr.f32.mxu0 0.0
      %3861 = vmatmul.mubr.f32.gmra.mxu0 %v3625
      %v3862 = vpop.f32.mrf.mxu0
      %v3863 = vadd.f32 0.0, %v3862
      %v3864 = vpop.f32.mrf.mxu0
      %3865 = vmatprep.mubr.f32.mxu0 0.0
      %3866 = vmatmul.mubr.f32.gmra.mxu0 %v3628
      %v3867 = vpop.f32.mrf.mxu0
      %v3868 = vadd.f32 0.0, %v3867
      %v3869 = vpop.f32.mrf.mxu0
      %3870 = vmatprep.mubr.f32.mxu0 0.0
      %3871 = vmatmul.mubr.f32.gmra.mxu0 %v3631
      %v3872 = vpop.f32.mrf.mxu0
      %v3873 = vadd.f32 0.0, %v3872
      %v3874 = vpop.f32.mrf.mxu0
      %3875 = vmatprep.mubr.f32.mxu0 0.0
      %3876 = vmatmul.mubr.f32.gmra.mxu0 %v3634
      %v3877 = vpop.f32.mrf.mxu0
      %v3878 = vadd.f32 0.0, %v3877
      %v3879 = vpop.f32.mrf.mxu0
      %3880 = vmatprep.mubr.f32.mxu0 0.0
      %3881 = vmatmul.mubr.f32.gmra.mxu0 %v3637
      %v3882 = vpop.f32.mrf.mxu0
      %v3883 = vadd.f32 0.0, %v3882
      %v3884 = vpop.f32.mrf.mxu0
      %3885 = vmatprep.mubr.f32.mxu0 0.0
      %3886 = vmatmul.mubr.f32.gmra.mxu0 %v3640
      %v3887 = vpop.f32.mrf.mxu0
      %v3888 = vadd.f32 0.0, %v3887
      %v3889 = vpop.f32.mrf.mxu0
      %3890 = vmatprep.mubr.f32.mxu0 0.0
      %3891 = vmatmul.mubr.f32.gmra.mxu0 %v3643
      %v3892 = vpop.f32.mrf.mxu0
      %v3893 = vadd.f32 0.0, %v3892
      %v3894 = vpop.f32.mrf.mxu0
      %3895 = vmatprep.mubr.f32.mxu0 0.0
      %3896 = vmatmul.mubr.f32.gmra.mxu0 %v3646
      %v3897 = vpop.f32.mrf.mxu0
      %v3898 = vadd.f32 0.0, %v3897
      %v3899 = vpop.f32.mrf.mxu0
      %3900 = vmatprep.mubr.f32.mxu0 0.0
      %3901 = vmatmul.mubr.f32.gmra.mxu0 %v3649
      %v3902 = vpop.f32.mrf.mxu0
      %v3903 = vadd.f32 0.0, %v3902
      %v3904 = vpop.f32.mrf.mxu0
      %3905 = vmatprep.mubr.f32.mxu0 0.0
      %3906 = vmatmul.mubr.f32.gmra.mxu0 %v3652
      %v3907 = vpop.f32.mrf.mxu0
      %v3908 = vadd.f32 0.0, %v3907
      %v3909 = vpop.f32.mrf.mxu0
      %3910 = vmatprep.mubr.f32.mxu0 0.0
      %3911 = vmatmul.mubr.f32.gmra.mxu0 %v3655
      %v3912 = vpop.f32.mrf.mxu0
      %v3913 = vadd.f32 0.0, %v3912
      %v3914 = vpop.f32.mrf.mxu0
      %3915 = vmatprep.mubr.f32.mxu0 0.0
      %3916 = vmatmul.mubr.f32.gmra.mxu0 %v3658
      %v3917 = vpop.f32.mrf.mxu0
      %v3918 = vadd.f32 0.0, %v3917
      %v3919 = vpop.f32.mrf.mxu0
      %3920 = vmatprep.mubr.f32.mxu0 0.0
      %3921 = vmatmul.mubr.f32.gmra.mxu0 %v3661
      %v3922 = vpop.f32.mrf.mxu0
      %v3923 = vadd.f32 0.0, %v3922
      %v3924 = vpop.f32.mrf.mxu0
      %3925 = vmatprep.mubr.f32.mxu0 0.0
      %3926 = vmatmul.mubr.f32.gmra.mxu0 %v3664
      %v3927 = vpop.f32.mrf.mxu0
      %v3928 = vadd.f32 0.0, %v3927
      %v3929 = vpop.f32.mrf.mxu0
      %3930 = vmatprep.mubr.f32.mxu0 0.0
      %3931 = vmatmul.mubr.f32.gmra.mxu0 %v3667
      %v3932 = vpop.f32.mrf.mxu0
      %v3933 = vadd.f32 0.0, %v3932
      %v3934 = vpop.f32.mrf.mxu0
      %3935 = vmatprep.mubr.f32.mxu0 0.0
      %3936 = vmatmul.mubr.f32.gmra.mxu0 %v3670
      %v3937 = vpop.f32.mrf.mxu0
      %v3938 = vadd.f32 0.0, %v3937
      %v3939 = vpop.f32.mrf.mxu0
      %3940 = vmatprep.mubr.f32.mxu0 0.0
      %3941 = vmatmul.mubr.f32.gmra.mxu0 %v3673
      %v3942 = vpop.f32.mrf.mxu0
      %v3943 = vadd.f32 0.0, %v3942
      %v3944 = vpop.f32.mrf.mxu0
      %3945 = vmatprep.mubr.f32.mxu0 0.0
      %3946 = vmatmul.mubr.f32.gmra.mxu0 %v3676
      %v3947 = vpop.f32.mrf.mxu0
      %v3948 = vadd.f32 0.0, %v3947
      %v3949 = vpop.f32.mrf.mxu0
      %3950 = vdwg.mxu0
      %v3951 = vadd.f32 %v3470, %v3748
      %v3952 = vadd.f32 %v3471, %v3753
      %v3953 = vadd.f32 %v3472, %v3758
      %v3954 = vadd.f32 %v3473, %v3763
      %v3955 = vadd.f32 %v3474, %v3768
      %v3956 = vadd.f32 %v3475, %v3773
      %v3957 = vadd.f32 %v3476, %v3778
      %v3958 = vadd.f32 %v3477, %v3783
      %v3959 = vadd.f32 %v3478, %v3788
      %v3960 = vadd.f32 %v3479, %v3793
      %v3961 = vadd.f32 %v3480, %v3798
      %v3962 = vadd.f32 %v3481, %v3803
      %v3963 = vadd.f32 %v3482, %v3808
      %v3964 = vadd.f32 %v3483, %v3813
      %v3965 = vadd.f32 %v3484, %v3818
      %v3966 = vadd.f32 %v3485, %v3823
      %v3967 = vadd.f32 %v3486, %v3828
      %v3968 = vadd.f32 %v3487, %v3833
      %v3969 = vadd.f32 %v3488, %v3838
      %v3970 = vadd.f32 %v3489, %v3843
      %v3971 = vadd.f32 %v3490, %v3848
      %v3972 = vadd.f32 %v3491, %v3853
      %v3973 = vadd.f32 %v3492, %v3858
      %v3974 = vadd.f32 %v3493, %v3863
      %v3975 = vadd.f32 %v3494, %v3868
      %v3976 = vadd.f32 %v3495, %v3873
      %v3977 = vadd.f32 %v3496, %v3878
      %v3978 = vadd.f32 %v3497, %v3883
      %v3979 = vadd.f32 %v3498, %v3888
      %v3980 = vadd.f32 %v3499, %v3893
      %v3981 = vadd.f32 %v3500, %v3898
      %v3982 = vadd.f32 %v3501, %v3903
      %v3983 = vadd.f32 %v3502, %v3908
      %v3984 = vadd.f32 %v3503, %v3913
      %v3985 = vadd.f32 %v3504, %v3918
      %v3986 = vadd.f32 %v3505, %v3923
      %v3987 = vadd.f32 %v3506, %v3928
      %v3988 = vadd.f32 %v3507, %v3933
      %v3989 = vadd.f32 %v3508, %v3938
      %v3990 = vadd.f32 %v3509, %v3943
      %v3991 = vadd.f32 %v3510, %v3948
      %v3992 = vld [vmem:[#allocation2 + $0x29] sm:$0xff]
      %v3993 = vld [vmem:[#allocation2 + $0x31] sm:$0xff]
      %v3994 = vld [vmem:[#allocation2 + $0x39] sm:$0xff]
      %v3995 = vld [vmem:[#allocation2 + $0x41] sm:$0xff]
      %v3996 = vld [vmem:[#allocation2 + $0x49] sm:$0xff]
      %v3997 = vld [vmem:[#allocation2 + $0x51] sm:$0xff]
      %v3998 = vld [vmem:[#allocation2 + $0x59] sm:$0xff]
      %v3999 = vld [vmem:[#allocation2 + $0x61] sm:$0xff]
      %v4000 = vld [vmem:[#allocation2 + $0x69] sm:$0xff]
      %v4001 = vld [vmem:[#allocation2 + $0x71] sm:$0xff]
      %v4002 = vld [vmem:[#allocation2 + $0x79] sm:$0xff]
      %v4003 = vld [vmem:[#allocation2 + $0x81] sm:$0xff]
      %v4004 = vld [vmem:[#allocation2 + $0x89] sm:$0xff]
      %v4005 = vld [vmem:[#allocation2 + $0x91] sm:$0xff]
      %v4006 = vld [vmem:[#allocation2 + $0x99] sm:$0xff]
      %v4007 = vld [vmem:[#allocation2 + $0xa1] sm:$0xff]
      %v4008 = vld [vmem:[#allocation2 + $0xa9] sm:$0xff]
      %v4009 = vld [vmem:[#allocation2 + $0xb1] sm:$0xff]
      %v4010 = vld [vmem:[#allocation2 + $0xb9] sm:$0xff]
      %v4011 = vld [vmem:[#allocation2 + $0xc1] sm:$0xff]
      %v4012 = vld [vmem:[#allocation2 + $0xc9] sm:$0xff]
      %v4013 = vld [vmem:[#allocation2 + $0xd1] sm:$0xff]
      %v4014 = vld [vmem:[#allocation2 + $0xd9] sm:$0xff]
      %v4015 = vld [vmem:[#allocation2 + $0xe1] sm:$0xff]
      %v4016 = vld [vmem:[#allocation2 + $0xe9] sm:$0xff]
      %v4017 = vld [vmem:[#allocation2 + $0xf1] sm:$0xff]
      %v4018 = vld [vmem:[#allocation2 + $0xf9] sm:$0xff]
      %v4019 = vld [vmem:[#allocation2 + $0x101] sm:$0xff]
      %v4020 = vld [vmem:[#allocation2 + $0x109] sm:$0xff]
      %v4021 = vld [vmem:[#allocation2 + $0x111] sm:$0xff]
      %v4022 = vld [vmem:[#allocation2 + $0x119] sm:$0xff]
      %v4023 = vld [vmem:[#allocation2 + $0x121] sm:$0xff]
      %v4024 = vld [vmem:[#allocation2 + $0x129] sm:$0xff]
      %v4025 = vld [vmem:[#allocation2 + $0x131] sm:$0xff]
      %v4026 = vld [vmem:[#allocation2 + $0x139] sm:$0xff]
      %v4027 = vld [vmem:[#allocation2 + $0x141] sm:$0xff]
      %v4028 = vld [vmem:[#allocation2 + $0x149] sm:$0xff]
      %v4029 = vld [vmem:[#allocation2 + $0x151] sm:$0xff]
      %v4030 = vld [vmem:[#allocation2 + $0x159] sm:$0xff]
      %v4031 = vld [vmem:[#allocation2 + $0x161] sm:$0xff]
      %v4032 = vld [vmem:[#allocation2 + $0x169] sm:$0xf]
      %s4033 = scalar_lea.vmem %s337, 6
      %v4034 = vld [vmem:[%s4033] sm:$0x1]
      %v4035 = vunpack.c.l.bf16 %v4034
      %v4037 = vsel %vm351, %v3992, 0
      %v4040 = vsel %vm351, %v3993, 0
      %v4043 = vsel %vm351, %v3994, 0
      %v4046 = vsel %vm351, %v3995, 0
      %v4049 = vsel %vm351, %v3996, 0
      %v4052 = vsel %vm351, %v3997, 0
      %v4055 = vsel %vm351, %v3998, 0
      %v4058 = vsel %vm351, %v3999, 0
      %v4061 = vsel %vm351, %v4000, 0
      %v4064 = vsel %vm351, %v4001, 0
      %v4067 = vsel %vm351, %v4002, 0
      %v4070 = vsel %vm351, %v4003, 0
      %v4073 = vsel %vm351, %v4004, 0
      %v4076 = vsel %vm351, %v4005, 0
      %v4079 = vsel %vm351, %v4006, 0
      %v4082 = vsel %vm351, %v4007, 0
      %v4085 = vsel %vm351, %v4008, 0
      %v4088 = vsel %vm351, %v4009, 0
      %v4091 = vsel %vm351, %v4010, 0
      %v4094 = vsel %vm351, %v4011, 0
      %v4097 = vsel %vm351, %v4012, 0
      %v4100 = vsel %vm351, %v4013, 0
      %v4103 = vsel %vm351, %v4014, 0
      %v4106 = vsel %vm351, %v4015, 0
      %v4109 = vsel %vm351, %v4016, 0
      %v4112 = vsel %vm351, %v4017, 0
      %v4115 = vsel %vm351, %v4018, 0
      %v4118 = vsel %vm351, %v4019, 0
      %v4121 = vsel %vm351, %v4020, 0
      %v4124 = vsel %vm351, %v4021, 0
      %v4127 = vsel %vm351, %v4022, 0
      %v4130 = vsel %vm351, %v4023, 0
      %v4133 = vsel %vm351, %v4024, 0
      %v4136 = vsel %vm351, %v4025, 0
      %v4139 = vsel %vm351, %v4026, 0
      %v4142 = vsel %vm351, %v4027, 0
      %v4145 = vsel %vm351, %v4028, 0
      %v4148 = vsel %vm351, %v4029, 0
      %v4151 = vsel %vm351, %v4030, 0
      %v4154 = vsel %vm351, %v4031, 0
      %v4157 = vsel %vm351, %v4032, 0
      %v4160 = vsel %vm616, %v4035, 0
      %4162 = vmatprep.subr.mxu0 0.0
      %4163 = vmatpush1.msra.mxu0 0.0
      %4164 = vmatprep.subr.mxu0 0.0
      %4165 = vmatpush1.msra.mxu0 0.0
      %4166 = vmatprep.subr.mxu0 0.0
      %4167 = vmatpush1.msra.mxu0 0.0
      %4168 = vmatprep.subr.mxu0 0.0
      %4169 = vmatpush1.msra.mxu0 0.0
      %4170 = vmatprep.subr.mxu0 0.0
      %4171 = vmatpush1.msra.mxu0 0.0
      %4172 = vmatprep.subr.mxu0 0.0
      %4173 = vmatpush1.msra.mxu0 0.0
      %4174 = vmatprep.subr.mxu0 0.0
      %4175 = vmatpush1.msra.mxu0 0.0
      %4176 = vmatprep.subr.mxu0 0.0
      %4177 = vmatpush1.msra.mxu0 0.0
      %4178 = vmatprep.subr.mxu0 0.0
      %4179 = vmatpush1.msra.mxu0 0.0
      %4180 = vmatprep.subr.mxu0 0.0
      %4181 = vmatpush1.msra.mxu0 0.0
      %4182 = vmatprep.subr.mxu0 0.0
      %4183 = vmatpush1.msra.mxu0 0.0
      %4184 = vmatprep.subr.mxu0 0.0
      %4185 = vmatpush1.msra.mxu0 0.0
      %4186 = vmatprep.subr.mxu0 0.0
      %4187 = vmatpush1.msra.mxu0 0.0
      %4188 = vmatprep.subr.mxu0 0.0
      %4189 = vmatpush1.msra.mxu0 0.0
      %4190 = vmatprep.subr.mxu0 0.0
      %4191 = vmatpush1.msra.mxu0 0.0
      %4192 = vmatprep.subr.mxu0 0.0
      %4193 = vmatpush1.msra.mxu0 %v4160
      %4194 = vmatprep.subr.mxu0 0.0
      %4195 = vmatpush2.msra.mxu0 0.0
      %4196 = vmatprep.subr.mxu0 0.0
      %4197 = vmatpush2.msra.mxu0 0.0
      %4198 = vmatprep.subr.mxu0 0.0
      %4199 = vmatpush2.msra.mxu0 0.0
      %4200 = vmatprep.subr.mxu0 0.0
      %4201 = vmatpush2.msra.mxu0 0.0
      %4202 = vmatprep.subr.mxu0 0.0
      %4203 = vmatpush2.msra.mxu0 0.0
      %4204 = vmatprep.subr.mxu0 0.0
      %4205 = vmatpush2.msra.mxu0 0.0
      %4206 = vmatprep.subr.mxu0 0.0
      %4207 = vmatpush2.msra.mxu0 0.0
      %4208 = vmatprep.subr.mxu0 0.0
      %4209 = vmatpush2.msra.mxu0 0.0
      %4210 = vmatprep.subr.mxu0 0.0
      %4211 = vmatpush2.msra.mxu0 0.0
      %4212 = vmatprep.subr.mxu0 0.0
      %4213 = vmatpush2.msra.mxu0 0.0
      %4214 = vmatprep.subr.mxu0 0.0
      %4215 = vmatpush2.msra.mxu0 0.0
      %4216 = vmatprep.subr.mxu0 0.0
      %4217 = vmatpush2.msra.mxu0 0.0
      %4218 = vmatprep.subr.mxu0 0.0
      %4219 = vmatpush2.msra.mxu0 0.0
      %4220 = vmatprep.subr.mxu0 0.0
      %4221 = vmatpush2.msra.mxu0 0.0
      %4222 = vmatprep.subr.mxu0 0.0
      %4223 = vmatpush2.msra.mxu0 0.0
      %4224 = vmatprep.subr.mxu0 0.0
      %4225 = vmatpush2.msra.mxu0 0.0
      %4226 = vmatprep.mubr.f32.mxu0 0.0
      %4227 = vmatmul.mubr.f32.gmra.mxu0 %v4037
      %v4228 = vpop.f32.mrf.mxu0
      %v4229 = vadd.f32 0.0, %v4228
      %v4230 = vpop.f32.mrf.mxu0
      %4231 = vmatprep.mubr.f32.mxu0 0.0
      %4232 = vmatmul.mubr.f32.gmra.mxu0 %v4040
      %v4233 = vpop.f32.mrf.mxu0
      %v4234 = vadd.f32 0.0, %v4233
      %v4235 = vpop.f32.mrf.mxu0
      %4236 = vmatprep.mubr.f32.mxu0 0.0
      %4237 = vmatmul.mubr.f32.gmra.mxu0 %v4043
      %v4238 = vpop.f32.mrf.mxu0
      %v4239 = vadd.f32 0.0, %v4238
      %v4240 = vpop.f32.mrf.mxu0
      %4241 = vmatprep.mubr.f32.mxu0 0.0
      %4242 = vmatmul.mubr.f32.gmra.mxu0 %v4046
      %v4243 = vpop.f32.mrf.mxu0
      %v4244 = vadd.f32 0.0, %v4243
      %v4245 = vpop.f32.mrf.mxu0
      %4246 = vmatprep.mubr.f32.mxu0 0.0
      %4247 = vmatmul.mubr.f32.gmra.mxu0 %v4049
      %v4248 = vpop.f32.mrf.mxu0
      %v4249 = vadd.f32 0.0, %v4248
      %v4250 = vpop.f32.mrf.mxu0
      %4251 = vmatprep.mubr.f32.mxu0 0.0
      %4252 = vmatmul.mubr.f32.gmra.mxu0 %v4052
      %v4253 = vpop.f32.mrf.mxu0
      %v4254 = vadd.f32 0.0, %v4253
      %v4255 = vpop.f32.mrf.mxu0
      %4256 = vmatprep.mubr.f32.mxu0 0.0
      %4257 = vmatmul.mubr.f32.gmra.mxu0 %v4055
      %v4258 = vpop.f32.mrf.mxu0
      %v4259 = vadd.f32 0.0, %v4258
      %v4260 = vpop.f32.mrf.mxu0
      %4261 = vmatprep.mubr.f32.mxu0 0.0
      %4262 = vmatmul.mubr.f32.gmra.mxu0 %v4058
      %v4263 = vpop.f32.mrf.mxu0
      %v4264 = vadd.f32 0.0, %v4263
      %v4265 = vpop.f32.mrf.mxu0
      %4266 = vmatprep.mubr.f32.mxu0 0.0
      %4267 = vmatmul.mubr.f32.gmra.mxu0 %v4061
      %v4268 = vpop.f32.mrf.mxu0
      %v4269 = vadd.f32 0.0, %v4268
      %v4270 = vpop.f32.mrf.mxu0
      %4271 = vmatprep.mubr.f32.mxu0 0.0
      %4272 = vmatmul.mubr.f32.gmra.mxu0 %v4064
      %v4273 = vpop.f32.mrf.mxu0
      %v4274 = vadd.f32 0.0, %v4273
      %v4275 = vpop.f32.mrf.mxu0
      %4276 = vmatprep.mubr.f32.mxu0 0.0
      %4277 = vmatmul.mubr.f32.gmra.mxu0 %v4067
      %v4278 = vpop.f32.mrf.mxu0
      %v4279 = vadd.f32 0.0, %v4278
      %v4280 = vpop.f32.mrf.mxu0
      %4281 = vmatprep.mubr.f32.mxu0 0.0
      %4282 = vmatmul.mubr.f32.gmra.mxu0 %v4070
      %v4283 = vpop.f32.mrf.mxu0
      %v4284 = vadd.f32 0.0, %v4283
      %v4285 = vpop.f32.mrf.mxu0
      %4286 = vmatprep.mubr.f32.mxu0 0.0
      %4287 = vmatmul.mubr.f32.gmra.mxu0 %v4073
      %v4288 = vpop.f32.mrf.mxu0
      %v4289 = vadd.f32 0.0, %v4288
      %v4290 = vpop.f32.mrf.mxu0
      %4291 = vmatprep.mubr.f32.mxu0 0.0
      %4292 = vmatmul.mubr.f32.gmra.mxu0 %v4076
      %v4293 = vpop.f32.mrf.mxu0
      %v4294 = vadd.f32 0.0, %v4293
      %v4295 = vpop.f32.mrf.mxu0
      %4296 = vmatprep.mubr.f32.mxu0 0.0
      %4297 = vmatmul.mubr.f32.gmra.mxu0 %v4079
      %v4298 = vpop.f32.mrf.mxu0
      %v4299 = vadd.f32 0.0, %v4298
      %v4300 = vpop.f32.mrf.mxu0
      %4301 = vmatprep.mubr.f32.mxu0 0.0
      %4302 = vmatmul.mubr.f32.gmra.mxu0 %v4082
      %v4303 = vpop.f32.mrf.mxu0
      %v4304 = vadd.f32 0.0, %v4303
      %v4305 = vpop.f32.mrf.mxu0
      %4306 = vmatprep.mubr.f32.mxu0 0.0
      %4307 = vmatmul.mubr.f32.gmra.mxu0 %v4085
      %v4308 = vpop.f32.mrf.mxu0
      %v4309 = vadd.f32 0.0, %v4308
      %v4310 = vpop.f32.mrf.mxu0
      %4311 = vmatprep.mubr.f32.mxu0 0.0
      %4312 = vmatmul.mubr.f32.gmra.mxu0 %v4088
      %v4313 = vpop.f32.mrf.mxu0
      %v4314 = vadd.f32 0.0, %v4313
      %v4315 = vpop.f32.mrf.mxu0
      %4316 = vmatprep.mubr.f32.mxu0 0.0
      %4317 = vmatmul.mubr.f32.gmra.mxu0 %v4091
      %v4318 = vpop.f32.mrf.mxu0
      %v4319 = vadd.f32 0.0, %v4318
      %v4320 = vpop.f32.mrf.mxu0
      %4321 = vmatprep.mubr.f32.mxu0 0.0
      %4322 = vmatmul.mubr.f32.gmra.mxu0 %v4094
      %v4323 = vpop.f32.mrf.mxu0
      %v4324 = vadd.f32 0.0, %v4323
      %v4325 = vpop.f32.mrf.mxu0
      %4326 = vmatprep.mubr.f32.mxu0 0.0
      %4327 = vmatmul.mubr.f32.gmra.mxu0 %v4097
      %v4328 = vpop.f32.mrf.mxu0
      %v4329 = vadd.f32 0.0, %v4328
      %v4330 = vpop.f32.mrf.mxu0
      %4331 = vmatprep.mubr.f32.mxu0 0.0
      %4332 = vmatmul.mubr.f32.gmra.mxu0 %v4100
      %v4333 = vpop.f32.mrf.mxu0
      %v4334 = vadd.f32 0.0, %v4333
      %v4335 = vpop.f32.mrf.mxu0
      %4336 = vmatprep.mubr.f32.mxu0 0.0
      %4337 = vmatmul.mubr.f32.gmra.mxu0 %v4103
      %v4338 = vpop.f32.mrf.mxu0
      %v4339 = vadd.f32 0.0, %v4338
      %v4340 = vpop.f32.mrf.mxu0
      %4341 = vmatprep.mubr.f32.mxu0 0.0
      %4342 = vmatmul.mubr.f32.gmra.mxu0 %v4106
      %v4343 = vpop.f32.mrf.mxu0
      %v4344 = vadd.f32 0.0, %v4343
      %v4345 = vpop.f32.mrf.mxu0
      %4346 = vmatprep.mubr.f32.mxu0 0.0
      %4347 = vmatmul.mubr.f32.gmra.mxu0 %v4109
      %v4348 = vpop.f32.mrf.mxu0
      %v4349 = vadd.f32 0.0, %v4348
      %v4350 = vpop.f32.mrf.mxu0
      %4351 = vmatprep.mubr.f32.mxu0 0.0
      %4352 = vmatmul.mubr.f32.gmra.mxu0 %v4112
      %v4353 = vpop.f32.mrf.mxu0
      %v4354 = vadd.f32 0.0, %v4353
      %v4355 = vpop.f32.mrf.mxu0
      %4356 = vmatprep.mubr.f32.mxu0 0.0
      %4357 = vmatmul.mubr.f32.gmra.mxu0 %v4115
      %v4358 = vpop.f32.mrf.mxu0
      %v4359 = vadd.f32 0.0, %v4358
      %v4360 = vpop.f32.mrf.mxu0
      %4361 = vmatprep.mubr.f32.mxu0 0.0
      %4362 = vmatmul.mubr.f32.gmra.mxu0 %v4118
      %v4363 = vpop.f32.mrf.mxu0
      %v4364 = vadd.f32 0.0, %v4363
      %v4365 = vpop.f32.mrf.mxu0
      %4366 = vmatprep.mubr.f32.mxu0 0.0
      %4367 = vmatmul.mubr.f32.gmra.mxu0 %v4121
      %v4368 = vpop.f32.mrf.mxu0
      %v4369 = vadd.f32 0.0, %v4368
      %v4370 = vpop.f32.mrf.mxu0
      %4371 = vmatprep.mubr.f32.mxu0 0.0
      %4372 = vmatmul.mubr.f32.gmra.mxu0 %v4124
      %v4373 = vpop.f32.mrf.mxu0
      %v4374 = vadd.f32 0.0, %v4373
      %v4375 = vpop.f32.mrf.mxu0
      %4376 = vmatprep.mubr.f32.mxu0 0.0
      %4377 = vmatmul.mubr.f32.gmra.mxu0 %v4127
      %v4378 = vpop.f32.mrf.mxu0
      %v4379 = vadd.f32 0.0, %v4378
      %v4380 = vpop.f32.mrf.mxu0
      %4381 = vmatprep.mubr.f32.mxu0 0.0
      %4382 = vmatmul.mubr.f32.gmra.mxu0 %v4130
      %v4383 = vpop.f32.mrf.mxu0
      %v4384 = vadd.f32 0.0, %v4383
      %v4385 = vpop.f32.mrf.mxu0
      %4386 = vmatprep.mubr.f32.mxu0 0.0
      %4387 = vmatmul.mubr.f32.gmra.mxu0 %v4133
      %v4388 = vpop.f32.mrf.mxu0
      %v4389 = vadd.f32 0.0, %v4388
      %v4390 = vpop.f32.mrf.mxu0
      %4391 = vmatprep.mubr.f32.mxu0 0.0
      %4392 = vmatmul.mubr.f32.gmra.mxu0 %v4136
      %v4393 = vpop.f32.mrf.mxu0
      %v4394 = vadd.f32 0.0, %v4393
      %v4395 = vpop.f32.mrf.mxu0
      %4396 = vmatprep.mubr.f32.mxu0 0.0
      %4397 = vmatmul.mubr.f32.gmra.mxu0 %v4139
      %v4398 = vpop.f32.mrf.mxu0
      %v4399 = vadd.f32 0.0, %v4398
      %v4400 = vpop.f32.mrf.mxu0
      %4401 = vmatprep.mubr.f32.mxu0 0.0
      %4402 = vmatmul.mubr.f32.gmra.mxu0 %v4142
      %v4403 = vpop.f32.mrf.mxu0
      %v4404 = vadd.f32 0.0, %v4403
      %v4405 = vpop.f32.mrf.mxu0
      %4406 = vmatprep.mubr.f32.mxu0 0.0
      %4407 = vmatmul.mubr.f32.gmra.mxu0 %v4145
      %v4408 = vpop.f32.mrf.mxu0
      %v4409 = vadd.f32 0.0, %v4408
      %v4410 = vpop.f32.mrf.mxu0
      %4411 = vmatprep.mubr.f32.mxu0 0.0
      %4412 = vmatmul.mubr.f32.gmra.mxu0 %v4148
      %v4413 = vpop.f32.mrf.mxu0
      %v4414 = vadd.f32 0.0, %v4413
      %v4415 = vpop.f32.mrf.mxu0
      %4416 = vmatprep.mubr.f32.mxu0 0.0
      %4417 = vmatmul.mubr.f32.gmra.mxu0 %v4151
      %v4418 = vpop.f32.mrf.mxu0
      %v4419 = vadd.f32 0.0, %v4418
      %v4420 = vpop.f32.mrf.mxu0
      %4421 = vmatprep.mubr.f32.mxu0 0.0
      %4422 = vmatmul.mubr.f32.gmra.mxu0 %v4154
      %v4423 = vpop.f32.mrf.mxu0
      %v4424 = vadd.f32 0.0, %v4423
      %v4425 = vpop.f32.mrf.mxu0
      %4426 = vmatprep.mubr.f32.mxu0 0.0
      %4427 = vmatmul.mubr.f32.gmra.mxu0 %v4157
      %v4428 = vpop.f32.mrf.mxu0
      %v4429 = vadd.f32 0.0, %v4428
      %v4430 = vpop.f32.mrf.mxu0
      %4431 = vdwg.mxu0
      %v4432 = vadd.f32 %v3951, %v4229
      %v4433 = vadd.f32 %v3952, %v4234
      %v4434 = vadd.f32 %v3953, %v4239
      %v4435 = vadd.f32 %v3954, %v4244
      %v4436 = vadd.f32 %v3955, %v4249
      %v4437 = vadd.f32 %v3956, %v4254
      %v4438 = vadd.f32 %v3957, %v4259
      %v4439 = vadd.f32 %v3958, %v4264
      %v4440 = vadd.f32 %v3959, %v4269
      %v4441 = vadd.f32 %v3960, %v4274
      %v4442 = vadd.f32 %v3961, %v4279
      %v4443 = vadd.f32 %v3962, %v4284
      %v4444 = vadd.f32 %v3963, %v4289
      %v4445 = vadd.f32 %v3964, %v4294
      %v4446 = vadd.f32 %v3965, %v4299
      %v4447 = vadd.f32 %v3966, %v4304
      %v4448 = vadd.f32 %v3967, %v4309
      %v4449 = vadd.f32 %v3968, %v4314
      %v4450 = vadd.f32 %v3969, %v4319
      %v4451 = vadd.f32 %v3970, %v4324
      %v4452 = vadd.f32 %v3971, %v4329
      %v4453 = vadd.f32 %v3972, %v4334
      %v4454 = vadd.f32 %v3973, %v4339
      %v4455 = vadd.f32 %v3974, %v4344
      %v4456 = vadd.f32 %v3975, %v4349
      %v4457 = vadd.f32 %v3976, %v4354
      %v4458 = vadd.f32 %v3977, %v4359
      %v4459 = vadd.f32 %v3978, %v4364
      %v4460 = vadd.f32 %v3979, %v4369
      %v4461 = vadd.f32 %v3980, %v4374
      %v4462 = vadd.f32 %v3981, %v4379
      %v4463 = vadd.f32 %v3982, %v4384
      %v4464 = vadd.f32 %v3983, %v4389
      %v4465 = vadd.f32 %v3984, %v4394
      %v4466 = vadd.f32 %v3985, %v4399
      %v4467 = vadd.f32 %v3986, %v4404
      %v4468 = vadd.f32 %v3987, %v4409
      %v4469 = vadd.f32 %v3988, %v4414
      %v4470 = vadd.f32 %v3989, %v4419
      %v4471 = vadd.f32 %v3990, %v4424
      %v4472 = vadd.f32 %v3991, %v4429
      %v4473 = vld [vmem:[#allocation2 + $0x2a] sm:$0xff]
      %v4474 = vld [vmem:[#allocation2 + $0x32] sm:$0xff]
      %v4475 = vld [vmem:[#allocation2 + $0x3a] sm:$0xff]
      %v4476 = vld [vmem:[#allocation2 + $0x42] sm:$0xff]
      %v4477 = vld [vmem:[#allocation2 + $0x4a] sm:$0xff]
      %v4478 = vld [vmem:[#allocation2 + $0x52] sm:$0xff]
      %v4479 = vld [vmem:[#allocation2 + $0x5a] sm:$0xff]
      %v4480 = vld [vmem:[#allocation2 + $0x62] sm:$0xff]
      %v4481 = vld [vmem:[#allocation2 + $0x6a] sm:$0xff]
      %v4482 = vld [vmem:[#allocation2 + $0x72] sm:$0xff]
      %v4483 = vld [vmem:[#allocation2 + $0x7a] sm:$0xff]
      %v4484 = vld [vmem:[#allocation2 + $0x82] sm:$0xff]
      %v4485 = vld [vmem:[#allocation2 + $0x8a] sm:$0xff]
      %v4486 = vld [vmem:[#allocation2 + $0x92] sm:$0xff]
      %v4487 = vld [vmem:[#allocation2 + $0x9a] sm:$0xff]
      %v4488 = vld [vmem:[#allocation2 + $0xa2] sm:$0xff]
      %v4489 = vld [vmem:[#allocation2 + $0xaa] sm:$0xff]
      %v4490 = vld [vmem:[#allocation2 + $0xb2] sm:$0xff]
      %v4491 = vld [vmem:[#allocation2 + $0xba] sm:$0xff]
      %v4492 = vld [vmem:[#allocation2 + $0xc2] sm:$0xff]
      %v4493 = vld [vmem:[#allocation2 + $0xca] sm:$0xff]
      %v4494 = vld [vmem:[#allocation2 + $0xd2] sm:$0xff]
      %v4495 = vld [vmem:[#allocation2 + $0xda] sm:$0xff]
      %v4496 = vld [vmem:[#allocation2 + $0xe2] sm:$0xff]
      %v4497 = vld [vmem:[#allocation2 + $0xea] sm:$0xff]
      %v4498 = vld [vmem:[#allocation2 + $0xf2] sm:$0xff]
      %v4499 = vld [vmem:[#allocation2 + $0xfa] sm:$0xff]
      %v4500 = vld [vmem:[#allocation2 + $0x102] sm:$0xff]
      %v4501 = vld [vmem:[#allocation2 + $0x10a] sm:$0xff]
      %v4502 = vld [vmem:[#allocation2 + $0x112] sm:$0xff]
      %v4503 = vld [vmem:[#allocation2 + $0x11a] sm:$0xff]
      %v4504 = vld [vmem:[#allocation2 + $0x122] sm:$0xff]
      %v4505 = vld [vmem:[#allocation2 + $0x12a] sm:$0xff]
      %v4506 = vld [vmem:[#allocation2 + $0x132] sm:$0xff]
      %v4507 = vld [vmem:[#allocation2 + $0x13a] sm:$0xff]
      %v4508 = vld [vmem:[#allocation2 + $0x142] sm:$0xff]
      %v4509 = vld [vmem:[#allocation2 + $0x14a] sm:$0xff]
      %v4510 = vld [vmem:[#allocation2 + $0x152] sm:$0xff]
      %v4511 = vld [vmem:[#allocation2 + $0x15a] sm:$0xff]
      %v4512 = vld [vmem:[#allocation2 + $0x162] sm:$0xff]
      %v4513 = vld [vmem:[#allocation2 + $0x16a] sm:$0xf]
      %s4514 = scalar_lea.vmem %s337, 7
      %v4515 = vld [vmem:[%s4514] sm:$0x1]
      %v4516 = vunpack.c.l.bf16 %v4515
      %v4518 = vsel %vm351, %v4473, 0
      %v4521 = vsel %vm351, %v4474, 0
      %v4524 = vsel %vm351, %v4475, 0
      %v4527 = vsel %vm351, %v4476, 0
      %v4530 = vsel %vm351, %v4477, 0
      %v4533 = vsel %vm351, %v4478, 0
      %v4536 = vsel %vm351, %v4479, 0
      %v4539 = vsel %vm351, %v4480, 0
      %v4542 = vsel %vm351, %v4481, 0
      %v4545 = vsel %vm351, %v4482, 0
      %v4548 = vsel %vm351, %v4483, 0
      %v4551 = vsel %vm351, %v4484, 0
      %v4554 = vsel %vm351, %v4485, 0
      %v4557 = vsel %vm351, %v4486, 0
      %v4560 = vsel %vm351, %v4487, 0
      %v4563 = vsel %vm351, %v4488, 0
      %v4566 = vsel %vm351, %v4489, 0
      %v4569 = vsel %vm351, %v4490, 0
      %v4572 = vsel %vm351, %v4491, 0
      %v4575 = vsel %vm351, %v4492, 0
      %v4578 = vsel %vm351, %v4493, 0
      %v4581 = vsel %vm351, %v4494, 0
      %v4584 = vsel %vm351, %v4495, 0
      %v4587 = vsel %vm351, %v4496, 0
      %v4590 = vsel %vm351, %v4497, 0
      %v4593 = vsel %vm351, %v4498, 0
      %v4596 = vsel %vm351, %v4499, 0
      %v4599 = vsel %vm351, %v4500, 0
      %v4602 = vsel %vm351, %v4501, 0
      %v4605 = vsel %vm351, %v4502, 0
      %v4608 = vsel %vm351, %v4503, 0
      %v4611 = vsel %vm351, %v4504, 0
      %v4614 = vsel %vm351, %v4505, 0
      %v4617 = vsel %vm351, %v4506, 0
      %v4620 = vsel %vm351, %v4507, 0
      %v4623 = vsel %vm351, %v4508, 0
      %v4626 = vsel %vm351, %v4509, 0
      %v4629 = vsel %vm351, %v4510, 0
      %v4632 = vsel %vm351, %v4511, 0
      %v4635 = vsel %vm351, %v4512, 0
      %v4638 = vsel %vm351, %v4513, 0
      %v4641 = vsel %vm616, %v4516, 0
      %4643 = vmatprep.subr.mxu0 0.0
      %4644 = vmatpush1.msra.mxu0 0.0
      %4645 = vmatprep.subr.mxu0 0.0
      %4646 = vmatpush1.msra.mxu0 0.0
      %4647 = vmatprep.subr.mxu0 0.0
      %4648 = vmatpush1.msra.mxu0 0.0
      %4649 = vmatprep.subr.mxu0 0.0
      %4650 = vmatpush1.msra.mxu0 0.0
      %4651 = vmatprep.subr.mxu0 0.0
      %4652 = vmatpush1.msra.mxu0 0.0
      %4653 = vmatprep.subr.mxu0 0.0
      %4654 = vmatpush1.msra.mxu0 0.0
      %4655 = vmatprep.subr.mxu0 0.0
      %4656 = vmatpush1.msra.mxu0 0.0
      %4657 = vmatprep.subr.mxu0 0.0
      %4658 = vmatpush1.msra.mxu0 0.0
      %4659 = vmatprep.subr.mxu0 0.0
      %4660 = vmatpush1.msra.mxu0 0.0
      %4661 = vmatprep.subr.mxu0 0.0
      %4662 = vmatpush1.msra.mxu0 0.0
      %4663 = vmatprep.subr.mxu0 0.0
      %4664 = vmatpush1.msra.mxu0 0.0
      %4665 = vmatprep.subr.mxu0 0.0
      %4666 = vmatpush1.msra.mxu0 0.0
      %4667 = vmatprep.subr.mxu0 0.0
      %4668 = vmatpush1.msra.mxu0 0.0
      %4669 = vmatprep.subr.mxu0 0.0
      %4670 = vmatpush1.msra.mxu0 0.0
      %4671 = vmatprep.subr.mxu0 0.0
      %4672 = vmatpush1.msra.mxu0 0.0
      %4673 = vmatprep.subr.mxu0 0.0
      %4674 = vmatpush1.msra.mxu0 %v4641
      %4675 = vmatprep.subr.mxu0 0.0
      %4676 = vmatpush2.msra.mxu0 0.0
      %4677 = vmatprep.subr.mxu0 0.0
      %4678 = vmatpush2.msra.mxu0 0.0
      %4679 = vmatprep.subr.mxu0 0.0
      %4680 = vmatpush2.msra.mxu0 0.0
      %4681 = vmatprep.subr.mxu0 0.0
      %4682 = vmatpush2.msra.mxu0 0.0
      %4683 = vmatprep.subr.mxu0 0.0
      %4684 = vmatpush2.msra.mxu0 0.0
      %4685 = vmatprep.subr.mxu0 0.0
      %4686 = vmatpush2.msra.mxu0 0.0
      %4687 = vmatprep.subr.mxu0 0.0
      %4688 = vmatpush2.msra.mxu0 0.0
      %4689 = vmatprep.subr.mxu0 0.0
      %4690 = vmatpush2.msra.mxu0 0.0
      %4691 = vmatprep.subr.mxu0 0.0
      %4692 = vmatpush2.msra.mxu0 0.0
      %4693 = vmatprep.subr.mxu0 0.0
      %4694 = vmatpush2.msra.mxu0 0.0
      %4695 = vmatprep.subr.mxu0 0.0
      %4696 = vmatpush2.msra.mxu0 0.0
      %4697 = vmatprep.subr.mxu0 0.0
      %4698 = vmatpush2.msra.mxu0 0.0
      %4699 = vmatprep.subr.mxu0 0.0
      %4700 = vmatpush2.msra.mxu0 0.0
      %4701 = vmatprep.subr.mxu0 0.0
      %4702 = vmatpush2.msra.mxu0 0.0
      %4703 = vmatprep.subr.mxu0 0.0
      %4704 = vmatpush2.msra.mxu0 0.0
      %4705 = vmatprep.subr.mxu0 0.0
      %4706 = vmatpush2.msra.mxu0 0.0
      %4707 = vmatprep.mubr.f32.mxu0 0.0
      %4708 = vmatmul.mubr.f32.gmra.mxu0 %v4518
      %v4709 = vpop.f32.mrf.mxu0
      %v4710 = vadd.f32 0.0, %v4709
      %v4711 = vpop.f32.mrf.mxu0
      %4712 = vmatprep.mubr.f32.mxu0 0.0
      %4713 = vmatmul.mubr.f32.gmra.mxu0 %v4521
      %v4714 = vpop.f32.mrf.mxu0
      %v4715 = vadd.f32 0.0, %v4714
      %v4716 = vpop.f32.mrf.mxu0
      %4717 = vmatprep.mubr.f32.mxu0 0.0
      %4718 = vmatmul.mubr.f32.gmra.mxu0 %v4524
      %v4719 = vpop.f32.mrf.mxu0
      %v4720 = vadd.f32 0.0, %v4719
      %v4721 = vpop.f32.mrf.mxu0
      %4722 = vmatprep.mubr.f32.mxu0 0.0
      %4723 = vmatmul.mubr.f32.gmra.mxu0 %v4527
      %v4724 = vpop.f32.mrf.mxu0
      %v4725 = vadd.f32 0.0, %v4724
      %v4726 = vpop.f32.mrf.mxu0
      %4727 = vmatprep.mubr.f32.mxu0 0.0
      %4728 = vmatmul.mubr.f32.gmra.mxu0 %v4530
      %v4729 = vpop.f32.mrf.mxu0
      %v4730 = vadd.f32 0.0, %v4729
      %v4731 = vpop.f32.mrf.mxu0
      %4732 = vmatprep.mubr.f32.mxu0 0.0
      %4733 = vmatmul.mubr.f32.gmra.mxu0 %v4533
      %v4734 = vpop.f32.mrf.mxu0
      %v4735 = vadd.f32 0.0, %v4734
      %v4736 = vpop.f32.mrf.mxu0
      %4737 = vmatprep.mubr.f32.mxu0 0.0
      %4738 = vmatmul.mubr.f32.gmra.mxu0 %v4536
      %v4739 = vpop.f32.mrf.mxu0
      %v4740 = vadd.f32 0.0, %v4739
      %v4741 = vpop.f32.mrf.mxu0
      %4742 = vmatprep.mubr.f32.mxu0 0.0
      %4743 = vmatmul.mubr.f32.gmra.mxu0 %v4539
      %v4744 = vpop.f32.mrf.mxu0
      %v4745 = vadd.f32 0.0, %v4744
      %v4746 = vpop.f32.mrf.mxu0
      %4747 = vmatprep.mubr.f32.mxu0 0.0
      %4748 = vmatmul.mubr.f32.gmra.mxu0 %v4542
      %v4749 = vpop.f32.mrf.mxu0
      %v4750 = vadd.f32 0.0, %v4749
      %v4751 = vpop.f32.mrf.mxu0
      %4752 = vmatprep.mubr.f32.mxu0 0.0
      %4753 = vmatmul.mubr.f32.gmra.mxu0 %v4545
      %v4754 = vpop.f32.mrf.mxu0
      %v4755 = vadd.f32 0.0, %v4754
      %v4756 = vpop.f32.mrf.mxu0
      %4757 = vmatprep.mubr.f32.mxu0 0.0
      %4758 = vmatmul.mubr.f32.gmra.mxu0 %v4548
      %v4759 = vpop.f32.mrf.mxu0
      %v4760 = vadd.f32 0.0, %v4759
      %v4761 = vpop.f32.mrf.mxu0
      %4762 = vmatprep.mubr.f32.mxu0 0.0
      %4763 = vmatmul.mubr.f32.gmra.mxu0 %v4551
      %v4764 = vpop.f32.mrf.mxu0
      %v4765 = vadd.f32 0.0, %v4764
      %v4766 = vpop.f32.mrf.mxu0
      %4767 = vmatprep.mubr.f32.mxu0 0.0
      %4768 = vmatmul.mubr.f32.gmra.mxu0 %v4554
      %v4769 = vpop.f32.mrf.mxu0
      %v4770 = vadd.f32 0.0, %v4769
      %v4771 = vpop.f32.mrf.mxu0
      %4772 = vmatprep.mubr.f32.mxu0 0.0
      %4773 = vmatmul.mubr.f32.gmra.mxu0 %v4557
      %v4774 = vpop.f32.mrf.mxu0
      %v4775 = vadd.f32 0.0, %v4774
      %v4776 = vpop.f32.mrf.mxu0
      %4777 = vmatprep.mubr.f32.mxu0 0.0
      %4778 = vmatmul.mubr.f32.gmra.mxu0 %v4560
      %v4779 = vpop.f32.mrf.mxu0
      %v4780 = vadd.f32 0.0, %v4779
      %v4781 = vpop.f32.mrf.mxu0
      %4782 = vmatprep.mubr.f32.mxu0 0.0
      %4783 = vmatmul.mubr.f32.gmra.mxu0 %v4563
      %v4784 = vpop.f32.mrf.mxu0
      %v4785 = vadd.f32 0.0, %v4784
      %v4786 = vpop.f32.mrf.mxu0
      %4787 = vmatprep.mubr.f32.mxu0 0.0
      %4788 = vmatmul.mubr.f32.gmra.mxu0 %v4566
      %v4789 = vpop.f32.mrf.mxu0
      %v4790 = vadd.f32 0.0, %v4789
      %v4791 = vpop.f32.mrf.mxu0
      %4792 = vmatprep.mubr.f32.mxu0 0.0
      %4793 = vmatmul.mubr.f32.gmra.mxu0 %v4569
      %v4794 = vpop.f32.mrf.mxu0
      %v4795 = vadd.f32 0.0, %v4794
      %v4796 = vpop.f32.mrf.mxu0
      %4797 = vmatprep.mubr.f32.mxu0 0.0
      %4798 = vmatmul.mubr.f32.gmra.mxu0 %v4572
      %v4799 = vpop.f32.mrf.mxu0
      %v4800 = vadd.f32 0.0, %v4799
      %v4801 = vpop.f32.mrf.mxu0
      %4802 = vmatprep.mubr.f32.mxu0 0.0
      %4803 = vmatmul.mubr.f32.gmra.mxu0 %v4575
      %v4804 = vpop.f32.mrf.mxu0
      %v4805 = vadd.f32 0.0, %v4804
      %v4806 = vpop.f32.mrf.mxu0
      %4807 = vmatprep.mubr.f32.mxu0 0.0
      %4808 = vmatmul.mubr.f32.gmra.mxu0 %v4578
      %v4809 = vpop.f32.mrf.mxu0
      %v4810 = vadd.f32 0.0, %v4809
      %v4811 = vpop.f32.mrf.mxu0
      %4812 = vmatprep.mubr.f32.mxu0 0.0
      %4813 = vmatmul.mubr.f32.gmra.mxu0 %v4581
      %v4814 = vpop.f32.mrf.mxu0
      %v4815 = vadd.f32 0.0, %v4814
      %v4816 = vpop.f32.mrf.mxu0
      %4817 = vmatprep.mubr.f32.mxu0 0.0
      %4818 = vmatmul.mubr.f32.gmra.mxu0 %v4584
      %v4819 = vpop.f32.mrf.mxu0
      %v4820 = vadd.f32 0.0, %v4819
      %v4821 = vpop.f32.mrf.mxu0
      %4822 = vmatprep.mubr.f32.mxu0 0.0
      %4823 = vmatmul.mubr.f32.gmra.mxu0 %v4587
      %v4824 = vpop.f32.mrf.mxu0
      %v4825 = vadd.f32 0.0, %v4824
      %v4826 = vpop.f32.mrf.mxu0
      %4827 = vmatprep.mubr.f32.mxu0 0.0
      %4828 = vmatmul.mubr.f32.gmra.mxu0 %v4590
      %v4829 = vpop.f32.mrf.mxu0
      %v4830 = vadd.f32 0.0, %v4829
      %v4831 = vpop.f32.mrf.mxu0
      %4832 = vmatprep.mubr.f32.mxu0 0.0
      %4833 = vmatmul.mubr.f32.gmra.mxu0 %v4593
      %v4834 = vpop.f32.mrf.mxu0
      %v4835 = vadd.f32 0.0, %v4834
      %v4836 = vpop.f32.mrf.mxu0
      %4837 = vmatprep.mubr.f32.mxu0 0.0
      %4838 = vmatmul.mubr.f32.gmra.mxu0 %v4596
      %v4839 = vpop.f32.mrf.mxu0
      %v4840 = vadd.f32 0.0, %v4839
      %v4841 = vpop.f32.mrf.mxu0
      %4842 = vmatprep.mubr.f32.mxu0 0.0
      %4843 = vmatmul.mubr.f32.gmra.mxu0 %v4599
      %v4844 = vpop.f32.mrf.mxu0
      %v4845 = vadd.f32 0.0, %v4844
      %v4846 = vpop.f32.mrf.mxu0
      %4847 = vmatprep.mubr.f32.mxu0 0.0
      %4848 = vmatmul.mubr.f32.gmra.mxu0 %v4602
      %v4849 = vpop.f32.mrf.mxu0
      %v4850 = vadd.f32 0.0, %v4849
      %v4851 = vpop.f32.mrf.mxu0
      %4852 = vmatprep.mubr.f32.mxu0 0.0
      %4853 = vmatmul.mubr.f32.gmra.mxu0 %v4605
      %v4854 = vpop.f32.mrf.mxu0
      %v4855 = vadd.f32 0.0, %v4854
      %v4856 = vpop.f32.mrf.mxu0
      %4857 = vmatprep.mubr.f32.mxu0 0.0
      %4858 = vmatmul.mubr.f32.gmra.mxu0 %v4608
      %v4859 = vpop.f32.mrf.mxu0
      %v4860 = vadd.f32 0.0, %v4859
      %v4861 = vpop.f32.mrf.mxu0
      %4862 = vmatprep.mubr.f32.mxu0 0.0
      %4863 = vmatmul.mubr.f32.gmra.mxu0 %v4611
      %v4864 = vpop.f32.mrf.mxu0
      %v4865 = vadd.f32 0.0, %v4864
      %v4866 = vpop.f32.mrf.mxu0
      %4867 = vmatprep.mubr.f32.mxu0 0.0
      %4868 = vmatmul.mubr.f32.gmra.mxu0 %v4614
      %v4869 = vpop.f32.mrf.mxu0
      %v4870 = vadd.f32 0.0, %v4869
      %v4871 = vpop.f32.mrf.mxu0
      %4872 = vmatprep.mubr.f32.mxu0 0.0
      %4873 = vmatmul.mubr.f32.gmra.mxu0 %v4617
      %v4874 = vpop.f32.mrf.mxu0
      %v4875 = vadd.f32 0.0, %v4874
      %v4876 = vpop.f32.mrf.mxu0
      %4877 = vmatprep.mubr.f32.mxu0 0.0
      %4878 = vmatmul.mubr.f32.gmra.mxu0 %v4620
      %v4879 = vpop.f32.mrf.mxu0
      %v4880 = vadd.f32 0.0, %v4879
      %v4881 = vpop.f32.mrf.mxu0
      %4882 = vmatprep.mubr.f32.mxu0 0.0
      %4883 = vmatmul.mubr.f32.gmra.mxu0 %v4623
      %v4884 = vpop.f32.mrf.mxu0
      %v4885 = vadd.f32 0.0, %v4884
      %v4886 = vpop.f32.mrf.mxu0
      %4887 = vmatprep.mubr.f32.mxu0 0.0
      %4888 = vmatmul.mubr.f32.gmra.mxu0 %v4626
      %v4889 = vpop.f32.mrf.mxu0
      %v4890 = vadd.f32 0.0, %v4889
      %v4891 = vpop.f32.mrf.mxu0
      %4892 = vmatprep.mubr.f32.mxu0 0.0
      %4893 = vmatmul.mubr.f32.gmra.mxu0 %v4629
      %v4894 = vpop.f32.mrf.mxu0
      %v4895 = vadd.f32 0.0, %v4894
      %v4896 = vpop.f32.mrf.mxu0
      %4897 = vmatprep.mubr.f32.mxu0 0.0
      %4898 = vmatmul.mubr.f32.gmra.mxu0 %v4632
      %v4899 = vpop.f32.mrf.mxu0
      %v4900 = vadd.f32 0.0, %v4899
      %v4901 = vpop.f32.mrf.mxu0
      %4902 = vmatprep.mubr.f32.mxu0 0.0
      %4903 = vmatmul.mubr.f32.gmra.mxu0 %v4635
      %v4904 = vpop.f32.mrf.mxu0
      %v4905 = vadd.f32 0.0, %v4904
      %v4906 = vpop.f32.mrf.mxu0
      %4907 = vmatprep.mubr.f32.mxu0 0.0
      %4908 = vmatmul.mubr.f32.gmra.mxu0 %v4638
      %v4909 = vpop.f32.mrf.mxu0
      %v4910 = vadd.f32 0.0, %v4909
      %v4911 = vpop.f32.mrf.mxu0
      %4912 = vdwg.mxu0
      %v4913 = vadd.f32 %v4432, %v4710
      %v4914 = vadd.f32 %v4433, %v4715
      %v4915 = vadd.f32 %v4434, %v4720
      %v4916 = vadd.f32 %v4435, %v4725
      %v4917 = vadd.f32 %v4436, %v4730
      %v4918 = vadd.f32 %v4437, %v4735
      %v4919 = vadd.f32 %v4438, %v4740
      %v4920 = vadd.f32 %v4439, %v4745
      %v4921 = vadd.f32 %v4440, %v4750
      %v4922 = vadd.f32 %v4441, %v4755
      %v4923 = vadd.f32 %v4442, %v4760
      %v4924 = vadd.f32 %v4443, %v4765
      %v4925 = vadd.f32 %v4444, %v4770
      %v4926 = vadd.f32 %v4445, %v4775
      %v4927 = vadd.f32 %v4446, %v4780
      %v4928 = vadd.f32 %v4447, %v4785
      %v4929 = vadd.f32 %v4448, %v4790
      %v4930 = vadd.f32 %v4449, %v4795
      %v4931 = vadd.f32 %v4450, %v4800
      %v4932 = vadd.f32 %v4451, %v4805
      %v4933 = vadd.f32 %v4452, %v4810
      %v4934 = vadd.f32 %v4453, %v4815
      %v4935 = vadd.f32 %v4454, %v4820
      %v4936 = vadd.f32 %v4455, %v4825
      %v4937 = vadd.f32 %v4456, %v4830
      %v4938 = vadd.f32 %v4457, %v4835
      %v4939 = vadd.f32 %v4458, %v4840
      %v4940 = vadd.f32 %v4459, %v4845
      %v4941 = vadd.f32 %v4460, %v4850
      %v4942 = vadd.f32 %v4461, %v4855
      %v4943 = vadd.f32 %v4462, %v4860
      %v4944 = vadd.f32 %v4463, %v4865
      %v4945 = vadd.f32 %v4464, %v4870
      %v4946 = vadd.f32 %v4465, %v4875
      %v4947 = vadd.f32 %v4466, %v4880
      %v4948 = vadd.f32 %v4467, %v4885
      %v4949 = vadd.f32 %v4468, %v4890
      %v4950 = vadd.f32 %v4469, %v4895
      %v4951 = vadd.f32 %v4470, %v4900
      %v4952 = vadd.f32 %v4471, %v4905
      %v4953 = vadd.f32 %v4472, %v4910
      %v4954 = vld [vmem:[#allocation2 + $0x2b] sm:$0xff]
      %v4955 = vld [vmem:[#allocation2 + $0x33] sm:$0xff]
      %v4956 = vld [vmem:[#allocation2 + $0x3b] sm:$0xff]
      %v4957 = vld [vmem:[#allocation2 + $0x43] sm:$0xff]
      %v4958 = vld [vmem:[#allocation2 + $0x4b] sm:$0xff]
      %v4959 = vld [vmem:[#allocation2 + $0x53] sm:$0xff]
      %v4960 = vld [vmem:[#allocation2 + $0x5b] sm:$0xff]
      %v4961 = vld [vmem:[#allocation2 + $0x63] sm:$0xff]
      %v4962 = vld [vmem:[#allocation2 + $0x6b] sm:$0xff]
      %v4963 = vld [vmem:[#allocation2 + $0x73] sm:$0xff]
      %v4964 = vld [vmem:[#allocation2 + $0x7b] sm:$0xff]
      %v4965 = vld [vmem:[#allocation2 + $0x83] sm:$0xff]
      %v4966 = vld [vmem:[#allocation2 + $0x8b] sm:$0xff]
      %v4967 = vld [vmem:[#allocation2 + $0x93] sm:$0xff]
      %v4968 = vld [vmem:[#allocation2 + $0x9b] sm:$0xff]
      %v4969 = vld [vmem:[#allocation2 + $0xa3] sm:$0xff]
      %v4970 = vld [vmem:[#allocation2 + $0xab] sm:$0xff]
      %v4971 = vld [vmem:[#allocation2 + $0xb3] sm:$0xff]
      %v4972 = vld [vmem:[#allocation2 + $0xbb] sm:$0xff]
      %v4973 = vld [vmem:[#allocation2 + $0xc3] sm:$0xff]
      %v4974 = vld [vmem:[#allocation2 + $0xcb] sm:$0xff]
      %v4975 = vld [vmem:[#allocation2 + $0xd3] sm:$0xff]
      %v4976 = vld [vmem:[#allocation2 + $0xdb] sm:$0xff]
      %v4977 = vld [vmem:[#allocation2 + $0xe3] sm:$0xff]
      %v4978 = vld [vmem:[#allocation2 + $0xeb] sm:$0xff]
      %v4979 = vld [vmem:[#allocation2 + $0xf3] sm:$0xff]
      %v4980 = vld [vmem:[#allocation2 + $0xfb] sm:$0xff]
      %v4981 = vld [vmem:[#allocation2 + $0x103] sm:$0xff]
      %v4982 = vld [vmem:[#allocation2 + $0x10b] sm:$0xff]
      %v4983 = vld [vmem:[#allocation2 + $0x113] sm:$0xff]
      %v4984 = vld [vmem:[#allocation2 + $0x11b] sm:$0xff]
      %v4985 = vld [vmem:[#allocation2 + $0x123] sm:$0xff]
      %v4986 = vld [vmem:[#allocation2 + $0x12b] sm:$0xff]
      %v4987 = vld [vmem:[#allocation2 + $0x133] sm:$0xff]
      %v4988 = vld [vmem:[#allocation2 + $0x13b] sm:$0xff]
      %v4989 = vld [vmem:[#allocation2 + $0x143] sm:$0xff]
      %v4990 = vld [vmem:[#allocation2 + $0x14b] sm:$0xff]
      %v4991 = vld [vmem:[#allocation2 + $0x153] sm:$0xff]
      %v4992 = vld [vmem:[#allocation2 + $0x15b] sm:$0xff]
      %v4993 = vld [vmem:[#allocation2 + $0x163] sm:$0xff]
      %v4994 = vld [vmem:[#allocation2 + $0x16b] sm:$0xf]
      %s4995 = scalar_lea.vmem %s337, 8
      %v4996 = vld [vmem:[%s4995] sm:$0x1]
      %v4997 = vunpack.c.l.bf16 %v4996
      %v4999 = vsel %vm351, %v4954, 0
      %v5002 = vsel %vm351, %v4955, 0
      %v5005 = vsel %vm351, %v4956, 0
      %v5008 = vsel %vm351, %v4957, 0
      %v5011 = vsel %vm351, %v4958, 0
      %v5014 = vsel %vm351, %v4959, 0
      %v5017 = vsel %vm351, %v4960, 0
      %v5020 = vsel %vm351, %v4961, 0
      %v5023 = vsel %vm351, %v4962, 0
      %v5026 = vsel %vm351, %v4963, 0
      %v5029 = vsel %vm351, %v4964, 0
      %v5032 = vsel %vm351, %v4965, 0
      %v5035 = vsel %vm351, %v4966, 0
      %v5038 = vsel %vm351, %v4967, 0
      %v5041 = vsel %vm351, %v4968, 0
      %v5044 = vsel %vm351, %v4969, 0
      %v5047 = vsel %vm351, %v4970, 0
      %v5050 = vsel %vm351, %v4971, 0
      %v5053 = vsel %vm351, %v4972, 0
      %v5056 = vsel %vm351, %v4973, 0
      %v5059 = vsel %vm351, %v4974, 0
      %v5062 = vsel %vm351, %v4975, 0
      %v5065 = vsel %vm351, %v4976, 0
      %v5068 = vsel %vm351, %v4977, 0
      %v5071 = vsel %vm351, %v4978, 0
      %v5074 = vsel %vm351, %v4979, 0
      %v5077 = vsel %vm351, %v4980, 0
      %v5080 = vsel %vm351, %v4981, 0
      %v5083 = vsel %vm351, %v4982, 0
      %v5086 = vsel %vm351, %v4983, 0
      %v5089 = vsel %vm351, %v4984, 0
      %v5092 = vsel %vm351, %v4985, 0
      %v5095 = vsel %vm351, %v4986, 0
      %v5098 = vsel %vm351, %v4987, 0
      %v5101 = vsel %vm351, %v4988, 0
      %v5104 = vsel %vm351, %v4989, 0
      %v5107 = vsel %vm351, %v4990, 0
      %v5110 = vsel %vm351, %v4991, 0
      %v5113 = vsel %vm351, %v4992, 0
      %v5116 = vsel %vm351, %v4993, 0
      %v5119 = vsel %vm351, %v4994, 0
      %v5122 = vsel %vm616, %v4997, 0
      %5124 = vmatprep.subr.mxu0 0.0
      %5125 = vmatpush1.msra.mxu0 0.0
      %5126 = vmatprep.subr.mxu0 0.0
      %5127 = vmatpush1.msra.mxu0 0.0
      %5128 = vmatprep.subr.mxu0 0.0
      %5129 = vmatpush1.msra.mxu0 0.0
      %5130 = vmatprep.subr.mxu0 0.0
      %5131 = vmatpush1.msra.mxu0 0.0
      %5132 = vmatprep.subr.mxu0 0.0
      %5133 = vmatpush1.msra.mxu0 0.0
      %5134 = vmatprep.subr.mxu0 0.0
      %5135 = vmatpush1.msra.mxu0 0.0
      %5136 = vmatprep.subr.mxu0 0.0
      %5137 = vmatpush1.msra.mxu0 0.0
      %5138 = vmatprep.subr.mxu0 0.0
      %5139 = vmatpush1.msra.mxu0 0.0
      %5140 = vmatprep.subr.mxu0 0.0
      %5141 = vmatpush1.msra.mxu0 0.0
      %5142 = vmatprep.subr.mxu0 0.0
      %5143 = vmatpush1.msra.mxu0 0.0
      %5144 = vmatprep.subr.mxu0 0.0
      %5145 = vmatpush1.msra.mxu0 0.0
      %5146 = vmatprep.subr.mxu0 0.0
      %5147 = vmatpush1.msra.mxu0 0.0
      %5148 = vmatprep.subr.mxu0 0.0
      %5149 = vmatpush1.msra.mxu0 0.0
      %5150 = vmatprep.subr.mxu0 0.0
      %5151 = vmatpush1.msra.mxu0 0.0
      %5152 = vmatprep.subr.mxu0 0.0
      %5153 = vmatpush1.msra.mxu0 0.0
      %5154 = vmatprep.subr.mxu0 0.0
      %5155 = vmatpush1.msra.mxu0 %v5122
      %5156 = vmatprep.subr.mxu0 0.0
      %5157 = vmatpush2.msra.mxu0 0.0
      %5158 = vmatprep.subr.mxu0 0.0
      %5159 = vmatpush2.msra.mxu0 0.0
      %5160 = vmatprep.subr.mxu0 0.0
      %5161 = vmatpush2.msra.mxu0 0.0
      %5162 = vmatprep.subr.mxu0 0.0
      %5163 = vmatpush2.msra.mxu0 0.0
      %5164 = vmatprep.subr.mxu0 0.0
      %5165 = vmatpush2.msra.mxu0 0.0
      %5166 = vmatprep.subr.mxu0 0.0
      %5167 = vmatpush2.msra.mxu0 0.0
      %5168 = vmatprep.subr.mxu0 0.0
      %5169 = vmatpush2.msra.mxu0 0.0
      %5170 = vmatprep.subr.mxu0 0.0
      %5171 = vmatpush2.msra.mxu0 0.0
      %5172 = vmatprep.subr.mxu0 0.0
      %5173 = vmatpush2.msra.mxu0 0.0
      %5174 = vmatprep.subr.mxu0 0.0
      %5175 = vmatpush2.msra.mxu0 0.0
      %5176 = vmatprep.subr.mxu0 0.0
      %5177 = vmatpush2.msra.mxu0 0.0
      %5178 = vmatprep.subr.mxu0 0.0
      %5179 = vmatpush2.msra.mxu0 0.0
      %5180 = vmatprep.subr.mxu0 0.0
      %5181 = vmatpush2.msra.mxu0 0.0
      %5182 = vmatprep.subr.mxu0 0.0
      %5183 = vmatpush2.msra.mxu0 0.0
      %5184 = vmatprep.subr.mxu0 0.0
      %5185 = vmatpush2.msra.mxu0 0.0
      %5186 = vmatprep.subr.mxu0 0.0
      %5187 = vmatpush2.msra.mxu0 0.0
      %5188 = vmatprep.mubr.f32.mxu0 0.0
      %5189 = vmatmul.mubr.f32.gmra.mxu0 %v4999
      %v5190 = vpop.f32.mrf.mxu0
      %v5191 = vadd.f32 0.0, %v5190
      %v5192 = vpop.f32.mrf.mxu0
      %5193 = vmatprep.mubr.f32.mxu0 0.0
      %5194 = vmatmul.mubr.f32.gmra.mxu0 %v5002
      %v5195 = vpop.f32.mrf.mxu0
      %v5196 = vadd.f32 0.0, %v5195
      %v5197 = vpop.f32.mrf.mxu0
      %5198 = vmatprep.mubr.f32.mxu0 0.0
      %5199 = vmatmul.mubr.f32.gmra.mxu0 %v5005
      %v5200 = vpop.f32.mrf.mxu0
      %v5201 = vadd.f32 0.0, %v5200
      %v5202 = vpop.f32.mrf.mxu0
      %5203 = vmatprep.mubr.f32.mxu0 0.0
      %5204 = vmatmul.mubr.f32.gmra.mxu0 %v5008
      %v5205 = vpop.f32.mrf.mxu0
      %v5206 = vadd.f32 0.0, %v5205
      %v5207 = vpop.f32.mrf.mxu0
      %5208 = vmatprep.mubr.f32.mxu0 0.0
      %5209 = vmatmul.mubr.f32.gmra.mxu0 %v5011
      %v5210 = vpop.f32.mrf.mxu0
      %v5211 = vadd.f32 0.0, %v5210
      %v5212 = vpop.f32.mrf.mxu0
      %5213 = vmatprep.mubr.f32.mxu0 0.0
      %5214 = vmatmul.mubr.f32.gmra.mxu0 %v5014
      %v5215 = vpop.f32.mrf.mxu0
      %v5216 = vadd.f32 0.0, %v5215
      %v5217 = vpop.f32.mrf.mxu0
      %5218 = vmatprep.mubr.f32.mxu0 0.0
      %5219 = vmatmul.mubr.f32.gmra.mxu0 %v5017
      %v5220 = vpop.f32.mrf.mxu0
      %v5221 = vadd.f32 0.0, %v5220
      %v5222 = vpop.f32.mrf.mxu0
      %5223 = vmatprep.mubr.f32.mxu0 0.0
      %5224 = vmatmul.mubr.f32.gmra.mxu0 %v5020
      %v5225 = vpop.f32.mrf.mxu0
      %v5226 = vadd.f32 0.0, %v5225
      %v5227 = vpop.f32.mrf.mxu0
      %5228 = vmatprep.mubr.f32.mxu0 0.0
      %5229 = vmatmul.mubr.f32.gmra.mxu0 %v5023
      %v5230 = vpop.f32.mrf.mxu0
      %v5231 = vadd.f32 0.0, %v5230
      %v5232 = vpop.f32.mrf.mxu0
      %5233 = vmatprep.mubr.f32.mxu0 0.0
      %5234 = vmatmul.mubr.f32.gmra.mxu0 %v5026
      %v5235 = vpop.f32.mrf.mxu0
      %v5236 = vadd.f32 0.0, %v5235
      %v5237 = vpop.f32.mrf.mxu0
      %5238 = vmatprep.mubr.f32.mxu0 0.0
      %5239 = vmatmul.mubr.f32.gmra.mxu0 %v5029
      %v5240 = vpop.f32.mrf.mxu0
      %v5241 = vadd.f32 0.0, %v5240
      %v5242 = vpop.f32.mrf.mxu0
      %5243 = vmatprep.mubr.f32.mxu0 0.0
      %5244 = vmatmul.mubr.f32.gmra.mxu0 %v5032
      %v5245 = vpop.f32.mrf.mxu0
      %v5246 = vadd.f32 0.0, %v5245
      %v5247 = vpop.f32.mrf.mxu0
      %5248 = vmatprep.mubr.f32.mxu0 0.0
      %5249 = vmatmul.mubr.f32.gmra.mxu0 %v5035
      %v5250 = vpop.f32.mrf.mxu0
      %v5251 = vadd.f32 0.0, %v5250
      %v5252 = vpop.f32.mrf.mxu0
      %5253 = vmatprep.mubr.f32.mxu0 0.0
      %5254 = vmatmul.mubr.f32.gmra.mxu0 %v5038
      %v5255 = vpop.f32.mrf.mxu0
      %v5256 = vadd.f32 0.0, %v5255
      %v5257 = vpop.f32.mrf.mxu0
      %5258 = vmatprep.mubr.f32.mxu0 0.0
      %5259 = vmatmul.mubr.f32.gmra.mxu0 %v5041
      %v5260 = vpop.f32.mrf.mxu0
      %v5261 = vadd.f32 0.0, %v5260
      %v5262 = vpop.f32.mrf.mxu0
      %5263 = vmatprep.mubr.f32.mxu0 0.0
      %5264 = vmatmul.mubr.f32.gmra.mxu0 %v5044
      %v5265 = vpop.f32.mrf.mxu0
      %v5266 = vadd.f32 0.0, %v5265
      %v5267 = vpop.f32.mrf.mxu0
      %5268 = vmatprep.mubr.f32.mxu0 0.0
      %5269 = vmatmul.mubr.f32.gmra.mxu0 %v5047
      %v5270 = vpop.f32.mrf.mxu0
      %v5271 = vadd.f32 0.0, %v5270
      %v5272 = vpop.f32.mrf.mxu0
      %5273 = vmatprep.mubr.f32.mxu0 0.0
      %5274 = vmatmul.mubr.f32.gmra.mxu0 %v5050
      %v5275 = vpop.f32.mrf.mxu0
      %v5276 = vadd.f32 0.0, %v5275
      %v5277 = vpop.f32.mrf.mxu0
      %5278 = vmatprep.mubr.f32.mxu0 0.0
      %5279 = vmatmul.mubr.f32.gmra.mxu0 %v5053
      %v5280 = vpop.f32.mrf.mxu0
      %v5281 = vadd.f32 0.0, %v5280
      %v5282 = vpop.f32.mrf.mxu0
      %5283 = vmatprep.mubr.f32.mxu0 0.0
      %5284 = vmatmul.mubr.f32.gmra.mxu0 %v5056
      %v5285 = vpop.f32.mrf.mxu0
      %v5286 = vadd.f32 0.0, %v5285
      %v5287 = vpop.f32.mrf.mxu0
      %5288 = vmatprep.mubr.f32.mxu0 0.0
      %5289 = vmatmul.mubr.f32.gmra.mxu0 %v5059
      %v5290 = vpop.f32.mrf.mxu0
      %v5291 = vadd.f32 0.0, %v5290
      %v5292 = vpop.f32.mrf.mxu0
      %5293 = vmatprep.mubr.f32.mxu0 0.0
      %5294 = vmatmul.mubr.f32.gmra.mxu0 %v5062
      %v5295 = vpop.f32.mrf.mxu0
      %v5296 = vadd.f32 0.0, %v5295
      %v5297 = vpop.f32.mrf.mxu0
      %5298 = vmatprep.mubr.f32.mxu0 0.0
      %5299 = vmatmul.mubr.f32.gmra.mxu0 %v5065
      %v5300 = vpop.f32.mrf.mxu0
      %v5301 = vadd.f32 0.0, %v5300
      %v5302 = vpop.f32.mrf.mxu0
      %5303 = vmatprep.mubr.f32.mxu0 0.0
      %5304 = vmatmul.mubr.f32.gmra.mxu0 %v5068
      %v5305 = vpop.f32.mrf.mxu0
      %v5306 = vadd.f32 0.0, %v5305
      %v5307 = vpop.f32.mrf.mxu0
      %5308 = vmatprep.mubr.f32.mxu0 0.0
      %5309 = vmatmul.mubr.f32.gmra.mxu0 %v5071
      %v5310 = vpop.f32.mrf.mxu0
      %v5311 = vadd.f32 0.0, %v5310
      %v5312 = vpop.f32.mrf.mxu0
      %5313 = vmatprep.mubr.f32.mxu0 0.0
      %5314 = vmatmul.mubr.f32.gmra.mxu0 %v5074
      %v5315 = vpop.f32.mrf.mxu0
      %v5316 = vadd.f32 0.0, %v5315
      %v5317 = vpop.f32.mrf.mxu0
      %5318 = vmatprep.mubr.f32.mxu0 0.0
      %5319 = vmatmul.mubr.f32.gmra.mxu0 %v5077
      %v5320 = vpop.f32.mrf.mxu0
      %v5321 = vadd.f32 0.0, %v5320
      %v5322 = vpop.f32.mrf.mxu0
      %5323 = vmatprep.mubr.f32.mxu0 0.0
      %5324 = vmatmul.mubr.f32.gmra.mxu0 %v5080
      %v5325 = vpop.f32.mrf.mxu0
      %v5326 = vadd.f32 0.0, %v5325
      %v5327 = vpop.f32.mrf.mxu0
      %5328 = vmatprep.mubr.f32.mxu0 0.0
      %5329 = vmatmul.mubr.f32.gmra.mxu0 %v5083
      %v5330 = vpop.f32.mrf.mxu0
      %v5331 = vadd.f32 0.0, %v5330
      %v5332 = vpop.f32.mrf.mxu0
      %5333 = vmatprep.mubr.f32.mxu0 0.0
      %5334 = vmatmul.mubr.f32.gmra.mxu0 %v5086
      %v5335 = vpop.f32.mrf.mxu0
      %v5336 = vadd.f32 0.0, %v5335
      %v5337 = vpop.f32.mrf.mxu0
      %5338 = vmatprep.mubr.f32.mxu0 0.0
      %5339 = vmatmul.mubr.f32.gmra.mxu0 %v5089
      %v5340 = vpop.f32.mrf.mxu0
      %v5341 = vadd.f32 0.0, %v5340
      %v5342 = vpop.f32.mrf.mxu0
      %5343 = vmatprep.mubr.f32.mxu0 0.0
      %5344 = vmatmul.mubr.f32.gmra.mxu0 %v5092
      %v5345 = vpop.f32.mrf.mxu0
      %v5346 = vadd.f32 0.0, %v5345
      %v5347 = vpop.f32.mrf.mxu0
      %5348 = vmatprep.mubr.f32.mxu0 0.0
      %5349 = vmatmul.mubr.f32.gmra.mxu0 %v5095
      %v5350 = vpop.f32.mrf.mxu0
      %v5351 = vadd.f32 0.0, %v5350
      %v5352 = vpop.f32.mrf.mxu0
      %5353 = vmatprep.mubr.f32.mxu0 0.0
      %5354 = vmatmul.mubr.f32.gmra.mxu0 %v5098
      %v5355 = vpop.f32.mrf.mxu0
      %v5356 = vadd.f32 0.0, %v5355
      %v5357 = vpop.f32.mrf.mxu0
      %5358 = vmatprep.mubr.f32.mxu0 0.0
      %5359 = vmatmul.mubr.f32.gmra.mxu0 %v5101
      %v5360 = vpop.f32.mrf.mxu0
      %v5361 = vadd.f32 0.0, %v5360
      %v5362 = vpop.f32.mrf.mxu0
      %5363 = vmatprep.mubr.f32.mxu0 0.0
      %5364 = vmatmul.mubr.f32.gmra.mxu0 %v5104
      %v5365 = vpop.f32.mrf.mxu0
      %v5366 = vadd.f32 0.0, %v5365
      %v5367 = vpop.f32.mrf.mxu0
      %5368 = vmatprep.mubr.f32.mxu0 0.0
      %5369 = vmatmul.mubr.f32.gmra.mxu0 %v5107
      %v5370 = vpop.f32.mrf.mxu0
      %v5371 = vadd.f32 0.0, %v5370
      %v5372 = vpop.f32.mrf.mxu0
      %5373 = vmatprep.mubr.f32.mxu0 0.0
      %5374 = vmatmul.mubr.f32.gmra.mxu0 %v5110
      %v5375 = vpop.f32.mrf.mxu0
      %v5376 = vadd.f32 0.0, %v5375
      %v5377 = vpop.f32.mrf.mxu0
      %5378 = vmatprep.mubr.f32.mxu0 0.0
      %5379 = vmatmul.mubr.f32.gmra.mxu0 %v5113
      %v5380 = vpop.f32.mrf.mxu0
      %v5381 = vadd.f32 0.0, %v5380
      %v5382 = vpop.f32.mrf.mxu0
      %5383 = vmatprep.mubr.f32.mxu0 0.0
      %5384 = vmatmul.mubr.f32.gmra.mxu0 %v5116
      %v5385 = vpop.f32.mrf.mxu0
      %v5386 = vadd.f32 0.0, %v5385
      %v5387 = vpop.f32.mrf.mxu0
      %5388 = vmatprep.mubr.f32.mxu0 0.0
      %5389 = vmatmul.mubr.f32.gmra.mxu0 %v5119
      %v5390 = vpop.f32.mrf.mxu0
      %v5391 = vadd.f32 0.0, %v5390
      %v5392 = vpop.f32.mrf.mxu0
      %5393 = vdwg.mxu0
      %v5394 = vadd.f32 %v4913, %v5191
      %v5395 = vadd.f32 %v4914, %v5196
      %v5396 = vadd.f32 %v4915, %v5201
      %v5397 = vadd.f32 %v4916, %v5206
      %v5398 = vadd.f32 %v4917, %v5211
      %v5399 = vadd.f32 %v4918, %v5216
      %v5400 = vadd.f32 %v4919, %v5221
      %v5401 = vadd.f32 %v4920, %v5226
      %v5402 = vadd.f32 %v4921, %v5231
      %v5403 = vadd.f32 %v4922, %v5236
      %v5404 = vadd.f32 %v4923, %v5241
      %v5405 = vadd.f32 %v4924, %v5246
      %v5406 = vadd.f32 %v4925, %v5251
      %v5407 = vadd.f32 %v4926, %v5256
      %v5408 = vadd.f32 %v4927, %v5261
      %v5409 = vadd.f32 %v4928, %v5266
      %v5410 = vadd.f32 %v4929, %v5271
      %v5411 = vadd.f32 %v4930, %v5276
      %v5412 = vadd.f32 %v4931, %v5281
      %v5413 = vadd.f32 %v4932, %v5286
      %v5414 = vadd.f32 %v4933, %v5291
      %v5415 = vadd.f32 %v4934, %v5296
      %v5416 = vadd.f32 %v4935, %v5301
      %v5417 = vadd.f32 %v4936, %v5306
      %v5418 = vadd.f32 %v4937, %v5311
      %v5419 = vadd.f32 %v4938, %v5316
      %v5420 = vadd.f32 %v4939, %v5321
      %v5421 = vadd.f32 %v4940, %v5326
      %v5422 = vadd.f32 %v4941, %v5331
      %v5423 = vadd.f32 %v4942, %v5336
      %v5424 = vadd.f32 %v4943, %v5341
      %v5425 = vadd.f32 %v4944, %v5346
      %v5426 = vadd.f32 %v4945, %v5351
      %v5427 = vadd.f32 %v4946, %v5356
      %v5428 = vadd.f32 %v4947, %v5361
      %v5429 = vadd.f32 %v4948, %v5366
      %v5430 = vadd.f32 %v4949, %v5371
      %v5431 = vadd.f32 %v4950, %v5376
      %v5432 = vadd.f32 %v4951, %v5381
      %v5433 = vadd.f32 %v4952, %v5386
      %v5434 = vadd.f32 %v4953, %v5391
      %v5435 = vld [vmem:[%s340] sm:$0x1]
      %v5437 = vlaneseq
      %v5438 = vshrl.u32 %v5437, 7
      %v5439 = vsub.s32 0, %v5438
      %v5440 = vrot.slane %v5435, %v5439
      %v5442 = vadd.f32 %v5394, %v5440
      %v5443 = vadd.f32 %v5395, %v5440
      %v5444 = vadd.f32 %v5396, %v5440
      %v5445 = vadd.f32 %v5397, %v5440
      %v5446 = vadd.f32 %v5398, %v5440
      %v5447 = vadd.f32 %v5399, %v5440
      %v5448 = vadd.f32 %v5400, %v5440
      %v5449 = vadd.f32 %v5401, %v5440
      %v5450 = vadd.f32 %v5402, %v5440
      %v5451 = vadd.f32 %v5403, %v5440
      %v5452 = vadd.f32 %v5404, %v5440
      %v5453 = vadd.f32 %v5405, %v5440
      %v5454 = vadd.f32 %v5406, %v5440
      %v5455 = vadd.f32 %v5407, %v5440
      %v5456 = vadd.f32 %v5408, %v5440
      %v5457 = vadd.f32 %v5409, %v5440
      %v5458 = vadd.f32 %v5410, %v5440
      %v5459 = vadd.f32 %v5411, %v5440
      %v5460 = vadd.f32 %v5412, %v5440
      %v5461 = vadd.f32 %v5413, %v5440
      %v5462 = vadd.f32 %v5414, %v5440
      %v5463 = vadd.f32 %v5415, %v5440
      %v5464 = vadd.f32 %v5416, %v5440
      %v5465 = vadd.f32 %v5417, %v5440
      %v5466 = vadd.f32 %v5418, %v5440
      %v5467 = vadd.f32 %v5419, %v5440
      %v5468 = vadd.f32 %v5420, %v5440
      %v5469 = vadd.f32 %v5421, %v5440
      %v5470 = vadd.f32 %v5422, %v5440
      %v5471 = vadd.f32 %v5423, %v5440
      %v5472 = vadd.f32 %v5424, %v5440
      %v5473 = vadd.f32 %v5425, %v5440
      %v5474 = vadd.f32 %v5426, %v5440
      %v5475 = vadd.f32 %v5427, %v5440
      %v5476 = vadd.f32 %v5428, %v5440
      %v5477 = vadd.f32 %v5429, %v5440
      %v5478 = vadd.f32 %v5430, %v5440
      %v5479 = vadd.f32 %v5431, %v5440
      %v5480 = vadd.f32 %v5432, %v5440
      %v5481 = vadd.f32 %v5433, %v5440
      %v5482 = vadd.f32 %v5434, %v5440
      %v5483 = vmax.f32 %v5442, 0.0
      %v5484 = vmax.f32 %v5443, 0.0
      %v5485 = vmax.f32 %v5444, 0.0
      %v5486 = vmax.f32 %v5445, 0.0
      %v5487 = vmax.f32 %v5446, 0.0
      %v5488 = vmax.f32 %v5447, 0.0
      %v5489 = vmax.f32 %v5448, 0.0
      %v5490 = vmax.f32 %v5449, 0.0
      %v5491 = vmax.f32 %v5450, 0.0
      %v5492 = vmax.f32 %v5451, 0.0
      %v5493 = vmax.f32 %v5452, 0.0
      %v5494 = vmax.f32 %v5453, 0.0
      %v5495 = vmax.f32 %v5454, 0.0
      %v5496 = vmax.f32 %v5455, 0.0
      %v5497 = vmax.f32 %v5456, 0.0
      %v5498 = vmax.f32 %v5457, 0.0
      %v5499 = vmax.f32 %v5458, 0.0
      %v5500 = vmax.f32 %v5459, 0.0
      %v5501 = vmax.f32 %v5460, 0.0
      %v5502 = vmax.f32 %v5461, 0.0
      %v5503 = vmax.f32 %v5462, 0.0
      %v5504 = vmax.f32 %v5463, 0.0
      %v5505 = vmax.f32 %v5464, 0.0
      %v5506 = vmax.f32 %v5465, 0.0
      %v5507 = vmax.f32 %v5466, 0.0
      %v5508 = vmax.f32 %v5467, 0.0
      %v5509 = vmax.f32 %v5468, 0.0
      %v5510 = vmax.f32 %v5469, 0.0
      %v5511 = vmax.f32 %v5470, 0.0
      %v5512 = vmax.f32 %v5471, 0.0
      %v5513 = vmax.f32 %v5472, 0.0
      %v5514 = vmax.f32 %v5473, 0.0
      %v5515 = vmax.f32 %v5474, 0.0
      %v5516 = vmax.f32 %v5475, 0.0
      %v5517 = vmax.f32 %v5476, 0.0
      %v5518 = vmax.f32 %v5477, 0.0
      %v5519 = vmax.f32 %v5478, 0.0
      %v5520 = vmax.f32 %v5479, 0.0
      %v5521 = vmax.f32 %v5480, 0.0
      %v5522 = vmax.f32 %v5481, 0.0
      %v5523 = vmax.f32 %v5482, 0.0
      %v5524 = vmin.f32 %v5483, 1000000.0
      %v5525 = vmin.f32 %v5484, 1000000.0
      %v5526 = vmin.f32 %v5485, 1000000.0
      %v5527 = vmin.f32 %v5486, 1000000.0
      %v5528 = vmin.f32 %v5487, 1000000.0
      %v5529 = vmin.f32 %v5488, 1000000.0
      %v5530 = vmin.f32 %v5489, 1000000.0
      %v5531 = vmin.f32 %v5490, 1000000.0
      %v5532 = vmin.f32 %v5491, 1000000.0
      %v5533 = vmin.f32 %v5492, 1000000.0
      %v5534 = vmin.f32 %v5493, 1000000.0
      %v5535 = vmin.f32 %v5494, 1000000.0
      %v5536 = vmin.f32 %v5495, 1000000.0
      %v5537 = vmin.f32 %v5496, 1000000.0
      %v5538 = vmin.f32 %v5497, 1000000.0
      %v5539 = vmin.f32 %v5498, 1000000.0
      %v5540 = vmin.f32 %v5499, 1000000.0
      %v5541 = vmin.f32 %v5500, 1000000.0
      %v5542 = vmin.f32 %v5501, 1000000.0
      %v5543 = vmin.f32 %v5502, 1000000.0
      %v5544 = vmin.f32 %v5503, 1000000.0
      %v5545 = vmin.f32 %v5504, 1000000.0
      %v5546 = vmin.f32 %v5505, 1000000.0
      %v5547 = vmin.f32 %v5506, 1000000.0
      %v5548 = vmin.f32 %v5507, 1000000.0
      %v5549 = vmin.f32 %v5508, 1000000.0
      %v5550 = vmin.f32 %v5509, 1000000.0
      %v5551 = vmin.f32 %v5510, 1000000.0
      %v5552 = vmin.f32 %v5511, 1000000.0
      %v5553 = vmin.f32 %v5512, 1000000.0
      %v5554 = vmin.f32 %v5513, 1000000.0
      %v5555 = vmin.f32 %v5514, 1000000.0
      %v5556 = vmin.f32 %v5515, 1000000.0
      %v5557 = vmin.f32 %v5516, 1000000.0
      %v5558 = vmin.f32 %v5517, 1000000.0
      %v5559 = vmin.f32 %v5518, 1000000.0
      %v5560 = vmin.f32 %v5519, 1000000.0
      %v5561 = vmin.f32 %v5520, 1000000.0
      %v5562 = vmin.f32 %v5521, 1000000.0
      %v5563 = vmin.f32 %v5522, 1000000.0
      %v5564 = vmin.f32 %v5523, 1000000.0
      %p5565 = scmp.eq.s32.totalorder %s22, 1
      %s5566 = scalar_select %p5565, 1, 0
      %s5567 = scvt.s32.f32 %s5566
      %s5568 = smul.f32 %s5567, 2.0
      %s5569 = ssub.f32 1.0, %s5568
      %v5570 = vstv %s5569
      %v5571 = vmul.f32 %v5570, %v5524
      %v5572 = vmul.f32 %v5570, %v5525
      %v5573 = vmul.f32 %v5570, %v5526
      %v5574 = vmul.f32 %v5570, %v5527
      %v5575 = vmul.f32 %v5570, %v5528
      %v5576 = vmul.f32 %v5570, %v5529
      %v5577 = vmul.f32 %v5570, %v5530
      %v5578 = vmul.f32 %v5570, %v5531
      %v5579 = vmul.f32 %v5570, %v5532
      %v5580 = vmul.f32 %v5570, %v5533
      %v5581 = vmul.f32 %v5570, %v5534
      %v5582 = vmul.f32 %v5570, %v5535
      %v5583 = vmul.f32 %v5570, %v5536
      %v5584 = vmul.f32 %v5570, %v5537
      %v5585 = vmul.f32 %v5570, %v5538
      %v5586 = vmul.f32 %v5570, %v5539
      %v5587 = vmul.f32 %v5570, %v5540
      %v5588 = vmul.f32 %v5570, %v5541
      %v5589 = vmul.f32 %v5570, %v5542
      %v5590 = vmul.f32 %v5570, %v5543
      %v5591 = vmul.f32 %v5570, %v5544
      %v5592 = vmul.f32 %v5570, %v5545
      %v5593 = vmul.f32 %v5570, %v5546
      %v5594 = vmul.f32 %v5570, %v5547
      %v5595 = vmul.f32 %v5570, %v5548
      %v5596 = vmul.f32 %v5570, %v5549
      %v5597 = vmul.f32 %v5570, %v5550
      %v5598 = vmul.f32 %v5570, %v5551
      %v5599 = vmul.f32 %v5570, %v5552
      %v5600 = vmul.f32 %v5570, %v5553
      %v5601 = vmul.f32 %v5570, %v5554
      %v5602 = vmul.f32 %v5570, %v5555
      %v5603 = vmul.f32 %v5570, %v5556
      %v5604 = vmul.f32 %v5570, %v5557
      %v5605 = vmul.f32 %v5570, %v5558
      %v5606 = vmul.f32 %v5570, %v5559
      %v5607 = vmul.f32 %v5570, %v5560
      %v5608 = vmul.f32 %v5570, %v5561
      %v5609 = vmul.f32 %v5570, %v5562
      %v5610 = vmul.f32 %v5570, %v5563
      %v5611 = vmul.f32 %v5570, %v5564
      %v5612 = vstv %s5567
      %v5613 = vadd.f32 %v5612, %v5571
      %v5614 = vadd.f32 %v5612, %v5572
      %v5615 = vadd.f32 %v5612, %v5573
      %v5616 = vadd.f32 %v5612, %v5574
      %v5617 = vadd.f32 %v5612, %v5575
      %v5618 = vadd.f32 %v5612, %v5576
      %v5619 = vadd.f32 %v5612, %v5577
      %v5620 = vadd.f32 %v5612, %v5578
      %v5621 = vadd.f32 %v5612, %v5579
      %v5622 = vadd.f32 %v5612, %v5580
      %v5623 = vadd.f32 %v5612, %v5581
      %v5624 = vadd.f32 %v5612, %v5582
      %v5625 = vadd.f32 %v5612, %v5583
      %v5626 = vadd.f32 %v5612, %v5584
      %v5627 = vadd.f32 %v5612, %v5585
      %v5628 = vadd.f32 %v5612, %v5586
      %v5629 = vadd.f32 %v5612, %v5587
      %v5630 = vadd.f32 %v5612, %v5588
      %v5631 = vadd.f32 %v5612, %v5589
      %v5632 = vadd.f32 %v5612, %v5590
      %v5633 = vadd.f32 %v5612, %v5591
      %v5634 = vadd.f32 %v5612, %v5592
      %v5635 = vadd.f32 %v5612, %v5593
      %v5636 = vadd.f32 %v5612, %v5594
      %v5637 = vadd.f32 %v5612, %v5595
      %v5638 = vadd.f32 %v5612, %v5596
      %v5639 = vadd.f32 %v5612, %v5597
      %v5640 = vadd.f32 %v5612, %v5598
      %v5641 = vadd.f32 %v5612, %v5599
      %v5642 = vadd.f32 %v5612, %v5600
      %v5643 = vadd.f32 %v5612, %v5601
      %v5644 = vadd.f32 %v5612, %v5602
      %v5645 = vadd.f32 %v5612, %v5603
      %v5646 = vadd.f32 %v5612, %v5604
      %v5647 = vadd.f32 %v5612, %v5605
      %v5648 = vadd.f32 %v5612, %v5606
      %v5649 = vadd.f32 %v5612, %v5607
      %v5650 = vadd.f32 %v5612, %v5608
      %v5651 = vadd.f32 %v5612, %v5609
      %v5652 = vadd.f32 %v5612, %v5610
      %v5653 = vadd.f32 %v5612, %v5611
      %5654 = vst.msk [vmem:[%s349] sm:$0xff] %vm351, %v5613
      %5655 = vst.msk [vmem:[%s349 + $0x8] sm:$0xff] %vm351, %v5614
      %5656 = vst.msk [vmem:[%s349 + $0x10] sm:$0xff] %vm351, %v5615
      %5657 = vst.msk [vmem:[%s349 + $0x18] sm:$0xff] %vm351, %v5616
      %5658 = vst.msk [vmem:[%s349 + $0x20] sm:$0xff] %vm351, %v5617
      %5659 = vst.msk [vmem:[%s349 + $0x28] sm:$0xff] %vm351, %v5618
      %5660 = vst.msk [vmem:[%s349 + $0x30] sm:$0xff] %vm351, %v5619
      %5661 = vst.msk [vmem:[%s349 + $0x38] sm:$0xff] %vm351, %v5620
      %5662 = vst.msk [vmem:[%s349 + $0x40] sm:$0xff] %vm351, %v5621
      %5663 = vst.msk [vmem:[%s349 + $0x48] sm:$0xff] %vm351, %v5622
      %5664 = vst.msk [vmem:[%s349 + $0x50] sm:$0xff] %vm351, %v5623
      %5665 = vst.msk [vmem:[%s349 + $0x58] sm:$0xff] %vm351, %v5624
      %5666 = vst.msk [vmem:[%s349 + $0x60] sm:$0xff] %vm351, %v5625
      %5667 = vst.msk [vmem:[%s349 + $0x68] sm:$0xff] %vm351, %v5626
      %5668 = vst.msk [vmem:[%s349 + $0x70] sm:$0xff] %vm351, %v5627
      %5669 = vst.msk [vmem:[%s349 + $0x78] sm:$0xff] %vm351, %v5628
      %5670 = vst.msk [vmem:[%s349 + $0x80] sm:$0xff] %vm351, %v5629
      %5671 = vst.msk [vmem:[%s349 + $0x88] sm:$0xff] %vm351, %v5630
      %5672 = vst.msk [vmem:[%s349 + $0x90] sm:$0xff] %vm351, %v5631
      %5673 = vst.msk [vmem:[%s349 + $0x98] sm:$0xff] %vm351, %v5632
      %5674 = vst.msk [vmem:[%s349 + $0xa0] sm:$0xff] %vm351, %v5633
      %5675 = vst.msk [vmem:[%s349 + $0xa8] sm:$0xff] %vm351, %v5634
      %5676 = vst.msk [vmem:[%s349 + $0xb0] sm:$0xff] %vm351, %v5635
      %5677 = vst.msk [vmem:[%s349 + $0xb8] sm:$0xff] %vm351, %v5636
      %5678 = vst.msk [vmem:[%s349 + $0xc0] sm:$0xff] %vm351, %v5637
      %5679 = vst.msk [vmem:[%s349 + $0xc8] sm:$0xff] %vm351, %v5638
      %5680 = vst.msk [vmem:[%s349 + $0xd0] sm:$0xff] %vm351, %v5639
      %5681 = vst.msk [vmem:[%s349 + $0xd8] sm:$0xff] %vm351, %v5640
      %5682 = vst.msk [vmem:[%s349 + $0xe0] sm:$0xff] %vm351, %v5641
      %5683 = vst.msk [vmem:[%s349 + $0xe8] sm:$0xff] %vm351, %v5642
      %5684 = vst.msk [vmem:[%s349 + $0xf0] sm:$0xff] %vm351, %v5643
      %5685 = vst.msk [vmem:[%s349 + $0xf8] sm:$0xff] %vm351, %v5644
      %5686 = vst.msk [vmem:[%s349 + $0x100] sm:$0xff] %vm351, %v5645
      %5687 = vst.msk [vmem:[%s349 + $0x108] sm:$0xff] %vm351, %v5646
      %5688 = vst.msk [vmem:[%s349 + $0x110] sm:$0xff] %vm351, %v5647
      %5689 = vst.msk [vmem:[%s349 + $0x118] sm:$0xff] %vm351, %v5648
      %5690 = vst.msk [vmem:[%s349 + $0x120] sm:$0xff] %vm351, %v5649
      %5691 = vst.msk [vmem:[%s349 + $0x128] sm:$0xff] %vm351, %v5650
      %5692 = vst.msk [vmem:[%s349 + $0x130] sm:$0xff] %vm351, %v5651
      %5693 = vst.msk [vmem:[%s349 + $0x138] sm:$0xff] %vm351, %v5652
      %5694 = vst.msk [vmem:[%s349 + $0x140] sm:$0xf] %vm398, %v5653
      %p5695 = scmp.lt.s32.totalorder %s22, 1
      %s5696 = scalar_select %p5695, %s22, 1
      %p5697 = scmp.lt.s32.totalorder %s21, 1
      %s5698 = scalar_select %p5697, %s21, 1
      %s5699 = smul.addr %s5698, 41
      %s5700 = smul.addr %s5696, 82
      %s5701 = sadd.s32 %s5699, %s5700
      %s5702 = smul.addr %s5701, 8
      %s5703 = scalar_lea.vmem %s6, %s5702
      // Predicated region
      $region45: #{dar_simple.1} parent=43 // pred_check
        %p5704 = pneg %p202
      $region46: #{dar_simple.1} parent=43 // pred_check_branch
        %5706 = sbr.rel (%p5704) target = $region48
      $region47: #{dar_simple.1} parent=43 // pred_region
        _
      $region48: #{dar_simple.1} parent=43 // pred_fallthru
        _
    $region44: #{dar_simple.1} parent=5 // pred_fallthru
      _
    %p5707 = scmp.le.s32.totalorder 2, %s12
    // Predicated region
    $region49: #{dar_simple.1} parent=5 // pred_check
      %p5708 = pneg %p5707
    $region50: #{dar_simple.1} parent=5 // pred_check_branch
      %5710 = sbr.rel (%p5708) target = $region52
    $region51: #{dar_simple.1} parent=5 // pred_region
      %s5711 = ssub.s32 %s12, 2
      // Predicated region
      $region53: #{dar_simple.1} parent=51 // pred_check
        %p5712 = pneg %p208
      $region54: #{dar_simple.1} parent=51 // pred_check_branch
        %5714 = sbr.rel (%p5712) target = $region56
      $region55: #{dar_simple.1} parent=51 // pred_region
        %p5715 = scmp.lt.s32.totalorder %s24, 1
        %s5716 = scalar_select %p5715, %s24, 1
        %p5717 = scmp.lt.s32.totalorder %s23, 1
        %s5718 = scalar_select %p5717, %s23, 1
        %s5719 = smul.addr %s5718, 41
        %s5720 = smul.addr %s5716, 82
        %s5721 = sadd.s32 %s5719, %s5720
        %s5722 = smul.addr %s5721, 8
        %s5723 = scalar_lea.vmem %s6, %s5722
      $region56: #{dar_simple.1} parent=51 // pred_fallthru
        _
    $region52: #{dar_simple.1} parent=5 // pred_fallthru
      _
  $region6: #{dar_simple.1} parent=0 // loop_footer
    %s16 = sadd.s32 1, %s12
  $region7: #{dar_simple.1} parent=0 // loop_footer_branch
    %11 = sbr.rel target = $region3
  $region8: #{dar_simple.1} parent=0 // loop_exit
    _

</llo_original>
